<compile_context>
chip_gen: v5e
topology: v5e:2x2
jax: 0.10.0
libtpu: 0.0.40
codegen_flags: <defaults>
</compile_context>

<pallas_src>
import math
from functools import partial

import jax
import jax.numpy as jnp
from jax.experimental import pallas as pl
from jax.experimental.pallas import tpu as pltpu

# ---- small, self-consistent configuration (original sizes in comments) ----
B = 2              # batch
L = 64             # base pairs per sample
MOTIF_K = 5        # motif scanner conv kernel width (orig ~29)
MOTIF_DIM = 8      # motif_dim (orig 639)
ATAC_KN = 4        # atac_kernel_num (orig 16)
ATAC_KS = 3        # atac_kernel_size
JOINT_KN = 4       # joint_kernel_num (orig 16)
JOINT_KS = 3       # joint_kernel_size
R = 8              # max_n_peaks / regions (orig 200)
LC = L // R        # bp per region (uniform chunks in the demo inputs)
D = 32             # embed_dim == d_model (orig 768)
NHEAD = 4          # (orig 12)
NLAYERS = 2        # (orig 12)
MLP_H = 4 * D
OUT_DIM = 1
JOINT_C = MOTIF_DIM + ATAC_KN     # joint-conv input channels
REGION_C = MOTIF_DIM + JOINT_KN   # pooled region feature dim (orig 655)
LN_EPS = 1e-6
MPAD = MOTIF_K // 2
APAD = ATAC_KS // 2
JPAD = JOINT_KS // 2
DH = D // NHEAD

# Batch stacking: BS batch elements are processed per grid step.
#   BS = B  -> grid=(1,): best on single-TC v5e/v6e (no serial grid loop, fuller rows).
#   BS = 1  -> grid=(B,) "parallel": uses both TensorCores on v7x.
BS = B
NSTEP = B // BS
SL = BS * L        # stacked base-pair rows per grid step
SR = BS * R        # stacked region rows per grid step


# ----------------------------- BlockSpec helpers -----------------------------
def rep_spec(shape):
    """Weight replicated across the (step) grid."""
    return pl.BlockSpec(shape, lambda s: (0,) * len(shape))


def step_spec(shape):
    """Leading dim of the block follows grid axis 0 (the stacked-batch step)."""
    return pl.BlockSpec(shape, lambda s: (s,) + (0,) * (len(shape) - 1))


# ------------------------------ in-kernel utils -------------------------------
def _layernorm(x, w, b):
    mu = jnp.mean(x, axis=-1, keepdims=True)
    xc = x - mu
    var = jnp.mean(xc * xc, axis=-1, keepdims=True)
    return xc * jax.lax.rsqrt(var + LN_EPS) * w + b


def _softplus(x):
    return jnp.maximum(x, 0.0) + jnp.log1p(jnp.exp(-jnp.abs(x)))


# ------------------------------ fused forward kernel ---------------------------
def fused_forward_kernel(
    # per-step (stacked batch) activations
    sequnf_ref, atacunf_ref, mean_ref, inv_ref, starts_ref, ends_ref, invsz_ref, bias_ref,
    maskl_ref, maskr_ref,
    # stem weights
    w_motif_ref, b_motif_ref, w_aconv_ref, b_aconv_ref, w_jconv_ref, b_jconv_ref,
    w_embed_ref, b_embed_ref, pe_ref,
    # stacked transformer weights (leading dim NLAYERS)
    ln1w_ref, ln1b_ref, wq_ref, bq_ref, wk_ref, bk_ref, wv_ref, bv_ref, wo_ref, bo_ref,
    ln2w_ref, ln2b_ref, w1_ref, b1_ref, w2_ref, b2_ref,
    # final norm + fused heads
    lnfw_ref, lnfb_ref, w_heads_ref, b_heads_ref, w_expa_ref,
    # output
    out_ref):
    f32 = jnp.float32
    bf16 = jnp.bfloat16

    # ---- MotifScanner Conv1d(4 -> MOTIF_DIM, K): ONE im2col matmul (unfold built in wrapper) ----
    x_motif = (jnp.dot(sequnf_ref[0].astype(bf16), w_motif_ref[...],
                       preferred_element_type=f32) + b_motif_ref[...])
    # per-motif (x - mean) * (1/std): exact reciprocal precomputed in the wrapper; then ReLU
    x_motif = jnp.maximum((x_motif - mean_ref[0]) * inv_ref[0], 0.0)

    # ---- ATACSplitPool: atac Conv1d(1 -> ATAC_KN, 3): ONE im2col matmul ----
    atac_feat = (jnp.dot(atacunf_ref[0].astype(bf16), w_aconv_ref[...],
                         preferred_element_type=f32) + b_aconv_ref[...])

    # ---- joint Conv1d(JOINT_C -> JOINT_KN, 3): in-register im2col, ONE matmul, no scratch ----
    jin = jnp.concatenate([x_motif, atac_feat], axis=-1)                 # (SL, JOINT_C)
    zrow = jnp.zeros((1, JOINT_C), f32)
    prev = jnp.concatenate([zrow, jin[:SL - 1, :]], axis=0) * maskl_ref[...]   # zero at batch starts
    nxt = jnp.concatenate([jin[1:, :], zrow], axis=0) * maskr_ref[...]         # zero at batch ends
    junf = jnp.concatenate([prev, jin, nxt], axis=-1).astype(bf16)       # (SL, 3*JOINT_C)
    joint = (jnp.dot(junf, w_jconv_ref[...], preferred_element_type=f32)
             + b_jconv_ref[...])

    # ---- per-region mean pool: segment mask built in-kernel (no (B,R,L) HBM matrix) ----
    pos = jax.lax.broadcasted_iota(jnp.int32, (SR, SL), 1).astype(f32)
    within = ((pos >= starts_ref[0]) & (pos < ends_ref[0])).astype(f32)
    pmat = (within * invsz_ref[0]).astype(bf16)                          # (SR, SL) mean weights
    region_in = jnp.concatenate([x_motif, joint], axis=-1).astype(bf16)  # (SL, REGION_C)
    pooled = jnp.dot(pmat, region_in, preferred_element_type=f32)        # (SR, REGION_C)

    # ---- RegionEmbed + absolute sinusoidal positional encoding ----
    h = (jnp.dot(pooled.astype(bf16), w_embed_ref[...], preferred_element_type=f32)
         + b_embed_ref[...] + pe_ref[...])
    # TODO(synk): CTCFPositionalEncoding skipped — reference forward uses undefined `ctcf_pos`.

    # ---- GETTransformer: pre-LN encoder blocks (eval mode), block-diag key-padding bias ----
    bias = bias_ref[0]                                                   # (SR, SR) additive bias
    col = jax.lax.broadcasted_iota(jnp.int32, (1, D), 1)
    hmasks = [((col >= hh * DH) & (col < (hh + 1) * DH)).astype(f32)     # hoisted out of layer loop
              for hh in range(NHEAD)]
    # TODO(synk): at real sizes (12 layers, D=768) stream weights per layer (extra grid axis /
    # pl.Buffered(1)) instead of all-layers VMEM residency, and switch the full-width head-mask
    # attention to a (NHEAD, SR, DH) head-batched layout.
    for layer in range(NLAYERS):
        hn = _layernorm(h, ln1w_ref[layer], ln1b_ref[layer]).astype(bf16)
        # 1/sqrt(DH) is folded into wq/bq at init time.
        q = jnp.dot(hn, wq_ref[layer], preferred_element_type=f32) + bq_ref[layer]
        k = jnp.dot(hn, wk_ref[layer], preferred_element_type=f32) + bk_ref[layer]
        v = jnp.dot(hn, wv_ref[layer], preferred_element_type=f32) + bv_ref[layer]
        k_b = k.astype(bf16)
        attn = jnp.zeros((SR, D), f32)
        for hm in hmasks:
            s = jnp.einsum('qd,kd->qk', (q * hm).astype(bf16), k_b,
                           preferred_element_type=f32) + bias
            s = s - jnp.max(s, axis=-1, keepdims=True)
            p = jnp.exp(s)
            p = p * pl.reciprocal(jnp.sum(p, axis=-1, keepdims=True), approx=True)
            attn = attn + jnp.dot(p.astype(bf16), (v * hm).astype(bf16),
                                  preferred_element_type=f32)
        h = (h + jnp.dot(attn.astype(bf16), wo_ref[layer], preferred_element_type=f32)
             + bo_ref[layer])
        h2 = _layernorm(h, ln2w_ref[layer], ln2b_ref[layer]).astype(bf16)
        m = jnp.dot(h2, w1_ref[layer], preferred_element_type=f32) + b1_ref[layer]
        # TODO(synk): PyTorch nn.GELU is exact erf; tanh approx used for robust lowering.
        m = jax.nn.gelu(m, approximate=True)
        m = jnp.dot(m.astype(bf16), w2_ref[layer], preferred_element_type=f32) + b2_ref[layer]
        h = h + m

    # ---- final LayerNorm + fused ATAC head / Expression head (softplus) ----
    hf = _layernorm(h, lnfw_ref[...], lnfb_ref[...]).astype(bf16)
    y2 = jnp.dot(hf, w_heads_ref[...], preferred_element_type=f32) + b_heads_ref[...]
    a = _softplus(y2[:, 0:1])                                            # ATACHead output
    e = _softplus(y2[:, 1:1 + OUT_DIM] + a * w_expa_ref[...])            # ExpressionHead(use_atac)
    # last-dim-2 store is fine at R=8; repack lane-dense (2, SR) if R grows to orig 200
    out_ref[0] = jnp.concatenate([a, e], axis=-1)


# --------------------------------- parameters ---------------------------------
def sinusoid_pe(n, d):
    pos = jnp.arange(n, dtype=jnp.float32)[:, None]
    i = jnp.arange(0, d, 2, dtype=jnp.float32)
    div = jnp.exp(-math.log(10000.0) * i / d)
    pe = jnp.zeros((n, d), jnp.float32)
    pe = pe.at[:, 0::2].set(jnp.sin(pos * div))
    pe = pe.at[:, 1::2].set(jnp.cos(pos * div))
    return pe


def init_params(key):
    keys = iter(jax.random.split(key, 40))
    f32 = jnp.float32
    bf = lambda a: a.astype(jnp.bfloat16)     # MXU-path weights pre-cast ONCE at init

    def xavier(shape):
        fin, fout = shape[-2], shape[-1]
        lim = math.sqrt(6.0 / (fin + fout))
        return jax.random.uniform(next(keys), shape, f32, -lim, lim)

    # batch-boundary masks for the joint-conv shifted taps (shape-only constants)
    lrow = jnp.arange(SL) % L
    maskl = (lrow != 0).astype(f32)[:, None]        # zero the row coming from the previous batch
    maskr = (lrow != L - 1).astype(f32)[:, None]    # zero the row coming from the next batch

    scale = 1.0 / math.sqrt(DH)
    p = {
        # conv weights flattened tap-major for single im2col matmuls
        'w_motif': bf(xavier((MOTIF_K, 4, MOTIF_DIM)).reshape(MOTIF_K * 4, MOTIF_DIM)),
        'b_motif': jnp.zeros((1, MOTIF_DIM), f32),
        'w_aconv': bf(xavier((ATAC_KS, 1, ATAC_KN)).reshape(ATAC_KS, ATAC_KN)),
        'b_aconv': jnp.zeros((1, ATAC_KN), f32),
        'w_jconv': bf(xavier((JOINT_KS, JOINT_C, JOINT_KN)).reshape(JOINT_KS * JOINT_C, JOINT_KN)),
        'b_jconv': jnp.zeros((1, JOINT_KN), f32),
        'w_embed': bf(xavier((REGION_C, D))),
        'b_embed': jnp.zeros((1, D), f32),
        'pe': jnp.tile(sinusoid_pe(R, D), (BS, 1)),   # (SR, D) abs pos-emb tiled per stacked batch
        'maskl': maskl,
        'maskr': maskr,
        'ln_f_w': jnp.ones((1, D), f32),
        'ln_f_b': jnp.zeros((1, D), f32),
        # fused heads (ATAC head col 0, ExpressionHead x-part col 1)
        'w_heads': bf(xavier((D, 1 + OUT_DIM))),
        'b_heads': jnp.zeros((1, 1 + OUT_DIM), f32),
        'w_exp_a': xavier((1, OUT_DIM)),              # ExpressionHead atac column of Linear(D+1, out)
    }
    p['layers'] = {
        'ln1_w': jnp.ones((NLAYERS, 1, D), f32),
        'ln1_b': jnp.zeros((NLAYERS, 1, D), f32),
        'w_q': bf(xavier((NLAYERS, D, D)) * scale),   # attention 1/sqrt(DH) folded into Wq
        'b_q': jnp.zeros((NLAYERS, 1, D), f32),       # zero bias -> scale fold is a no-op
        'w_k': bf(xavier((NLAYERS, D, D))),
        'b_k': jnp.zeros((NLAYERS, 1, D), f32),
        'w_v': bf(xavier((NLAYERS, D, D))),
        'b_v': jnp.zeros((NLAYERS, 1, D), f32),
        'w_o': bf(xavier((NLAYERS, D, D))),
        'b_o': jnp.zeros((NLAYERS, 1, D), f32),
        'ln2_w': jnp.ones((NLAYERS, 1, D), f32),
        'ln2_b': jnp.zeros((NLAYERS, 1, D), f32),
        'w_mlp1': bf(xavier((NLAYERS, D, MLP_H))),
        'b_mlp1': jnp.zeros((NLAYERS, 1, MLP_H), f32),
        'w_mlp2': bf(xavier((NLAYERS, MLP_H, D))),
        'b_mlp2': jnp.zeros((NLAYERS, 1, D), f32),
    }
    return p


# ------------------------------ fused pallas_call ------------------------------
def _fused_forward(params, seq_unf, atac_unf, mean_rows, inv_rows, starts, ends, invsz, bias):
    lp = params['layers']
    inputs_and_specs = [
        (seq_unf,            step_spec((1, SL, MOTIF_K * 4))),
        (atac_unf,           step_spec((1, SL, ATAC_KS))),
        (mean_rows,          step_spec((1, SL, MOTIF_DIM))),
        (inv_rows,           step_spec((1, SL, MOTIF_DIM))),
        (starts,             step_spec((1, SR, 1))),
        (ends,               step_spec((1, SR, 1))),
        (invsz,              step_spec((1, SR, 1))),
        (bias,               step_spec((1, SR, SR))),
        (params['maskl'],    rep_spec((SL, 1))),
        (params['maskr'],    rep_spec((SL, 1))),
        (params['w_motif'],  rep_spec((MOTIF_K * 4, MOTIF_DIM))),
        (params['b_motif'],  rep_spec((1, MOTIF_DIM))),
        (params['w_aconv'],  rep_spec((ATAC_KS, ATAC_KN))),
        (params['b_aconv'],  rep_spec((1, ATAC_KN))),
        (params['w_jconv'],  rep_spec((JOINT_KS * JOINT_C, JOINT_KN))),
        (params['b_jconv'],  rep_spec((1, JOINT_KN))),
        (params['w_embed'],  rep_spec((REGION_C, D))),
        (params['b_embed'],  rep_spec((1, D))),
        (params['pe'],       rep_spec((SR, D))),
        (lp['ln1_w'],        rep_spec((NLAYERS, 1, D))),
        (lp['ln1_b'],        rep_spec((NLAYERS, 1, D))),
        (lp['w_q'],          rep_spec((NLAYERS, D, D))),
        (lp['b_q'],          rep_spec((NLAYERS, 1, D))),
        (lp['w_k'],          rep_spec((NLAYERS, D, D))),
        (lp['b_k'],          rep_spec((NLAYERS, 1, D))),
        (lp['w_v'],          rep_spec((NLAYERS, D, D))),
        (lp['b_v'],          rep_spec((NLAYERS, 1, D))),
        (lp['w_o'],          rep_spec((NLAYERS, D, D))),
        (lp['b_o'],          rep_spec((NLAYERS, 1, D))),
        (lp['ln2_w'],        rep_spec((NLAYERS, 1, D))),
        (lp['ln2_b'],        rep_spec((NLAYERS, 1, D))),
        (lp['w_mlp1'],       rep_spec((NLAYERS, D, MLP_H))),
        (lp['b_mlp1'],       rep_spec((NLAYERS, 1, MLP_H))),
        (lp['w_mlp2'],       rep_spec((NLAYERS, MLP_H, D))),
        (lp['b_mlp2'],       rep_spec((NLAYERS, 1, D))),
        (params['ln_f_w'],   rep_spec((1, D))),
        (params['ln_f_b'],   rep_spec((1, D))),
        (params['w_heads'],  rep_spec((D, 1 + OUT_DIM))),
        (params['b_heads'],  rep_spec((1, 1 + OUT_DIM))),
        (params['w_exp_a'],  rep_spec((1, OUT_DIM))),
    ]
    arrays = [a for a, _ in inputs_and_specs]
    specs = [s for _, s in inputs_and_specs]
    return pl.pallas_call(
        fused_forward_kernel,
        out_shape=jax.ShapeDtypeStruct((NSTEP, SR, 1 + OUT_DIM), jnp.float32),
        grid=(NSTEP,),
        in_specs=specs,
        out_specs=step_spec((1, SR, 1 + OUT_DIM)),
        compiler_params=pltpu.CompilerParams(dimension_semantics=("parallel",)),
    )(*arrays)


# ---------------------------------- forward -----------------------------------
@partial(jax.jit, static_argnums=(7,))
def get_finetune_atac_forward(params, peak_seq, atac, mask, padding_mask,
                              chunk_size, n_peaks, max_n_peaks, motif_mean_std):
    del mask, n_peaks                     # `mask` unused by the reference forward
    assert max_n_peaks == R
    f32 = jnp.float32

    # ---- wrapper-side im2col: stem convs become single MXU matmuls in the kernel ----
    seq_pad = jnp.pad(peak_seq, ((0, 0), (MPAD, MPAD), (0, 0)))
    seq_unf = jnp.concatenate([seq_pad[:, t:t + L, :] for t in range(MOTIF_K)], axis=-1)
    atac_pad = jnp.pad(atac, ((0, 0), (APAD, APAD)))
    atac_unf = jnp.stack([atac_pad[:, t:t + L] for t in range(ATAC_KS)], axis=-1)

    # stack BS batch elements per grid step (batch-major row order)
    seq_unf = seq_unf.reshape(NSTEP, SL, MOTIF_K * 4)
    atac_unf = atac_unf.reshape(NSTEP, SL, ATAC_KS)

    # exact per-motif mean / 1/std, repeated per stacked bp row
    mean = motif_mean_std[:, 0, :]
    inv = 1.0 / motif_mean_std[:, 1, :]
    mean_rows = jnp.repeat(mean, L, axis=0).reshape(NSTEP, SL, MOTIF_DIM)
    inv_rows = jnp.repeat(inv, L, axis=0).reshape(NSTEP, SL, MOTIF_DIM)

    # region boundaries in stacked-row coordinates for the in-kernel segment-mean pool
    cs = chunk_size.astype(f32)
    ends_local = jnp.cumsum(cs, axis=1)
    starts_local = ends_local - cs
    boff = ((jnp.arange(B) % BS) * L).astype(f32)[:, None]
    starts = (starts_local + boff).reshape(NSTEP, SR, 1)
    ends = (ends_local + boff).reshape(NSTEP, SR, 1)
    invsz = (1.0 / jnp.maximum(cs, 1.0)).reshape(NSTEP, SR, 1)

    # block-diagonal attention bias: regions only attend within their own batch element;
    # padded keys get -1e9 (key_padding_mask semantics)
    same = (jnp.arange(SR) // R)[:, None] == (jnp.arange(SR) // R)[None, :]
    keypad = padding_mask.reshape(NSTEP, 1, SR)
    bias = jnp.where(same[None] & (~keypad), 0.0, -1e9).astype(f32)

    out = _fused_forward(params, seq_unf, atac_unf, mean_rows, inv_rows,
                         starts, ends, invsz, bias)
    out = out.reshape(B, R, 1 + OUT_DIM)
    atac_out = out[..., 0]                 # (B, R)
    exp_out = out[..., 1:1 + OUT_DIM]      # (B, R, OUT_DIM)
    return atac_out, exp_out, None


# ------------------------------------ main -------------------------------------
if __name__ == "__main__":
    root = jax.random.PRNGKey(0)
    k_param, k_seq, k_atac, k_mu, k_sd = jax.random.split(root, 5)
    params = init_params(k_param)

    seq_idx = jax.random.randint(k_seq, (B, L), 0, 4)
    peak_seq = jax.nn.one_hot(seq_idx, 4, dtype=jnp.float32)        # (B, L, 4) one-hot DNA
    atac = jax.random.uniform(k_atac, (B, L), jnp.float32)          # (B, L) accessibility
    mask = jnp.zeros((B, R), dtype=jnp.bool_)                       # unused by forward
    padding_mask = jnp.zeros((B, R), dtype=jnp.bool_)               # no padded regions
    chunk_size = jnp.full((B, R), LC, dtype=jnp.int32)              # bp per region
    n_peaks = jnp.full((B,), R, dtype=jnp.int32)
    motif_mean = 0.1 * jax.random.normal(k_mu, (B, MOTIF_DIM), jnp.float32)
    motif_std = 1.0 + jnp.abs(jax.random.normal(k_sd, (B, MOTIF_DIM), jnp.float32))
    motif_mean_std = jnp.stack([motif_mean, motif_std], axis=1)     # (B, 2, MOTIF_DIM)

    atac_out, exp_out, _ = get_finetune_atac_forward(
        params, peak_seq, atac, mask, padding_mask, chunk_size, n_peaks, R, motif_mean_std)
    jax.block_until_ready((atac_out, exp_out))
    assert atac_out.shape == (B, R)
    assert exp_out.shape == (B, R, OUT_DIM)
    print("KERNEL_OK")
</pallas_src>

<mosaic_0001>
module attributes {stable_mosaic.version = 11 : i64} {
  func.func @fused_forward_kernel(%arg0: i32, %arg1: memref<1x128x20xf32, #tpu.memory_space<vmem>>, %arg2: memref<1x128x3xf32, #tpu.memory_space<vmem>>, %arg3: memref<1x128x8xf32, #tpu.memory_space<vmem>>, %arg4: memref<1x128x8xf32, #tpu.memory_space<vmem>>, %arg5: memref<1x16x1xf32, #tpu.memory_space<vmem>>, %arg6: memref<1x16x1xf32, #tpu.memory_space<vmem>>, %arg7: memref<1x16x1xf32, #tpu.memory_space<vmem>>, %arg8: memref<1x16x16xf32, #tpu.memory_space<vmem>>, %arg9: memref<128x1xf32, #tpu.memory_space<vmem>>, %arg10: memref<128x1xf32, #tpu.memory_space<vmem>>, %arg11: memref<20x8xbf16, #tpu.memory_space<vmem>>, %arg12: memref<1x8xf32, #tpu.memory_space<vmem>>, %arg13: memref<3x4xbf16, #tpu.memory_space<vmem>>, %arg14: memref<1x4xf32, #tpu.memory_space<vmem>>, %arg15: memref<36x4xbf16, #tpu.memory_space<vmem>>, %arg16: memref<1x4xf32, #tpu.memory_space<vmem>>, %arg17: memref<12x32xbf16, #tpu.memory_space<vmem>>, %arg18: memref<1x32xf32, #tpu.memory_space<vmem>>, %arg19: memref<16x32xf32, #tpu.memory_space<vmem>>, %arg20: memref<2x1x32xf32, #tpu.memory_space<vmem>>, %arg21: memref<2x1x32xf32, #tpu.memory_space<vmem>>, %arg22: memref<2x32x32xbf16, #tpu.memory_space<vmem>>, %arg23: memref<2x1x32xf32, #tpu.memory_space<vmem>>, %arg24: memref<2x32x32xbf16, #tpu.memory_space<vmem>>, %arg25: memref<2x1x32xf32, #tpu.memory_space<vmem>>, %arg26: memref<2x32x32xbf16, #tpu.memory_space<vmem>>, %arg27: memref<2x1x32xf32, #tpu.memory_space<vmem>>, %arg28: memref<2x32x32xbf16, #tpu.memory_space<vmem>>, %arg29: memref<2x1x32xf32, #tpu.memory_space<vmem>>, %arg30: memref<2x1x32xf32, #tpu.memory_space<vmem>>, %arg31: memref<2x1x32xf32, #tpu.memory_space<vmem>>, %arg32: memref<2x32x128xbf16, #tpu.memory_space<vmem>>, %arg33: memref<2x1x128xf32, #tpu.memory_space<vmem>>, %arg34: memref<2x128x32xbf16, #tpu.memory_space<vmem>>, %arg35: memref<2x1x32xf32, #tpu.memory_space<vmem>>, %arg36: memref<1x32xf32, #tpu.memory_space<vmem>>, %arg37: memref<1x32xf32, #tpu.memory_space<vmem>>, %arg38: memref<32x2xbf16, #tpu.memory_space<vmem>>, %arg39: memref<1x2xf32, #tpu.memory_space<vmem>>, %arg40: memref<1x1xf32, #tpu.memory_space<vmem>>, %arg41: memref<1x16x2xf32, #tpu.memory_space<vmem>>) attributes {dimension_semantics = [#tpu.dimension_semantics<parallel>], iteration_bounds = array<i64: 1>, scalar_prefetch = 0 : i64, scratch_operands = 0 : i64, tpu.core_type = #tpu.core_type<tc>, window_params = [{transform_indices = @transform_0, window_bounds = array<i64: 1, 128, 20>}, {transform_indices = @transform_1, window_bounds = array<i64: 1, 128, 3>}, {transform_indices = @transform_2, window_bounds = array<i64: 1, 128, 8>}, {transform_indices = @transform_3, window_bounds = array<i64: 1, 128, 8>}, {transform_indices = @transform_4, window_bounds = array<i64: 1, 16, 1>}, {transform_indices = @transform_5, window_bounds = array<i64: 1, 16, 1>}, {transform_indices = @transform_6, window_bounds = array<i64: 1, 16, 1>}, {transform_indices = @transform_7, window_bounds = array<i64: 1, 16, 16>}, {pipeline_mode = #tpu.pipeline_mode<synchronous>, transform_indices = @transform_8, window_bounds = array<i64: 128, 1>}, {pipeline_mode = #tpu.pipeline_mode<synchronous>, transform_indices = @transform_9, window_bounds = array<i64: 128, 1>}, {pipeline_mode = #tpu.pipeline_mode<synchronous>, transform_indices = @transform_10, window_bounds = array<i64: 20, 8>}, {pipeline_mode = #tpu.pipeline_mode<synchronous>, transform_indices = @transform_11, window_bounds = array<i64: 1, 8>}, {pipeline_mode = #tpu.pipeline_mode<synchronous>, transform_indices = @transform_12, window_bounds = array<i64: 3, 4>}, {pipeline_mode = #tpu.pipeline_mode<synchronous>, transform_indices = @transform_13, window_bounds = array<i64: 1, 4>}, {pipeline_mode = #tpu.pipeline_mode<synchronous>, transform_indices = @transform_14, window_bounds = array<i64: 36, 4>}, {pipeline_mode = #tpu.pipeline_mode<synchronous>, transform_indices = @transform_15, window_bounds = array<i64: 1, 4>}, {pipeline_mode = #tpu.pipeline_mode<synchronous>, transform_indices = @transform_16, window_bounds = array<i64: 12, 32>}, {pipeline_mode = #tpu.pipeline_mode<synchronous>, transform_indices = @transform_17, window_bounds = array<i64: 1, 32>}, {pipeline_mode = #tpu.pipeline_mode<synchronous>, transform_indices = @transform_18, window_bounds = array<i64: 16, 32>}, {pipeline_mode = #tpu.pipeline_mode<synchronous>, transform_indices = @transform_19, window_bounds = array<i64: 2, 1, 32>}, {pipeline_mode = #tpu.pipeline_mode<synchronous>, transform_indices = @transform_20, window_bounds = array<i64: 2, 1, 32>}, {pipeline_mode = #tpu.pipeline_mode<synchronous>, transform_indices = @transform_21, window_bounds = array<i64: 2, 32, 32>}, {pipeline_mode = #tpu.pipeline_mode<synchronous>, transform_indices = @transform_22, window_bounds = array<i64: 2, 1, 32>}, {pipeline_mode = #tpu.pipeline_mode<synchronous>, transform_indices = @transform_23, window_bounds = array<i64: 2, 32, 32>}, {pipeline_mode = #tpu.pipeline_mode<synchronous>, transform_indices = @transform_24, window_bounds = array<i64: 2, 1, 32>}, {pipeline_mode = #tpu.pipeline_mode<synchronous>, transform_indices = @transform_25, window_bounds = array<i64: 2, 32, 32>}, {pipeline_mode = #tpu.pipeline_mode<synchronous>, transform_indices = @transform_26, window_bounds = array<i64: 2, 1, 32>}, {pipeline_mode = #tpu.pipeline_mode<synchronous>, transform_indices = @transform_27, window_bounds = array<i64: 2, 32, 32>}, {pipeline_mode = #tpu.pipeline_mode<synchronous>, transform_indices = @transform_28, window_bounds = array<i64: 2, 1, 32>}, {pipeline_mode = #tpu.pipeline_mode<synchronous>, transform_indices = @transform_29, window_bounds = array<i64: 2, 1, 32>}, {pipeline_mode = #tpu.pipeline_mode<synchronous>, transform_indices = @transform_30, window_bounds = array<i64: 2, 1, 32>}, {pipeline_mode = #tpu.pipeline_mode<synchronous>, transform_indices = @transform_31, window_bounds = array<i64: 2, 32, 128>}, {pipeline_mode = #tpu.pipeline_mode<synchronous>, transform_indices = @transform_32, window_bounds = array<i64: 2, 1, 128>}, {pipeline_mode = #tpu.pipeline_mode<synchronous>, transform_indices = @transform_33, window_bounds = array<i64: 2, 128, 32>}, {pipeline_mode = #tpu.pipeline_mode<synchronous>, transform_indices = @transform_34, window_bounds = array<i64: 2, 1, 32>}, {pipeline_mode = #tpu.pipeline_mode<synchronous>, transform_indices = @transform_35, window_bounds = array<i64: 1, 32>}, {pipeline_mode = #tpu.pipeline_mode<synchronous>, transform_indices = @transform_36, window_bounds = array<i64: 1, 32>}, {pipeline_mode = #tpu.pipeline_mode<synchronous>, transform_indices = @transform_37, window_bounds = array<i64: 32, 2>}, {pipeline_mode = #tpu.pipeline_mode<synchronous>, transform_indices = @transform_38, window_bounds = array<i64: 1, 2>}, {pipeline_mode = #tpu.pipeline_mode<synchronous>, transform_indices = @transform_39, window_bounds = array<i64: 1, 1>}, {transform_indices = @transform_40, window_bounds = array<i64: 1, 16, 2>}]} {
    %c0 = arith.constant 0 : index
    %c0_0 = arith.constant 0 : index
    %c0_1 = arith.constant 0 : index
    %0 = vector.load %arg1[%c0, %c0_0, %c0_1] : memref<1x128x20xf32, #tpu.memory_space<vmem>>, vector<1x128x20xf32>
    %1 = vector.shape_cast %0 : vector<1x128x20xf32> to vector<128x20xf32>
    %2 = arith.truncf %1 : vector<128x20xf32> to vector<128x20xbf16>
    %c0_2 = arith.constant 0 : index
    %c0_3 = arith.constant 0 : index
    %3 = vector.load %arg11[%c0_2, %c0_3] : memref<20x8xbf16, #tpu.memory_space<vmem>>, vector<20x8xbf16>
    %cst = arith.constant dense<0.000000e+00> : vector<128x8xf32>
    %4 = tpu.matmul %2, %3, %cst {dimension_numbers = #tpu.dot_dimension_numbers<[1], [0], [0], [1], [0, 0, 1, 1], [], []>} : vector<128x20xbf16>, vector<20x8xbf16>, vector<128x8xf32> -> vector<128x8xf32>
    %c0_4 = arith.constant 0 : index
    %c0_5 = arith.constant 0 : index
    %5 = vector.load %arg12[%c0_4, %c0_5] : memref<1x8xf32, #tpu.memory_space<vmem>>, vector<1x8xf32>
    %6 = vector.broadcast %5 : vector<1x8xf32> to vector<128x8xf32>
    %7 = arith.addf %4, %6 : vector<128x8xf32>
    %c0_6 = arith.constant 0 : index
    %c0_7 = arith.constant 0 : index
    %c0_8 = arith.constant 0 : index
    %8 = vector.load %arg3[%c0_6, %c0_7, %c0_8] : memref<1x128x8xf32, #tpu.memory_space<vmem>>, vector<1x128x8xf32>
    %9 = vector.shape_cast %8 : vector<1x128x8xf32> to vector<128x8xf32>
    %10 = arith.subf %7, %9 : vector<128x8xf32>
    %c0_9 = arith.constant 0 : index
    %c0_10 = arith.constant 0 : index
    %c0_11 = arith.constant 0 : index
    %11 = vector.load %arg4[%c0_9, %c0_10, %c0_11] : memref<1x128x8xf32, #tpu.memory_space<vmem>>, vector<1x128x8xf32>
    %12 = vector.shape_cast %11 : vector<1x128x8xf32> to vector<128x8xf32>
    %13 = arith.mulf %10, %12 : vector<128x8xf32>
    %cst_12 = arith.constant 0.000000e+00 : f32
    %14 = vector.broadcast %cst_12 : f32 to vector<128x8xf32>
    %15 = arith.maximumf %13, %14 : vector<128x8xf32>
    %c0_13 = arith.constant 0 : index
    %c0_14 = arith.constant 0 : index
    %c0_15 = arith.constant 0 : index
    %16 = vector.load %arg2[%c0_13, %c0_14, %c0_15] : memref<1x128x3xf32, #tpu.memory_space<vmem>>, vector<1x128x3xf32>
    %17 = vector.shape_cast %16 : vector<1x128x3xf32> to vector<128x3xf32>
    %18 = arith.truncf %17 : vector<128x3xf32> to vector<128x3xbf16>
    %c0_16 = arith.constant 0 : index
    %c0_17 = arith.constant 0 : index
    %19 = vector.load %arg13[%c0_16, %c0_17] : memref<3x4xbf16, #tpu.memory_space<vmem>>, vector<3x4xbf16>
    %cst_18 = arith.constant dense<0.000000e+00> : vector<128x4xf32>
    %20 = tpu.matmul %18, %19, %cst_18 {dimension_numbers = #tpu.dot_dimension_numbers<[1], [0], [0], [1], [0, 0, 1, 1], [], []>} : vector<128x3xbf16>, vector<3x4xbf16>, vector<128x4xf32> -> vector<128x4xf32>
    %c0_19 = arith.constant 0 : index
    %c0_20 = arith.constant 0 : index
    %21 = vector.load %arg14[%c0_19, %c0_20] : memref<1x4xf32, #tpu.memory_space<vmem>>, vector<1x4xf32>
    %22 = vector.broadcast %21 : vector<1x4xf32> to vector<128x4xf32>
    %23 = arith.addf %20, %22 : vector<128x4xf32>
    %24 = tpu.concatenate %15, %23 in 1 : vector<128x8xf32>, vector<128x4xf32> -> vector<128x12xf32>
    %cst_21 = arith.constant 0.000000e+00 : f32
    %25 = vector.broadcast %cst_21 : f32 to vector<1x12xf32>
    %26 = vector.extract_strided_slice %24 {offsets = [0, 0], sizes = [127, 12], strides = [1, 1]} : vector<128x12xf32> to vector<127x12xf32>
    %27 = tpu.concatenate %25, %26 in 0 : vector<1x12xf32>, vector<127x12xf32> -> vector<128x12xf32>
    %c0_22 = arith.constant 0 : index
    %c0_23 = arith.constant 0 : index
    %28 = vector.load %arg9[%c0_22, %c0_23] : memref<128x1xf32, #tpu.memory_space<vmem>>, vector<128x1xf32>
    %29 = vector.broadcast %28 : vector<128x1xf32> to vector<128x12xf32>
    %30 = arith.mulf %27, %29 : vector<128x12xf32>
    %31 = vector.extract_strided_slice %24 {offsets = [1, 0], sizes = [127, 12], strides = [1, 1]} : vector<128x12xf32> to vector<127x12xf32>
    %32 = tpu.concatenate %31, %25 in 0 : vector<127x12xf32>, vector<1x12xf32> -> vector<128x12xf32>
    %c0_24 = arith.constant 0 : index
    %c0_25 = arith.constant 0 : index
    %33 = vector.load %arg10[%c0_24, %c0_25] : memref<128x1xf32, #tpu.memory_space<vmem>>, vector<128x1xf32>
    %34 = vector.broadcast %33 : vector<128x1xf32> to vector<128x12xf32>
    %35 = arith.mulf %32, %34 : vector<128x12xf32>
    %36 = tpu.concatenate %30, %24, %35 in 1 : vector<128x12xf32>, vector<128x12xf32>, vector<128x12xf32> -> vector<128x36xf32>
    %37 = arith.truncf %36 : vector<128x36xf32> to vector<128x36xbf16>
    %c0_26 = arith.constant 0 : index
    %c0_27 = arith.constant 0 : index
    %38 = vector.load %arg15[%c0_26, %c0_27] : memref<36x4xbf16, #tpu.memory_space<vmem>>, vector<36x4xbf16>
    %cst_28 = arith.constant dense<0.000000e+00> : vector<128x4xf32>
    %39 = tpu.matmul %37, %38, %cst_28 {dimension_numbers = #tpu.dot_dimension_numbers<[1], [0], [0], [1], [0, 0, 1, 1], [], []>} : vector<128x36xbf16>, vector<36x4xbf16>, vector<128x4xf32> -> vector<128x4xf32>
    %c0_29 = arith.constant 0 : index
    %c0_30 = arith.constant 0 : index
    %40 = vector.load %arg16[%c0_29, %c0_30] : memref<1x4xf32, #tpu.memory_space<vmem>>, vector<1x4xf32>
    %41 = vector.broadcast %40 : vector<1x4xf32> to vector<128x4xf32>
    %42 = arith.addf %39, %41 : vector<128x4xf32>
    %43 = tpu.iota {dimensions = array<i32: 1>} : vector<16x128xi32>
    %44 = arith.sitofp %43 : vector<16x128xi32> to vector<16x128xf32>
    %c0_31 = arith.constant 0 : index
    %c0_32 = arith.constant 0 : index
    %c0_33 = arith.constant 0 : index
    %45 = vector.load %arg5[%c0_31, %c0_32, %c0_33] : memref<1x16x1xf32, #tpu.memory_space<vmem>>, vector<1x16x1xf32>
    %46 = vector.shape_cast %45 : vector<1x16x1xf32> to vector<16x1xf32>
    %47 = vector.broadcast %46 : vector<16x1xf32> to vector<16x128xf32>
    %48 = arith.cmpf oge, %44, %47 : vector<16x128xf32>
    %c0_34 = arith.constant 0 : index
    %c0_35 = arith.constant 0 : index
    %c0_36 = arith.constant 0 : index
    %49 = vector.load %arg6[%c0_34, %c0_35, %c0_36] : memref<1x16x1xf32, #tpu.memory_space<vmem>>, vector<1x16x1xf32>
    %50 = vector.shape_cast %49 : vector<1x16x1xf32> to vector<16x1xf32>
    %51 = vector.broadcast %50 : vector<16x1xf32> to vector<16x128xf32>
    %52 = arith.cmpf olt, %44, %51 : vector<16x128xf32>
    %53 = arith.andi %48, %52 : vector<16x128xi1>
    %54 = arith.extui %53 : vector<16x128xi1> to vector<16x128xi32>
    %55 = arith.sitofp %54 : vector<16x128xi32> to vector<16x128xf32>
    %c0_37 = arith.constant 0 : index
    %c0_38 = arith.constant 0 : index
    %c0_39 = arith.constant 0 : index
    %56 = vector.load %arg7[%c0_37, %c0_38, %c0_39] : memref<1x16x1xf32, #tpu.memory_space<vmem>>, vector<1x16x1xf32>
    %57 = vector.shape_cast %56 : vector<1x16x1xf32> to vector<16x1xf32>
    %58 = vector.broadcast %57 : vector<16x1xf32> to vector<16x128xf32>
    %59 = arith.mulf %55, %58 : vector<16x128xf32>
    %60 = arith.truncf %59 : vector<16x128xf32> to vector<16x128xbf16>
    %61 = tpu.concatenate %15, %42 in 1 : vector<128x8xf32>, vector<128x4xf32> -> vector<128x12xf32>
    %62 = arith.truncf %61 : vector<128x12xf32> to vector<128x12xbf16>
    %cst_40 = arith.constant dense<0.000000e+00> : vector<16x12xf32>
    %63 = tpu.matmul %60, %62, %cst_40 {dimension_numbers = #tpu.dot_dimension_numbers<[1], [0], [0], [1], [0, 0, 1, 1], [], []>} : vector<16x128xbf16>, vector<128x12xbf16>, vector<16x12xf32> -> vector<16x12xf32>
    %64 = arith.truncf %63 : vector<16x12xf32> to vector<16x12xbf16>
    %c0_41 = arith.constant 0 : index
    %c0_42 = arith.constant 0 : index
    %65 = vector.load %arg17[%c0_41, %c0_42] : memref<12x32xbf16, #tpu.memory_space<vmem>>, vector<12x32xbf16>
    %cst_43 = arith.constant dense<0.000000e+00> : vector<16x32xf32>
    %66 = tpu.matmul %64, %65, %cst_43 {dimension_numbers = #tpu.dot_dimension_numbers<[1], [0], [0], [1], [0, 0, 1, 1], [], []>} : vector<16x12xbf16>, vector<12x32xbf16>, vector<16x32xf32> -> vector<16x32xf32>
    %c0_44 = arith.constant 0 : index
    %c0_45 = arith.constant 0 : index
    %67 = vector.load %arg18[%c0_44, %c0_45] : memref<1x32xf32, #tpu.memory_space<vmem>>, vector<1x32xf32>
    %68 = vector.broadcast %67 : vector<1x32xf32> to vector<16x32xf32>
    %69 = arith.addf %66, %68 : vector<16x32xf32>
    %c0_46 = arith.constant 0 : index
    %c0_47 = arith.constant 0 : index
    %70 = vector.load %arg19[%c0_46, %c0_47] : memref<16x32xf32, #tpu.memory_space<vmem>>, vector<16x32xf32>
    %71 = arith.addf %69, %70 : vector<16x32xf32>
    %c0_48 = arith.constant 0 : index
    %c0_49 = arith.constant 0 : index
    %c0_50 = arith.constant 0 : index
    %72 = vector.load %arg8[%c0_48, %c0_49, %c0_50] : memref<1x16x16xf32, #tpu.memory_space<vmem>>, vector<1x16x16xf32>
    %73 = vector.shape_cast %72 : vector<1x16x16xf32> to vector<16x16xf32>
    %74 = tpu.iota {dimensions = array<i32: 1>} : vector<1x32xi32>
    %c0_i32 = arith.constant 0 : i32
    %75 = vector.broadcast %c0_i32 : i32 to vector<1x32xi32>
    %76 = arith.cmpi sge, %74, %75 : vector<1x32xi32>
    %c8_i32 = arith.constant 8 : i32
    %77 = vector.broadcast %c8_i32 : i32 to vector<1x32xi32>
    %78 = arith.cmpi slt, %74, %77 : vector<1x32xi32>
    %79 = arith.andi %76, %78 : vector<1x32xi1>
    %80 = arith.extui %79 : vector<1x32xi1> to vector<1x32xi32>
    %81 = arith.sitofp %80 : vector<1x32xi32> to vector<1x32xf32>
    %c8_i32_51 = arith.constant 8 : i32
    %82 = vector.broadcast %c8_i32_51 : i32 to vector<1x32xi32>
    %83 = arith.cmpi sge, %74, %82 : vector<1x32xi32>
    %c16_i32 = arith.constant 16 : i32
    %84 = vector.broadcast %c16_i32 : i32 to vector<1x32xi32>
    %85 = arith.cmpi slt, %74, %84 : vector<1x32xi32>
    %86 = arith.andi %83, %85 : vector<1x32xi1>
    %87 = arith.extui %86 : vector<1x32xi1> to vector<1x32xi32>
    %88 = arith.sitofp %87 : vector<1x32xi32> to vector<1x32xf32>
    %c16_i32_52 = arith.constant 16 : i32
    %89 = vector.broadcast %c16_i32_52 : i32 to vector<1x32xi32>
    %90 = arith.cmpi sge, %74, %89 : vector<1x32xi32>
    %c24_i32 = arith.constant 24 : i32
    %91 = vector.broadcast %c24_i32 : i32 to vector<1x32xi32>
    %92 = arith.cmpi slt, %74, %91 : vector<1x32xi32>
    %93 = arith.andi %90, %92 : vector<1x32xi1>
    %94 = arith.extui %93 : vector<1x32xi1> to vector<1x32xi32>
    %95 = arith.sitofp %94 : vector<1x32xi32> to vector<1x32xf32>
    %c24_i32_53 = arith.constant 24 : i32
    %96 = vector.broadcast %c24_i32_53 : i32 to vector<1x32xi32>
    %97 = arith.cmpi sge, %74, %96 : vector<1x32xi32>
    %c32_i32 = arith.constant 32 : i32
    %98 = vector.broadcast %c32_i32 : i32 to vector<1x32xi32>
    %99 = arith.cmpi slt, %74, %98 : vector<1x32xi32>
    %100 = arith.andi %97, %99 : vector<1x32xi1>
    %101 = arith.extui %100 : vector<1x32xi1> to vector<1x32xi32>
    %102 = arith.sitofp %101 : vector<1x32xi32> to vector<1x32xf32>
    %c0_54 = arith.constant 0 : index
    %c0_55 = arith.constant 0 : index
    %c0_56 = arith.constant 0 : index
    %103 = vector.load %arg20[%c0_54, %c0_55, %c0_56] : memref<2x1x32xf32, #tpu.memory_space<vmem>>, vector<1x1x32xf32>
    %104 = vector.shape_cast %103 : vector<1x1x32xf32> to vector<1x32xf32>
    %c0_57 = arith.constant 0 : index
    %c0_58 = arith.constant 0 : index
    %c0_59 = arith.constant 0 : index
    %105 = vector.load %arg21[%c0_57, %c0_58, %c0_59] : memref<2x1x32xf32, #tpu.memory_space<vmem>>, vector<1x1x32xf32>
    %106 = vector.shape_cast %105 : vector<1x1x32xf32> to vector<1x32xf32>
    %cst_60 = arith.constant dense<0.000000e+00> : vector<16xf32>
    %107 = vector.multi_reduction <add>, %71, %cst_60 [1] : vector<16x32xf32> to vector<16xf32>
    %108 = vector.shape_cast %107 : vector<16xf32> to vector<16x1xf32>
    %cst_61 = arith.constant 3.200000e+01 : f32
    %109 = vector.broadcast %cst_61 : f32 to vector<16x1xf32>
    %110 = arith.divf %108, %109 : vector<16x1xf32>
    %111 = vector.broadcast %110 : vector<16x1xf32> to vector<16x32xf32>
    %112 = arith.subf %71, %111 : vector<16x32xf32>
    %113 = arith.mulf %112, %112 : vector<16x32xf32>
    %cst_62 = arith.constant dense<0.000000e+00> : vector<16xf32>
    %114 = vector.multi_reduction <add>, %113, %cst_62 [1] : vector<16x32xf32> to vector<16xf32>
    %115 = vector.shape_cast %114 : vector<16xf32> to vector<16x1xf32>
    %cst_63 = arith.constant 3.200000e+01 : f32
    %116 = vector.broadcast %cst_63 : f32 to vector<16x1xf32>
    %117 = arith.divf %115, %116 : vector<16x1xf32>
    %cst_64 = arith.constant 9.99999997E-7 : f32
    %118 = vector.broadcast %cst_64 : f32 to vector<16x1xf32>
    %119 = arith.addf %117, %118 : vector<16x1xf32>
    %120 = math.rsqrt %119 : vector<16x1xf32>
    %121 = vector.broadcast %120 : vector<16x1xf32> to vector<16x32xf32>
    %122 = arith.mulf %112, %121 : vector<16x32xf32>
    %123 = vector.broadcast %104 : vector<1x32xf32> to vector<16x32xf32>
    %124 = arith.mulf %122, %123 : vector<16x32xf32>
    %125 = vector.broadcast %106 : vector<1x32xf32> to vector<16x32xf32>
    %126 = arith.addf %124, %125 : vector<16x32xf32>
    %127 = arith.truncf %126 : vector<16x32xf32> to vector<16x32xbf16>
    %c0_65 = arith.constant 0 : index
    %c0_66 = arith.constant 0 : index
    %c0_67 = arith.constant 0 : index
    %128 = vector.load %arg22[%c0_65, %c0_66, %c0_67] : memref<2x32x32xbf16, #tpu.memory_space<vmem>>, vector<1x32x32xbf16>
    %129 = vector.shape_cast %128 : vector<1x32x32xbf16> to vector<32x32xbf16>
    %cst_68 = arith.constant dense<0.000000e+00> : vector<16x32xf32>
    %130 = tpu.matmul %127, %129, %cst_68 {dimension_numbers = #tpu.dot_dimension_numbers<[1], [0], [0], [1], [0, 0, 1, 1], [], []>} : vector<16x32xbf16>, vector<32x32xbf16>, vector<16x32xf32> -> vector<16x32xf32>
    %c0_69 = arith.constant 0 : index
    %c0_70 = arith.constant 0 : index
    %c0_71 = arith.constant 0 : index
    %131 = vector.load %arg23[%c0_69, %c0_70, %c0_71] : memref<2x1x32xf32, #tpu.memory_space<vmem>>, vector<1x1x32xf32>
    %132 = vector.shape_cast %131 : vector<1x1x32xf32> to vector<1x32xf32>
    %133 = vector.broadcast %132 : vector<1x32xf32> to vector<16x32xf32>
    %134 = arith.addf %130, %133 : vector<16x32xf32>
    %c0_72 = arith.constant 0 : index
    %c0_73 = arith.constant 0 : index
    %c0_74 = arith.constant 0 : index
    %135 = vector.load %arg24[%c0_72, %c0_73, %c0_74] : memref<2x32x32xbf16, #tpu.memory_space<vmem>>, vector<1x32x32xbf16>
    %136 = vector.shape_cast %135 : vector<1x32x32xbf16> to vector<32x32xbf16>
    %cst_75 = arith.constant dense<0.000000e+00> : vector<16x32xf32>
    %137 = tpu.matmul %127, %136, %cst_75 {dimension_numbers = #tpu.dot_dimension_numbers<[1], [0], [0], [1], [0, 0, 1, 1], [], []>} : vector<16x32xbf16>, vector<32x32xbf16>, vector<16x32xf32> -> vector<16x32xf32>
    %c0_76 = arith.constant 0 : index
    %c0_77 = arith.constant 0 : index
    %c0_78 = arith.constant 0 : index
    %138 = vector.load %arg25[%c0_76, %c0_77, %c0_78] : memref<2x1x32xf32, #tpu.memory_space<vmem>>, vector<1x1x32xf32>
    %139 = vector.shape_cast %138 : vector<1x1x32xf32> to vector<1x32xf32>
    %140 = vector.broadcast %139 : vector<1x32xf32> to vector<16x32xf32>
    %141 = arith.addf %137, %140 : vector<16x32xf32>
    %c0_79 = arith.constant 0 : index
    %c0_80 = arith.constant 0 : index
    %c0_81 = arith.constant 0 : index
    %142 = vector.load %arg26[%c0_79, %c0_80, %c0_81] : memref<2x32x32xbf16, #tpu.memory_space<vmem>>, vector<1x32x32xbf16>
    %143 = vector.shape_cast %142 : vector<1x32x32xbf16> to vector<32x32xbf16>
    %cst_82 = arith.constant dense<0.000000e+00> : vector<16x32xf32>
    %144 = tpu.matmul %127, %143, %cst_82 {dimension_numbers = #tpu.dot_dimension_numbers<[1], [0], [0], [1], [0, 0, 1, 1], [], []>} : vector<16x32xbf16>, vector<32x32xbf16>, vector<16x32xf32> -> vector<16x32xf32>
    %c0_83 = arith.constant 0 : index
    %c0_84 = arith.constant 0 : index
    %c0_85 = arith.constant 0 : index
    %145 = vector.load %arg27[%c0_83, %c0_84, %c0_85] : memref<2x1x32xf32, #tpu.memory_space<vmem>>, vector<1x1x32xf32>
    %146 = vector.shape_cast %145 : vector<1x1x32xf32> to vector<1x32xf32>
    %147 = vector.broadcast %146 : vector<1x32xf32> to vector<16x32xf32>
    %148 = arith.addf %144, %147 : vector<16x32xf32>
    %149 = arith.truncf %141 : vector<16x32xf32> to vector<16x32xbf16>
    %cst_86 = arith.constant 0.000000e+00 : f32
    %150 = vector.broadcast %cst_86 : f32 to vector<16x32xf32>
    %151 = vector.broadcast %81 : vector<1x32xf32> to vector<16x32xf32>
    %152 = arith.mulf %134, %151 : vector<16x32xf32>
    %153 = arith.truncf %152 : vector<16x32xf32> to vector<16x32xbf16>
    "tpu.trace_start"() <{level = 10 : i32, message = "qd,kd->qk"}> : () -> ()
    %cst_87 = arith.constant dense<0.000000e+00> : vector<16x16xf32>
    %154 = tpu.matmul %153, %149, %cst_87 {dimension_numbers = #tpu.dot_dimension_numbers<[1], [1], [0], [0], [0, 0, 1, 0], [], []>} : vector<16x32xbf16>, vector<16x32xbf16>, vector<16x16xf32> -> vector<16x16xf32>
    "tpu.trace_stop"() : () -> ()
    %155 = arith.addf %154, %73 : vector<16x16xf32>
    %cst_88 = arith.constant dense<0xFF800000> : vector<16xf32>
    %156 = vector.multi_reduction <maximumf>, %155, %cst_88 [1] : vector<16x16xf32> to vector<16xf32>
    %157 = vector.shape_cast %156 : vector<16xf32> to vector<16x1xf32>
    %158 = vector.broadcast %157 : vector<16x1xf32> to vector<16x16xf32>
    %159 = arith.subf %155, %158 : vector<16x16xf32>
    %160 = math.exp %159 : vector<16x16xf32>
    %cst_89 = arith.constant dense<0.000000e+00> : vector<16xf32>
    %161 = vector.multi_reduction <add>, %160, %cst_89 [1] : vector<16x16xf32> to vector<16xf32>
    %162 = vector.shape_cast %161 : vector<16xf32> to vector<16x1xf32>
    %163 = tpu.reciprocal %162 {approx = true} : vector<16x1xf32> -> vector<16x1xf32>
    %164 = vector.broadcast %163 : vector<16x1xf32> to vector<16x16xf32>
    %165 = arith.mulf %160, %164 : vector<16x16xf32>
    %166 = arith.truncf %165 : vector<16x16xf32> to vector<16x16xbf16>
    %167 = vector.broadcast %81 : vector<1x32xf32> to vector<16x32xf32>
    %168 = arith.mulf %148, %167 : vector<16x32xf32>
    %169 = arith.truncf %168 : vector<16x32xf32> to vector<16x32xbf16>
    %cst_90 = arith.constant dense<0.000000e+00> : vector<16x32xf32>
    %170 = tpu.matmul %166, %169, %cst_90 {dimension_numbers = #tpu.dot_dimension_numbers<[1], [0], [0], [1], [0, 0, 1, 1], [], []>} : vector<16x16xbf16>, vector<16x32xbf16>, vector<16x32xf32> -> vector<16x32xf32>
    %171 = arith.addf %150, %170 : vector<16x32xf32>
    %172 = vector.broadcast %88 : vector<1x32xf32> to vector<16x32xf32>
    %173 = arith.mulf %134, %172 : vector<16x32xf32>
    %174 = arith.truncf %173 : vector<16x32xf32> to vector<16x32xbf16>
    "tpu.trace_start"() <{level = 10 : i32, message = "qd,kd->qk"}> : () -> ()
    %cst_91 = arith.constant dense<0.000000e+00> : vector<16x16xf32>
    %175 = tpu.matmul %174, %149, %cst_91 {dimension_numbers = #tpu.dot_dimension_numbers<[1], [1], [0], [0], [0, 0, 1, 0], [], []>} : vector<16x32xbf16>, vector<16x32xbf16>, vector<16x16xf32> -> vector<16x16xf32>
    "tpu.trace_stop"() : () -> ()
    %176 = arith.addf %175, %73 : vector<16x16xf32>
    %cst_92 = arith.constant dense<0xFF800000> : vector<16xf32>
    %177 = vector.multi_reduction <maximumf>, %176, %cst_92 [1] : vector<16x16xf32> to vector<16xf32>
    %178 = vector.shape_cast %177 : vector<16xf32> to vector<16x1xf32>
    %179 = vector.broadcast %178 : vector<16x1xf32> to vector<16x16xf32>
    %180 = arith.subf %176, %179 : vector<16x16xf32>
    %181 = math.exp %180 : vector<16x16xf32>
    %cst_93 = arith.constant dense<0.000000e+00> : vector<16xf32>
    %182 = vector.multi_reduction <add>, %181, %cst_93 [1] : vector<16x16xf32> to vector<16xf32>
    %183 = vector.shape_cast %182 : vector<16xf32> to vector<16x1xf32>
    %184 = tpu.reciprocal %183 {approx = true} : vector<16x1xf32> -> vector<16x1xf32>
    %185 = vector.broadcast %184 : vector<16x1xf32> to vector<16x16xf32>
    %186 = arith.mulf %181, %185 : vector<16x16xf32>
    %187 = arith.truncf %186 : vector<16x16xf32> to vector<16x16xbf16>
    %188 = vector.broadcast %88 : vector<1x32xf32> to vector<16x32xf32>
    %189 = arith.mulf %148, %188 : vector<16x32xf32>
    %190 = arith.truncf %189 : vector<16x32xf32> to vector<16x32xbf16>
    %cst_94 = arith.constant dense<0.000000e+00> : vector<16x32xf32>
    %191 = tpu.matmul %187, %190, %cst_94 {dimension_numbers = #tpu.dot_dimension_numbers<[1], [0], [0], [1], [0, 0, 1, 1], [], []>} : vector<16x16xbf16>, vector<16x32xbf16>, vector<16x32xf32> -> vector<16x32xf32>
    %192 = arith.addf %171, %191 : vector<16x32xf32>
    %193 = vector.broadcast %95 : vector<1x32xf32> to vector<16x32xf32>
    %194 = arith.mulf %134, %193 : vector<16x32xf32>
    %195 = arith.truncf %194 : vector<16x32xf32> to vector<16x32xbf16>
    "tpu.trace_start"() <{level = 10 : i32, message = "qd,kd->qk"}> : () -> ()
    %cst_95 = arith.constant dense<0.000000e+00> : vector<16x16xf32>
    %196 = tpu.matmul %195, %149, %cst_95 {dimension_numbers = #tpu.dot_dimension_numbers<[1], [1], [0], [0], [0, 0, 1, 0], [], []>} : vector<16x32xbf16>, vector<16x32xbf16>, vector<16x16xf32> -> vector<16x16xf32>
    "tpu.trace_stop"() : () -> ()
    %197 = arith.addf %196, %73 : vector<16x16xf32>
    %cst_96 = arith.constant dense<0xFF800000> : vector<16xf32>
    %198 = vector.multi_reduction <maximumf>, %197, %cst_96 [1] : vector<16x16xf32> to vector<16xf32>
    %199 = vector.shape_cast %198 : vector<16xf32> to vector<16x1xf32>
    %200 = vector.broadcast %199 : vector<16x1xf32> to vector<16x16xf32>
    %201 = arith.subf %197, %200 : vector<16x16xf32>
    %202 = math.exp %201 : vector<16x16xf32>
    %cst_97 = arith.constant dense<0.000000e+00> : vector<16xf32>
    %203 = vector.multi_reduction <add>, %202, %cst_97 [1] : vector<16x16xf32> to vector<16xf32>
    %204 = vector.shape_cast %203 : vector<16xf32> to vector<16x1xf32>
    %205 = tpu.reciprocal %204 {approx = true} : vector<16x1xf32> -> vector<16x1xf32>
    %206 = vector.broadcast %205 : vector<16x1xf32> to vector<16x16xf32>
    %207 = arith.mulf %202, %206 : vector<16x16xf32>
    %208 = arith.truncf %207 : vector<16x16xf32> to vector<16x16xbf16>
    %209 = vector.broadcast %95 : vector<1x32xf32> to vector<16x32xf32>
    %210 = arith.mulf %148, %209 : vector<16x32xf32>
    %211 = arith.truncf %210 : vector<16x32xf32> to vector<16x32xbf16>
    %cst_98 = arith.constant dense<0.000000e+00> : vector<16x32xf32>
    %212 = tpu.matmul %208, %211, %cst_98 {dimension_numbers = #tpu.dot_dimension_numbers<[1], [0], [0], [1], [0, 0, 1, 1], [], []>} : vector<16x16xbf16>, vector<16x32xbf16>, vector<16x32xf32> -> vector<16x32xf32>
    %213 = arith.addf %192, %212 : vector<16x32xf32>
    %214 = vector.broadcast %102 : vector<1x32xf32> to vector<16x32xf32>
    %215 = arith.mulf %134, %214 : vector<16x32xf32>
    %216 = arith.truncf %215 : vector<16x32xf32> to vector<16x32xbf16>
    "tpu.trace_start"() <{level = 10 : i32, message = "qd,kd->qk"}> : () -> ()
    %cst_99 = arith.constant dense<0.000000e+00> : vector<16x16xf32>
    %217 = tpu.matmul %216, %149, %cst_99 {dimension_numbers = #tpu.dot_dimension_numbers<[1], [1], [0], [0], [0, 0, 1, 0], [], []>} : vector<16x32xbf16>, vector<16x32xbf16>, vector<16x16xf32> -> vector<16x16xf32>
    "tpu.trace_stop"() : () -> ()
    %218 = arith.addf %217, %73 : vector<16x16xf32>
    %cst_100 = arith.constant dense<0xFF800000> : vector<16xf32>
    %219 = vector.multi_reduction <maximumf>, %218, %cst_100 [1] : vector<16x16xf32> to vector<16xf32>
    %220 = vector.shape_cast %219 : vector<16xf32> to vector<16x1xf32>
    %221 = vector.broadcast %220 : vector<16x1xf32> to vector<16x16xf32>
    %222 = arith.subf %218, %221 : vector<16x16xf32>
    %223 = math.exp %222 : vector<16x16xf32>
    %cst_101 = arith.constant dense<0.000000e+00> : vector<16xf32>
    %224 = vector.multi_reduction <add>, %223, %cst_101 [1] : vector<16x16xf32> to vector<16xf32>
    %225 = vector.shape_cast %224 : vector<16xf32> to vector<16x1xf32>
    %226 = tpu.reciprocal %225 {approx = true} : vector<16x1xf32> -> vector<16x1xf32>
    %227 = vector.broadcast %226 : vector<16x1xf32> to vector<16x16xf32>
    %228 = arith.mulf %223, %227 : vector<16x16xf32>
    %229 = arith.truncf %228 : vector<16x16xf32> to vector<16x16xbf16>
    %230 = vector.broadcast %102 : vector<1x32xf32> to vector<16x32xf32>
    %231 = arith.mulf %148, %230 : vector<16x32xf32>
    %232 = arith.truncf %231 : vector<16x32xf32> to vector<16x32xbf16>
    %cst_102 = arith.constant dense<0.000000e+00> : vector<16x32xf32>
    %233 = tpu.matmul %229, %232, %cst_102 {dimension_numbers = #tpu.dot_dimension_numbers<[1], [0], [0], [1], [0, 0, 1, 1], [], []>} : vector<16x16xbf16>, vector<16x32xbf16>, vector<16x32xf32> -> vector<16x32xf32>
    %234 = arith.addf %213, %233 : vector<16x32xf32>
    %235 = arith.truncf %234 : vector<16x32xf32> to vector<16x32xbf16>
    %c0_103 = arith.constant 0 : index
    %c0_104 = arith.constant 0 : index
    %c0_105 = arith.constant 0 : index
    %236 = vector.load %arg28[%c0_103, %c0_104, %c0_105] : memref<2x32x32xbf16, #tpu.memory_space<vmem>>, vector<1x32x32xbf16>
    %237 = vector.shape_cast %236 : vector<1x32x32xbf16> to vector<32x32xbf16>
    %cst_106 = arith.constant dense<0.000000e+00> : vector<16x32xf32>
    %238 = tpu.matmul %235, %237, %cst_106 {dimension_numbers = #tpu.dot_dimension_numbers<[1], [0], [0], [1], [0, 0, 1, 1], [], []>} : vector<16x32xbf16>, vector<32x32xbf16>, vector<16x32xf32> -> vector<16x32xf32>
    %239 = arith.addf %71, %238 : vector<16x32xf32>
    %c0_107 = arith.constant 0 : index
    %c0_108 = arith.constant 0 : index
    %c0_109 = arith.constant 0 : index
    %240 = vector.load %arg29[%c0_107, %c0_108, %c0_109] : memref<2x1x32xf32, #tpu.memory_space<vmem>>, vector<1x1x32xf32>
    %241 = vector.shape_cast %240 : vector<1x1x32xf32> to vector<1x32xf32>
    %242 = vector.broadcast %241 : vector<1x32xf32> to vector<16x32xf32>
    %243 = arith.addf %239, %242 : vector<16x32xf32>
    %c0_110 = arith.constant 0 : index
    %c0_111 = arith.constant 0 : index
    %c0_112 = arith.constant 0 : index
    %244 = vector.load %arg30[%c0_110, %c0_111, %c0_112] : memref<2x1x32xf32, #tpu.memory_space<vmem>>, vector<1x1x32xf32>
    %245 = vector.shape_cast %244 : vector<1x1x32xf32> to vector<1x32xf32>
    %c0_113 = arith.constant 0 : index
    %c0_114 = arith.constant 0 : index
    %c0_115 = arith.constant 0 : index
    %246 = vector.load %arg31[%c0_113, %c0_114, %c0_115] : memref<2x1x32xf32, #tpu.memory_space<vmem>>, vector<1x1x32xf32>
    %247 = vector.shape_cast %246 : vector<1x1x32xf32> to vector<1x32xf32>
    %cst_116 = arith.constant dense<0.000000e+00> : vector<16xf32>
    %248 = vector.multi_reduction <add>, %243, %cst_116 [1] : vector<16x32xf32> to vector<16xf32>
    %249 = vector.shape_cast %248 : vector<16xf32> to vector<16x1xf32>
    %cst_117 = arith.constant 3.200000e+01 : f32
    %250 = vector.broadcast %cst_117 : f32 to vector<16x1xf32>
    %251 = arith.divf %249, %250 : vector<16x1xf32>
    %252 = vector.broadcast %251 : vector<16x1xf32> to vector<16x32xf32>
    %253 = arith.subf %243, %252 : vector<16x32xf32>
    %254 = arith.mulf %253, %253 : vector<16x32xf32>
    %cst_118 = arith.constant dense<0.000000e+00> : vector<16xf32>
    %255 = vector.multi_reduction <add>, %254, %cst_118 [1] : vector<16x32xf32> to vector<16xf32>
    %256 = vector.shape_cast %255 : vector<16xf32> to vector<16x1xf32>
    %cst_119 = arith.constant 3.200000e+01 : f32
    %257 = vector.broadcast %cst_119 : f32 to vector<16x1xf32>
    %258 = arith.divf %256, %257 : vector<16x1xf32>
    %cst_120 = arith.constant 9.99999997E-7 : f32
    %259 = vector.broadcast %cst_120 : f32 to vector<16x1xf32>
    %260 = arith.addf %258, %259 : vector<16x1xf32>
    %261 = math.rsqrt %260 : vector<16x1xf32>
    %262 = vector.broadcast %261 : vector<16x1xf32> to vector<16x32xf32>
    %263 = arith.mulf %253, %262 : vector<16x32xf32>
    %264 = vector.broadcast %245 : vector<1x32xf32> to vector<16x32xf32>
    %265 = arith.mulf %263, %264 : vector<16x32xf32>
    %266 = vector.broadcast %247 : vector<1x32xf32> to vector<16x32xf32>
    %267 = arith.addf %265, %266 : vector<16x32xf32>
    %268 = arith.truncf %267 : vector<16x32xf32> to vector<16x32xbf16>
    %c0_121 = arith.constant 0 : index
    %c0_122 = arith.constant 0 : index
    %c0_123 = arith.constant 0 : index
    %269 = vector.load %arg32[%c0_121, %c0_122, %c0_123] : memref<2x32x128xbf16, #tpu.memory_space<vmem>>, vector<1x32x128xbf16>
    %270 = vector.shape_cast %269 : vector<1x32x128xbf16> to vector<32x128xbf16>
    %cst_124 = arith.constant dense<0.000000e+00> : vector<16x128xf32>
    %271 = tpu.matmul %268, %270, %cst_124 {dimension_numbers = #tpu.dot_dimension_numbers<[1], [0], [0], [1], [0, 0, 1, 1], [], []>} : vector<16x32xbf16>, vector<32x128xbf16>, vector<16x128xf32> -> vector<16x128xf32>
    %c0_125 = arith.constant 0 : index
    %c0_126 = arith.constant 0 : index
    %c0_127 = arith.constant 0 : index
    %272 = vector.load %arg33[%c0_125, %c0_126, %c0_127] : memref<2x1x128xf32, #tpu.memory_space<vmem>>, vector<1x1x128xf32>
    %273 = vector.shape_cast %272 : vector<1x1x128xf32> to vector<1x128xf32>
    %274 = vector.broadcast %273 : vector<1x128xf32> to vector<16x128xf32>
    %275 = arith.addf %271, %274 : vector<16x128xf32>
    %276 = arith.mulf %275, %275 : vector<16x128xf32>
    %277 = arith.mulf %275, %276 : vector<16x128xf32>
    %cst_128 = arith.constant 4.471500e-02 : f32
    %278 = vector.broadcast %cst_128 : f32 to vector<16x128xf32>
    %279 = arith.mulf %278, %277 : vector<16x128xf32>
    %280 = arith.addf %275, %279 : vector<16x128xf32>
    %cst_129 = arith.constant 0.797884583 : f32
    %281 = vector.broadcast %cst_129 : f32 to vector<16x128xf32>
    %282 = arith.mulf %281, %280 : vector<16x128xf32>
    %283 = math.tanh %282 : vector<16x128xf32>
    %cst_130 = arith.constant 1.000000e+00 : f32
    %284 = vector.broadcast %cst_130 : f32 to vector<16x128xf32>
    %285 = arith.addf %284, %283 : vector<16x128xf32>
    %cst_131 = arith.constant 5.000000e-01 : f32
    %286 = vector.broadcast %cst_131 : f32 to vector<16x128xf32>
    %287 = arith.mulf %286, %285 : vector<16x128xf32>
    %288 = arith.mulf %275, %287 : vector<16x128xf32>
    %289 = arith.truncf %288 : vector<16x128xf32> to vector<16x128xbf16>
    %c0_132 = arith.constant 0 : index
    %c0_133 = arith.constant 0 : index
    %c0_134 = arith.constant 0 : index
    %290 = vector.load %arg34[%c0_132, %c0_133, %c0_134] : memref<2x128x32xbf16, #tpu.memory_space<vmem>>, vector<1x128x32xbf16>
    %291 = vector.shape_cast %290 : vector<1x128x32xbf16> to vector<128x32xbf16>
    %cst_135 = arith.constant dense<0.000000e+00> : vector<16x32xf32>
    %292 = tpu.matmul %289, %291, %cst_135 {dimension_numbers = #tpu.dot_dimension_numbers<[1], [0], [0], [1], [0, 0, 1, 1], [], []>} : vector<16x128xbf16>, vector<128x32xbf16>, vector<16x32xf32> -> vector<16x32xf32>
    %c0_136 = arith.constant 0 : index
    %c0_137 = arith.constant 0 : index
    %c0_138 = arith.constant 0 : index
    %293 = vector.load %arg35[%c0_136, %c0_137, %c0_138] : memref<2x1x32xf32, #tpu.memory_space<vmem>>, vector<1x1x32xf32>
    %294 = vector.shape_cast %293 : vector<1x1x32xf32> to vector<1x32xf32>
    %295 = vector.broadcast %294 : vector<1x32xf32> to vector<16x32xf32>
    %296 = arith.addf %292, %295 : vector<16x32xf32>
    %297 = arith.addf %243, %296 : vector<16x32xf32>
    %c1 = arith.constant 1 : index
    %c0_139 = arith.constant 0 : index
    %c0_140 = arith.constant 0 : index
    %298 = vector.load %arg20[%c1, %c0_139, %c0_140] : memref<2x1x32xf32, #tpu.memory_space<vmem>>, vector<1x1x32xf32>
    %299 = vector.shape_cast %298 : vector<1x1x32xf32> to vector<1x32xf32>
    %c1_141 = arith.constant 1 : index
    %c0_142 = arith.constant 0 : index
    %c0_143 = arith.constant 0 : index
    %300 = vector.load %arg21[%c1_141, %c0_142, %c0_143] : memref<2x1x32xf32, #tpu.memory_space<vmem>>, vector<1x1x32xf32>
    %301 = vector.shape_cast %300 : vector<1x1x32xf32> to vector<1x32xf32>
    %cst_144 = arith.constant dense<0.000000e+00> : vector<16xf32>
    %302 = vector.multi_reduction <add>, %297, %cst_144 [1] : vector<16x32xf32> to vector<16xf32>
    %303 = vector.shape_cast %302 : vector<16xf32> to vector<16x1xf32>
    %cst_145 = arith.constant 3.200000e+01 : f32
    %304 = vector.broadcast %cst_145 : f32 to vector<16x1xf32>
    %305 = arith.divf %303, %304 : vector<16x1xf32>
    %306 = vector.broadcast %305 : vector<16x1xf32> to vector<16x32xf32>
    %307 = arith.subf %297, %306 : vector<16x32xf32>
    %308 = arith.mulf %307, %307 : vector<16x32xf32>
    %cst_146 = arith.constant dense<0.000000e+00> : vector<16xf32>
    %309 = vector.multi_reduction <add>, %308, %cst_146 [1] : vector<16x32xf32> to vector<16xf32>
    %310 = vector.shape_cast %309 : vector<16xf32> to vector<16x1xf32>
    %cst_147 = arith.constant 3.200000e+01 : f32
    %311 = vector.broadcast %cst_147 : f32 to vector<16x1xf32>
    %312 = arith.divf %310, %311 : vector<16x1xf32>
    %cst_148 = arith.constant 9.99999997E-7 : f32
    %313 = vector.broadcast %cst_148 : f32 to vector<16x1xf32>
    %314 = arith.addf %312, %313 : vector<16x1xf32>
    %315 = math.rsqrt %314 : vector<16x1xf32>
    %316 = vector.broadcast %315 : vector<16x1xf32> to vector<16x32xf32>
    %317 = arith.mulf %307, %316 : vector<16x32xf32>
    %318 = vector.broadcast %299 : vector<1x32xf32> to vector<16x32xf32>
    %319 = arith.mulf %317, %318 : vector<16x32xf32>
    %320 = vector.broadcast %301 : vector<1x32xf32> to vector<16x32xf32>
    %321 = arith.addf %319, %320 : vector<16x32xf32>
    %322 = arith.truncf %321 : vector<16x32xf32> to vector<16x32xbf16>
    %c1_149 = arith.constant 1 : index
    %c0_150 = arith.constant 0 : index
    %c0_151 = arith.constant 0 : index
    %323 = vector.load %arg22[%c1_149, %c0_150, %c0_151] : memref<2x32x32xbf16, #tpu.memory_space<vmem>>, vector<1x32x32xbf16>
    %324 = vector.shape_cast %323 : vector<1x32x32xbf16> to vector<32x32xbf16>
    %cst_152 = arith.constant dense<0.000000e+00> : vector<16x32xf32>
    %325 = tpu.matmul %322, %324, %cst_152 {dimension_numbers = #tpu.dot_dimension_numbers<[1], [0], [0], [1], [0, 0, 1, 1], [], []>} : vector<16x32xbf16>, vector<32x32xbf16>, vector<16x32xf32> -> vector<16x32xf32>
    %c1_153 = arith.constant 1 : index
    %c0_154 = arith.constant 0 : index
    %c0_155 = arith.constant 0 : index
    %326 = vector.load %arg23[%c1_153, %c0_154, %c0_155] : memref<2x1x32xf32, #tpu.memory_space<vmem>>, vector<1x1x32xf32>
    %327 = vector.shape_cast %326 : vector<1x1x32xf32> to vector<1x32xf32>
    %328 = vector.broadcast %327 : vector<1x32xf32> to vector<16x32xf32>
    %329 = arith.addf %325, %328 : vector<16x32xf32>
    %c1_156 = arith.constant 1 : index
    %c0_157 = arith.constant 0 : index
    %c0_158 = arith.constant 0 : index
    %330 = vector.load %arg24[%c1_156, %c0_157, %c0_158] : memref<2x32x32xbf16, #tpu.memory_space<vmem>>, vector<1x32x32xbf16>
    %331 = vector.shape_cast %330 : vector<1x32x32xbf16> to vector<32x32xbf16>
    %cst_159 = arith.constant dense<0.000000e+00> : vector<16x32xf32>
    %332 = tpu.matmul %322, %331, %cst_159 {dimension_numbers = #tpu.dot_dimension_numbers<[1], [0], [0], [1], [0, 0, 1, 1], [], []>} : vector<16x32xbf16>, vector<32x32xbf16>, vector<16x32xf32> -> vector<16x32xf32>
    %c1_160 = arith.constant 1 : index
    %c0_161 = arith.constant 0 : index
    %c0_162 = arith.constant 0 : index
    %333 = vector.load %arg25[%c1_160, %c0_161, %c0_162] : memref<2x1x32xf32, #tpu.memory_space<vmem>>, vector<1x1x32xf32>
    %334 = vector.shape_cast %333 : vector<1x1x32xf32> to vector<1x32xf32>
    %335 = vector.broadcast %334 : vector<1x32xf32> to vector<16x32xf32>
    %336 = arith.addf %332, %335 : vector<16x32xf32>
    %c1_163 = arith.constant 1 : index
    %c0_164 = arith.constant 0 : index
    %c0_165 = arith.constant 0 : index
    %337 = vector.load %arg26[%c1_163, %c0_164, %c0_165] : memref<2x32x32xbf16, #tpu.memory_space<vmem>>, vector<1x32x32xbf16>
    %338 = vector.shape_cast %337 : vector<1x32x32xbf16> to vector<32x32xbf16>
    %cst_166 = arith.constant dense<0.000000e+00> : vector<16x32xf32>
    %339 = tpu.matmul %322, %338, %cst_166 {dimension_numbers = #tpu.dot_dimension_numbers<[1], [0], [0], [1], [0, 0, 1, 1], [], []>} : vector<16x32xbf16>, vector<32x32xbf16>, vector<16x32xf32> -> vector<16x32xf32>
    %c1_167 = arith.constant 1 : index
    %c0_168 = arith.constant 0 : index
    %c0_169 = arith.constant 0 : index
    %340 = vector.load %arg27[%c1_167, %c0_168, %c0_169] : memref<2x1x32xf32, #tpu.memory_space<vmem>>, vector<1x1x32xf32>
    %341 = vector.shape_cast %340 : vector<1x1x32xf32> to vector<1x32xf32>
    %342 = vector.broadcast %341 : vector<1x32xf32> to vector<16x32xf32>
    %343 = arith.addf %339, %342 : vector<16x32xf32>
    %344 = arith.truncf %336 : vector<16x32xf32> to vector<16x32xbf16>
    %cst_170 = arith.constant 0.000000e+00 : f32
    %345 = vector.broadcast %cst_170 : f32 to vector<16x32xf32>
    %346 = vector.broadcast %81 : vector<1x32xf32> to vector<16x32xf32>
    %347 = arith.mulf %329, %346 : vector<16x32xf32>
    %348 = arith.truncf %347 : vector<16x32xf32> to vector<16x32xbf16>
    "tpu.trace_start"() <{level = 10 : i32, message = "qd,kd->qk"}> : () -> ()
    %cst_171 = arith.constant dense<0.000000e+00> : vector<16x16xf32>
    %349 = tpu.matmul %348, %344, %cst_171 {dimension_numbers = #tpu.dot_dimension_numbers<[1], [1], [0], [0], [0, 0, 1, 0], [], []>} : vector<16x32xbf16>, vector<16x32xbf16>, vector<16x16xf32> -> vector<16x16xf32>
    "tpu.trace_stop"() : () -> ()
    %350 = arith.addf %349, %73 : vector<16x16xf32>
    %cst_172 = arith.constant dense<0xFF800000> : vector<16xf32>
    %351 = vector.multi_reduction <maximumf>, %350, %cst_172 [1] : vector<16x16xf32> to vector<16xf32>
    %352 = vector.shape_cast %351 : vector<16xf32> to vector<16x1xf32>
    %353 = vector.broadcast %352 : vector<16x1xf32> to vector<16x16xf32>
    %354 = arith.subf %350, %353 : vector<16x16xf32>
    %355 = math.exp %354 : vector<16x16xf32>
    %cst_173 = arith.constant dense<0.000000e+00> : vector<16xf32>
    %356 = vector.multi_reduction <add>, %355, %cst_173 [1] : vector<16x16xf32> to vector<16xf32>
    %357 = vector.shape_cast %356 : vector<16xf32> to vector<16x1xf32>
    %358 = tpu.reciprocal %357 {approx = true} : vector<16x1xf32> -> vector<16x1xf32>
    %359 = vector.broadcast %358 : vector<16x1xf32> to vector<16x16xf32>
    %360 = arith.mulf %355, %359 : vector<16x16xf32>
    %361 = arith.truncf %360 : vector<16x16xf32> to vector<16x16xbf16>
    %362 = vector.broadcast %81 : vector<1x32xf32> to vector<16x32xf32>
    %363 = arith.mulf %343, %362 : vector<16x32xf32>
    %364 = arith.truncf %363 : vector<16x32xf32> to vector<16x32xbf16>
    %cst_174 = arith.constant dense<0.000000e+00> : vector<16x32xf32>
    %365 = tpu.matmul %361, %364, %cst_174 {dimension_numbers = #tpu.dot_dimension_numbers<[1], [0], [0], [1], [0, 0, 1, 1], [], []>} : vector<16x16xbf16>, vector<16x32xbf16>, vector<16x32xf32> -> vector<16x32xf32>
    %366 = arith.addf %345, %365 : vector<16x32xf32>
    %367 = vector.broadcast %88 : vector<1x32xf32> to vector<16x32xf32>
    %368 = arith.mulf %329, %367 : vector<16x32xf32>
    %369 = arith.truncf %368 : vector<16x32xf32> to vector<16x32xbf16>
    "tpu.trace_start"() <{level = 10 : i32, message = "qd,kd->qk"}> : () -> ()
    %cst_175 = arith.constant dense<0.000000e+00> : vector<16x16xf32>
    %370 = tpu.matmul %369, %344, %cst_175 {dimension_numbers = #tpu.dot_dimension_numbers<[1], [1], [0], [0], [0, 0, 1, 0], [], []>} : vector<16x32xbf16>, vector<16x32xbf16>, vector<16x16xf32> -> vector<16x16xf32>
    "tpu.trace_stop"() : () -> ()
    %371 = arith.addf %370, %73 : vector<16x16xf32>
    %cst_176 = arith.constant dense<0xFF800000> : vector<16xf32>
    %372 = vector.multi_reduction <maximumf>, %371, %cst_176 [1] : vector<16x16xf32> to vector<16xf32>
    %373 = vector.shape_cast %372 : vector<16xf32> to vector<16x1xf32>
    %374 = vector.broadcast %373 : vector<16x1xf32> to vector<16x16xf32>
    %375 = arith.subf %371, %374 : vector<16x16xf32>
    %376 = math.exp %375 : vector<16x16xf32>
    %cst_177 = arith.constant dense<0.000000e+00> : vector<16xf32>
    %377 = vector.multi_reduction <add>, %376, %cst_177 [1] : vector<16x16xf32> to vector<16xf32>
    %378 = vector.shape_cast %377 : vector<16xf32> to vector<16x1xf32>
    %379 = tpu.reciprocal %378 {approx = true} : vector<16x1xf32> -> vector<16x1xf32>
    %380 = vector.broadcast %379 : vector<16x1xf32> to vector<16x16xf32>
    %381 = arith.mulf %376, %380 : vector<16x16xf32>
    %382 = arith.truncf %381 : vector<16x16xf32> to vector<16x16xbf16>
    %383 = vector.broadcast %88 : vector<1x32xf32> to vector<16x32xf32>
    %384 = arith.mulf %343, %383 : vector<16x32xf32>
    %385 = arith.truncf %384 : vector<16x32xf32> to vector<16x32xbf16>
    %cst_178 = arith.constant dense<0.000000e+00> : vector<16x32xf32>
    %386 = tpu.matmul %382, %385, %cst_178 {dimension_numbers = #tpu.dot_dimension_numbers<[1], [0], [0], [1], [0, 0, 1, 1], [], []>} : vector<16x16xbf16>, vector<16x32xbf16>, vector<16x32xf32> -> vector<16x32xf32>
    %387 = arith.addf %366, %386 : vector<16x32xf32>
    %388 = vector.broadcast %95 : vector<1x32xf32> to vector<16x32xf32>
    %389 = arith.mulf %329, %388 : vector<16x32xf32>
    %390 = arith.truncf %389 : vector<16x32xf32> to vector<16x32xbf16>
    "tpu.trace_start"() <{level = 10 : i32, message = "qd,kd->qk"}> : () -> ()
    %cst_179 = arith.constant dense<0.000000e+00> : vector<16x16xf32>
    %391 = tpu.matmul %390, %344, %cst_179 {dimension_numbers = #tpu.dot_dimension_numbers<[1], [1], [0], [0], [0, 0, 1, 0], [], []>} : vector<16x32xbf16>, vector<16x32xbf16>, vector<16x16xf32> -> vector<16x16xf32>
    "tpu.trace_stop"() : () -> ()
    %392 = arith.addf %391, %73 : vector<16x16xf32>
    %cst_180 = arith.constant dense<0xFF800000> : vector<16xf32>
    %393 = vector.multi_reduction <maximumf>, %392, %cst_180 [1] : vector<16x16xf32> to vector<16xf32>
    %394 = vector.shape_cast %393 : vector<16xf32> to vector<16x1xf32>
    %395 = vector.broadcast %394 : vector<16x1xf32> to vector<16x16xf32>
    %396 = arith.subf %392, %395 : vector<16x16xf32>
    %397 = math.exp %396 : vector<16x16xf32>
    %cst_181 = arith.constant dense<0.000000e+00> : vector<16xf32>
    %398 = vector.multi_reduction <add>, %397, %cst_181 [1] : vector<16x16xf32> to vector<16xf32>
    %399 = vector.shape_cast %398 : vector<16xf32> to vector<16x1xf32>
    %400 = tpu.reciprocal %399 {approx = true} : vector<16x1xf32> -> vector<16x1xf32>
    %401 = vector.broadcast %400 : vector<16x1xf32> to vector<16x16xf32>
    %402 = arith.mulf %397, %401 : vector<16x16xf32>
    %403 = arith.truncf %402 : vector<16x16xf32> to vector<16x16xbf16>
    %404 = vector.broadcast %95 : vector<1x32xf32> to vector<16x32xf32>
    %405 = arith.mulf %343, %404 : vector<16x32xf32>
    %406 = arith.truncf %405 : vector<16x32xf32> to vector<16x32xbf16>
    %cst_182 = arith.constant dense<0.000000e+00> : vector<16x32xf32>
    %407 = tpu.matmul %403, %406, %cst_182 {dimension_numbers = #tpu.dot_dimension_numbers<[1], [0], [0], [1], [0, 0, 1, 1], [], []>} : vector<16x16xbf16>, vector<16x32xbf16>, vector<16x32xf32> -> vector<16x32xf32>
    %408 = arith.addf %387, %407 : vector<16x32xf32>
    %409 = vector.broadcast %102 : vector<1x32xf32> to vector<16x32xf32>
    %410 = arith.mulf %329, %409 : vector<16x32xf32>
    %411 = arith.truncf %410 : vector<16x32xf32> to vector<16x32xbf16>
    "tpu.trace_start"() <{level = 10 : i32, message = "qd,kd->qk"}> : () -> ()
    %cst_183 = arith.constant dense<0.000000e+00> : vector<16x16xf32>
    %412 = tpu.matmul %411, %344, %cst_183 {dimension_numbers = #tpu.dot_dimension_numbers<[1], [1], [0], [0], [0, 0, 1, 0], [], []>} : vector<16x32xbf16>, vector<16x32xbf16>, vector<16x16xf32> -> vector<16x16xf32>
    "tpu.trace_stop"() : () -> ()
    %413 = arith.addf %412, %73 : vector<16x16xf32>
    %cst_184 = arith.constant dense<0xFF800000> : vector<16xf32>
    %414 = vector.multi_reduction <maximumf>, %413, %cst_184 [1] : vector<16x16xf32> to vector<16xf32>
    %415 = vector.shape_cast %414 : vector<16xf32> to vector<16x1xf32>
    %416 = vector.broadcast %415 : vector<16x1xf32> to vector<16x16xf32>
    %417 = arith.subf %413, %416 : vector<16x16xf32>
    %418 = math.exp %417 : vector<16x16xf32>
    %cst_185 = arith.constant dense<0.000000e+00> : vector<16xf32>
    %419 = vector.multi_reduction <add>, %418, %cst_185 [1] : vector<16x16xf32> to vector<16xf32>
    %420 = vector.shape_cast %419 : vector<16xf32> to vector<16x1xf32>
    %421 = tpu.reciprocal %420 {approx = true} : vector<16x1xf32> -> vector<16x1xf32>
    %422 = vector.broadcast %421 : vector<16x1xf32> to vector<16x16xf32>
    %423 = arith.mulf %418, %422 : vector<16x16xf32>
    %424 = arith.truncf %423 : vector<16x16xf32> to vector<16x16xbf16>
    %425 = vector.broadcast %102 : vector<1x32xf32> to vector<16x32xf32>
    %426 = arith.mulf %343, %425 : vector<16x32xf32>
    %427 = arith.truncf %426 : vector<16x32xf32> to vector<16x32xbf16>
    %cst_186 = arith.constant dense<0.000000e+00> : vector<16x32xf32>
    %428 = tpu.matmul %424, %427, %cst_186 {dimension_numbers = #tpu.dot_dimension_numbers<[1], [0], [0], [1], [0, 0, 1, 1], [], []>} : vector<16x16xbf16>, vector<16x32xbf16>, vector<16x32xf32> -> vector<16x32xf32>
    %429 = arith.addf %408, %428 : vector<16x32xf32>
    %430 = arith.truncf %429 : vector<16x32xf32> to vector<16x32xbf16>
    %c1_187 = arith.constant 1 : index
    %c0_188 = arith.constant 0 : index
    %c0_189 = arith.constant 0 : index
    %431 = vector.load %arg28[%c1_187, %c0_188, %c0_189] : memref<2x32x32xbf16, #tpu.memory_space<vmem>>, vector<1x32x32xbf16>
    %432 = vector.shape_cast %431 : vector<1x32x32xbf16> to vector<32x32xbf16>
    %cst_190 = arith.constant dense<0.000000e+00> : vector<16x32xf32>
    %433 = tpu.matmul %430, %432, %cst_190 {dimension_numbers = #tpu.dot_dimension_numbers<[1], [0], [0], [1], [0, 0, 1, 1], [], []>} : vector<16x32xbf16>, vector<32x32xbf16>, vector<16x32xf32> -> vector<16x32xf32>
    %434 = arith.addf %297, %433 : vector<16x32xf32>
    %c1_191 = arith.constant 1 : index
    %c0_192 = arith.constant 0 : index
    %c0_193 = arith.constant 0 : index
    %435 = vector.load %arg29[%c1_191, %c0_192, %c0_193] : memref<2x1x32xf32, #tpu.memory_space<vmem>>, vector<1x1x32xf32>
    %436 = vector.shape_cast %435 : vector<1x1x32xf32> to vector<1x32xf32>
    %437 = vector.broadcast %436 : vector<1x32xf32> to vector<16x32xf32>
    %438 = arith.addf %434, %437 : vector<16x32xf32>
    %c1_194 = arith.constant 1 : index
    %c0_195 = arith.constant 0 : index
    %c0_196 = arith.constant 0 : index
    %439 = vector.load %arg30[%c1_194, %c0_195, %c0_196] : memref<2x1x32xf32, #tpu.memory_space<vmem>>, vector<1x1x32xf32>
    %440 = vector.shape_cast %439 : vector<1x1x32xf32> to vector<1x32xf32>
    %c1_197 = arith.constant 1 : index
    %c0_198 = arith.constant 0 : index
    %c0_199 = arith.constant 0 : index
    %441 = vector.load %arg31[%c1_197, %c0_198, %c0_199] : memref<2x1x32xf32, #tpu.memory_space<vmem>>, vector<1x1x32xf32>
    %442 = vector.shape_cast %441 : vector<1x1x32xf32> to vector<1x32xf32>
    %cst_200 = arith.constant dense<0.000000e+00> : vector<16xf32>
    %443 = vector.multi_reduction <add>, %438, %cst_200 [1] : vector<16x32xf32> to vector<16xf32>
    %444 = vector.shape_cast %443 : vector<16xf32> to vector<16x1xf32>
    %cst_201 = arith.constant 3.200000e+01 : f32
    %445 = vector.broadcast %cst_201 : f32 to vector<16x1xf32>
    %446 = arith.divf %444, %445 : vector<16x1xf32>
    %447 = vector.broadcast %446 : vector<16x1xf32> to vector<16x32xf32>
    %448 = arith.subf %438, %447 : vector<16x32xf32>
    %449 = arith.mulf %448, %448 : vector<16x32xf32>
    %cst_202 = arith.constant dense<0.000000e+00> : vector<16xf32>
    %450 = vector.multi_reduction <add>, %449, %cst_202 [1] : vector<16x32xf32> to vector<16xf32>
    %451 = vector.shape_cast %450 : vector<16xf32> to vector<16x1xf32>
    %cst_203 = arith.constant 3.200000e+01 : f32
    %452 = vector.broadcast %cst_203 : f32 to vector<16x1xf32>
    %453 = arith.divf %451, %452 : vector<16x1xf32>
    %cst_204 = arith.constant 9.99999997E-7 : f32
    %454 = vector.broadcast %cst_204 : f32 to vector<16x1xf32>
    %455 = arith.addf %453, %454 : vector<16x1xf32>
    %456 = math.rsqrt %455 : vector<16x1xf32>
    %457 = vector.broadcast %456 : vector<16x1xf32> to vector<16x32xf32>
    %458 = arith.mulf %448, %457 : vector<16x32xf32>
    %459 = vector.broadcast %440 : vector<1x32xf32> to vector<16x32xf32>
    %460 = arith.mulf %458, %459 : vector<16x32xf32>
    %461 = vector.broadcast %442 : vector<1x32xf32> to vector<16x32xf32>
    %462 = arith.addf %460, %461 : vector<16x32xf32>
    %463 = arith.truncf %462 : vector<16x32xf32> to vector<16x32xbf16>
    %c1_205 = arith.constant 1 : index
    %c0_206 = arith.constant 0 : index
    %c0_207 = arith.constant 0 : index
    %464 = vector.load %arg32[%c1_205, %c0_206, %c0_207] : memref<2x32x128xbf16, #tpu.memory_space<vmem>>, vector<1x32x128xbf16>
    %465 = vector.shape_cast %464 : vector<1x32x128xbf16> to vector<32x128xbf16>
    %cst_208 = arith.constant dense<0.000000e+00> : vector<16x128xf32>
    %466 = tpu.matmul %463, %465, %cst_208 {dimension_numbers = #tpu.dot_dimension_numbers<[1], [0], [0], [1], [0, 0, 1, 1], [], []>} : vector<16x32xbf16>, vector<32x128xbf16>, vector<16x128xf32> -> vector<16x128xf32>
    %c1_209 = arith.constant 1 : index
    %c0_210 = arith.constant 0 : index
    %c0_211 = arith.constant 0 : index
    %467 = vector.load %arg33[%c1_209, %c0_210, %c0_211] : memref<2x1x128xf32, #tpu.memory_space<vmem>>, vector<1x1x128xf32>
    %468 = vector.shape_cast %467 : vector<1x1x128xf32> to vector<1x128xf32>
    %469 = vector.broadcast %468 : vector<1x128xf32> to vector<16x128xf32>
    %470 = arith.addf %466, %469 : vector<16x128xf32>
    %471 = arith.mulf %470, %470 : vector<16x128xf32>
    %472 = arith.mulf %470, %471 : vector<16x128xf32>
    %cst_212 = arith.constant 4.471500e-02 : f32
    %473 = vector.broadcast %cst_212 : f32 to vector<16x128xf32>
    %474 = arith.mulf %473, %472 : vector<16x128xf32>
    %475 = arith.addf %470, %474 : vector<16x128xf32>
    %cst_213 = arith.constant 0.797884583 : f32
    %476 = vector.broadcast %cst_213 : f32 to vector<16x128xf32>
    %477 = arith.mulf %476, %475 : vector<16x128xf32>
    %478 = math.tanh %477 : vector<16x128xf32>
    %cst_214 = arith.constant 1.000000e+00 : f32
    %479 = vector.broadcast %cst_214 : f32 to vector<16x128xf32>
    %480 = arith.addf %479, %478 : vector<16x128xf32>
    %cst_215 = arith.constant 5.000000e-01 : f32
    %481 = vector.broadcast %cst_215 : f32 to vector<16x128xf32>
    %482 = arith.mulf %481, %480 : vector<16x128xf32>
    %483 = arith.mulf %470, %482 : vector<16x128xf32>
    %484 = arith.truncf %483 : vector<16x128xf32> to vector<16x128xbf16>
    %c1_216 = arith.constant 1 : index
    %c0_217 = arith.constant 0 : index
    %c0_218 = arith.constant 0 : index
    %485 = vector.load %arg34[%c1_216, %c0_217, %c0_218] : memref<2x128x32xbf16, #tpu.memory_space<vmem>>, vector<1x128x32xbf16>
    %486 = vector.shape_cast %485 : vector<1x128x32xbf16> to vector<128x32xbf16>
    %cst_219 = arith.constant dense<0.000000e+00> : vector<16x32xf32>
    %487 = tpu.matmul %484, %486, %cst_219 {dimension_numbers = #tpu.dot_dimension_numbers<[1], [0], [0], [1], [0, 0, 1, 1], [], []>} : vector<16x128xbf16>, vector<128x32xbf16>, vector<16x32xf32> -> vector<16x32xf32>
    %c1_220 = arith.constant 1 : index
    %c0_221 = arith.constant 0 : index
    %c0_222 = arith.constant 0 : index
    %488 = vector.load %arg35[%c1_220, %c0_221, %c0_222] : memref<2x1x32xf32, #tpu.memory_space<vmem>>, vector<1x1x32xf32>
    %489 = vector.shape_cast %488 : vector<1x1x32xf32> to vector<1x32xf32>
    %490 = vector.broadcast %489 : vector<1x32xf32> to vector<16x32xf32>
    %491 = arith.addf %487, %490 : vector<16x32xf32>
    %492 = arith.addf %438, %491 : vector<16x32xf32>
    %c0_223 = arith.constant 0 : index
    %c0_224 = arith.constant 0 : index
    %493 = vector.load %arg36[%c0_223, %c0_224] : memref<1x32xf32, #tpu.memory_space<vmem>>, vector<1x32xf32>
    %c0_225 = arith.constant 0 : index
    %c0_226 = arith.constant 0 : index
    %494 = vector.load %arg37[%c0_225, %c0_226] : memref<1x32xf32, #tpu.memory_space<vmem>>, vector<1x32xf32>
    %cst_227 = arith.constant dense<0.000000e+00> : vector<16xf32>
    %495 = vector.multi_reduction <add>, %492, %cst_227 [1] : vector<16x32xf32> to vector<16xf32>
    %496 = vector.shape_cast %495 : vector<16xf32> to vector<16x1xf32>
    %cst_228 = arith.constant 3.200000e+01 : f32
    %497 = vector.broadcast %cst_228 : f32 to vector<16x1xf32>
    %498 = arith.divf %496, %497 : vector<16x1xf32>
    %499 = vector.broadcast %498 : vector<16x1xf32> to vector<16x32xf32>
    %500 = arith.subf %492, %499 : vector<16x32xf32>
    %501 = arith.mulf %500, %500 : vector<16x32xf32>
    %cst_229 = arith.constant dense<0.000000e+00> : vector<16xf32>
    %502 = vector.multi_reduction <add>, %501, %cst_229 [1] : vector<16x32xf32> to vector<16xf32>
    %503 = vector.shape_cast %502 : vector<16xf32> to vector<16x1xf32>
    %cst_230 = arith.constant 3.200000e+01 : f32
    %504 = vector.broadcast %cst_230 : f32 to vector<16x1xf32>
    %505 = arith.divf %503, %504 : vector<16x1xf32>
    %cst_231 = arith.constant 9.99999997E-7 : f32
    %506 = vector.broadcast %cst_231 : f32 to vector<16x1xf32>
    %507 = arith.addf %505, %506 : vector<16x1xf32>
    %508 = math.rsqrt %507 : vector<16x1xf32>
    %509 = vector.broadcast %508 : vector<16x1xf32> to vector<16x32xf32>
    %510 = arith.mulf %500, %509 : vector<16x32xf32>
    %511 = vector.broadcast %493 : vector<1x32xf32> to vector<16x32xf32>
    %512 = arith.mulf %510, %511 : vector<16x32xf32>
    %513 = vector.broadcast %494 : vector<1x32xf32> to vector<16x32xf32>
    %514 = arith.addf %512, %513 : vector<16x32xf32>
    %515 = arith.truncf %514 : vector<16x32xf32> to vector<16x32xbf16>
    %c0_232 = arith.constant 0 : index
    %c0_233 = arith.constant 0 : index
    %516 = vector.load %arg38[%c0_232, %c0_233] : memref<32x2xbf16, #tpu.memory_space<vmem>>, vector<32x2xbf16>
    %cst_234 = arith.constant dense<0.000000e+00> : vector<16x2xf32>
    %517 = tpu.matmul %515, %516, %cst_234 {dimension_numbers = #tpu.dot_dimension_numbers<[1], [0], [0], [1], [0, 0, 1, 1], [], []>} : vector<16x32xbf16>, vector<32x2xbf16>, vector<16x2xf32> -> vector<16x2xf32>
    %c0_235 = arith.constant 0 : index
    %c0_236 = arith.constant 0 : index
    %518 = vector.load %arg39[%c0_235, %c0_236] : memref<1x2xf32, #tpu.memory_space<vmem>>, vector<1x2xf32>
    %519 = vector.broadcast %518 : vector<1x2xf32> to vector<16x2xf32>
    %520 = arith.addf %517, %519 : vector<16x2xf32>
    %521 = vector.extract_strided_slice %520 {offsets = [0, 0], sizes = [16, 1], strides = [1, 1]} : vector<16x2xf32> to vector<16x1xf32>
    %cst_237 = arith.constant 0.000000e+00 : f32
    %522 = vector.broadcast %cst_237 : f32 to vector<16x1xf32>
    %523 = arith.maximumf %521, %522 : vector<16x1xf32>
    %524 = math.absf %521 : vector<16x1xf32>
    %cst_238 = arith.constant 0.000000e+00 : f32
    %525 = vector.broadcast %cst_238 : f32 to vector<16x1xf32>
    %526 = arith.subf %525, %524 : vector<16x1xf32>
    %527 = math.exp %526 : vector<16x1xf32>
    %528 = math.log1p %527 : vector<16x1xf32>
    %529 = arith.addf %523, %528 : vector<16x1xf32>
    %530 = vector.extract_strided_slice %520 {offsets = [0, 1], sizes = [16, 1], strides = [1, 1]} : vector<16x2xf32> to vector<16x1xf32>
    %c0_239 = arith.constant 0 : index
    %c0_240 = arith.constant 0 : index
    %531 = vector.load %arg40[%c0_239, %c0_240] : memref<1x1xf32, #tpu.memory_space<vmem>>, vector<1x1xf32>
    %532 = vector.broadcast %531 : vector<1x1xf32> to vector<16x1xf32>
    %533 = arith.mulf %529, %532 : vector<16x1xf32>
    %534 = arith.addf %530, %533 : vector<16x1xf32>
    %cst_241 = arith.constant 0.000000e+00 : f32
    %535 = vector.broadcast %cst_241 : f32 to vector<16x1xf32>
    %536 = arith.maximumf %534, %535 : vector<16x1xf32>
    %537 = math.absf %534 : vector<16x1xf32>
    %cst_242 = arith.constant 0.000000e+00 : f32
    %538 = vector.broadcast %cst_242 : f32 to vector<16x1xf32>
    %539 = arith.subf %538, %537 : vector<16x1xf32>
    %540 = math.exp %539 : vector<16x1xf32>
    %541 = math.log1p %540 : vector<16x1xf32>
    %542 = arith.addf %536, %541 : vector<16x1xf32>
    %543 = tpu.concatenate %529, %542 in 1 : vector<16x1xf32>, vector<16x1xf32> -> vector<16x2xf32>
    %c0_243 = arith.constant 0 : index
    %c0_244 = arith.constant 0 : index
    %c0_245 = arith.constant 0 : index
    %544 = vector.load %arg41[%c0_243, %c0_244, %c0_245] : memref<1x16x2xf32, #tpu.memory_space<vmem>>, vector<1x16x2xf32>
    %545 = vector.shape_cast %544 : vector<1x16x2xf32> to vector<16x2xf32>
    %546 = vector.shape_cast %543 : vector<16x2xf32> to vector<1x16x2xf32>
    tpu.vector_store %arg41[%c0_243, %c0_244, %c0_245], %546 {strides = array<i32>} : memref<1x16x2xf32, #tpu.memory_space<vmem>>, vector<1x16x2xf32>,
    return
  }
  func.func @transform_0(%arg0: i32) -> (i32, i32, i32) {
    %c0_i32 = arith.constant 0 : i32
    %c0_i32_0 = arith.constant 0 : i32
    %c0_i32_1 = arith.constant 0 : i32
    return %arg0, %c0_i32, %c0_i32_0 : i32, i32, i32
  }
  func.func @transform_1(%arg0: i32) -> (i32, i32, i32) {
    %c0_i32 = arith.constant 0 : i32
    %c0_i32_0 = arith.constant 0 : i32
    %c0_i32_1 = arith.constant 0 : i32
    return %arg0, %c0_i32, %c0_i32_0 : i32, i32, i32
  }
  func.func @transform_2(%arg0: i32) -> (i32, i32, i32) {
    %c0_i32 = arith.constant 0 : i32
    %c0_i32_0 = arith.constant 0 : i32
    %c0_i32_1 = arith.constant 0 : i32
    return %arg0, %c0_i32, %c0_i32_0 : i32, i32, i32
  }
  func.func @transform_3(%arg0: i32) -> (i32, i32, i32) {
    %c0_i32 = arith.constant 0 : i32
    %c0_i32_0 = arith.constant 0 : i32
    %c0_i32_1 = arith.constant 0 : i32
    return %arg0, %c0_i32, %c0_i32_0 : i32, i32, i32
  }
  func.func @transform_4(%arg0: i32) -> (i32, i32, i32) {
    %c0_i32 = arith.constant 0 : i32
    %c0_i32_0 = arith.constant 0 : i32
    %c0_i32_1 = arith.constant 0 : i32
    return %arg0, %c0_i32, %c0_i32_0 : i32, i32, i32
  }
  func.func @transform_5(%arg0: i32) -> (i32, i32, i32) {
    %c0_i32 = arith.constant 0 : i32
    %c0_i32_0 = arith.constant 0 : i32
    %c0_i32_1 = arith.constant 0 : i32
    return %arg0, %c0_i32, %c0_i32_0 : i32, i32, i32
  }
  func.func @transform_6(%arg0: i32) -> (i32, i32, i32) {
    %c0_i32 = arith.constant 0 : i32
    %c0_i32_0 = arith.constant 0 : i32
    %c0_i32_1 = arith.constant 0 : i32
    return %arg0, %c0_i32, %c0_i32_0 : i32, i32, i32
  }
  func.func @transform_7(%arg0: i32) -> (i32, i32, i32) {
    %c0_i32 = arith.constant 0 : i32
    %c0_i32_0 = arith.constant 0 : i32
    %c0_i32_1 = arith.constant 0 : i32
    return %arg0, %c0_i32, %c0_i32_0 : i32, i32, i32
  }
  func.func @transform_8(%arg0: i32) -> (i32, i32) {
    %c0_i32 = arith.constant 0 : i32
    %c0_i32_0 = arith.constant 0 : i32
    %c0_i32_1 = arith.constant 0 : i32
    return %c0_i32, %c0_i32_0 : i32, i32
  }
  func.func @transform_9(%arg0: i32) -> (i32, i32) {
    %c0_i32 = arith.constant 0 : i32
    %c0_i32_0 = arith.constant 0 : i32
    %c0_i32_1 = arith.constant 0 : i32
    return %c0_i32, %c0_i32_0 : i32, i32
  }
  func.func @transform_10(%arg0: i32) -> (i32, i32) {
    %c0_i32 = arith.constant 0 : i32
    %c0_i32_0 = arith.constant 0 : i32
    %c0_i32_1 = arith.constant 0 : i32
    return %c0_i32, %c0_i32_0 : i32, i32
  }
  func.func @transform_11(%arg0: i32) -> (i32, i32) {
    %c0_i32 = arith.constant 0 : i32
    %c0_i32_0 = arith.constant 0 : i32
    %c0_i32_1 = arith.constant 0 : i32
    return %c0_i32, %c0_i32_0 : i32, i32
  }
  func.func @transform_12(%arg0: i32) -> (i32, i32) {
    %c0_i32 = arith.constant 0 : i32
    %c0_i32_0 = arith.constant 0 : i32
    %c0_i32_1 = arith.constant 0 : i32
    return %c0_i32, %c0_i32_0 : i32, i32
  }
  func.func @transform_13(%arg0: i32) -> (i32, i32) {
    %c0_i32 = arith.constant 0 : i32
    %c0_i32_0 = arith.constant 0 : i32
    %c0_i32_1 = arith.constant 0 : i32
    return %c0_i32, %c0_i32_0 : i32, i32
  }
  func.func @transform_14(%arg0: i32) -> (i32, i32) {
    %c0_i32 = arith.constant 0 : i32
    %c0_i32_0 = arith.constant 0 : i32
    %c0_i32_1 = arith.constant 0 : i32
    return %c0_i32, %c0_i32_0 : i32, i32
  }
  func.func @transform_15(%arg0: i32) -> (i32, i32) {
    %c0_i32 = arith.constant 0 : i32
    %c0_i32_0 = arith.constant 0 : i32
    %c0_i32_1 = arith.constant 0 : i32
    return %c0_i32, %c0_i32_0 : i32, i32
  }
  func.func @transform_16(%arg0: i32) -> (i32, i32) {
    %c0_i32 = arith.constant 0 : i32
    %c0_i32_0 = arith.constant 0 : i32
    %c0_i32_1 = arith.constant 0 : i32
    return %c0_i32, %c0_i32_0 : i32, i32
  }
  func.func @transform_17(%arg0: i32) -> (i32, i32) {
    %c0_i32 = arith.constant 0 : i32
    %c0_i32_0 = arith.constant 0 : i32
    %c0_i32_1 = arith.constant 0 : i32
    return %c0_i32, %c0_i32_0 : i32, i32
  }
  func.func @transform_18(%arg0: i32) -> (i32, i32) {
    %c0_i32 = arith.constant 0 : i32
    %c0_i32_0 = arith.constant 0 : i32
    %c0_i32_1 = arith.constant 0 : i32
    return %c0_i32, %c0_i32_0 : i32, i32
  }
  func.func @transform_19(%arg0: i32) -> (i32, i32, i32) {
    %c0_i32 = arith.constant 0 : i32
    %c0_i32_0 = arith.constant 0 : i32
    %c0_i32_1 = arith.constant 0 : i32
    %c0_i32_2 = arith.constant 0 : i32
    return %c0_i32, %c0_i32_0, %c0_i32_1 : i32, i32, i32
  }
  func.func @transform_20(%arg0: i32) -> (i32, i32, i32) {
    %c0_i32 = arith.constant 0 : i32
    %c0_i32_0 = arith.constant 0 : i32
    %c0_i32_1 = arith.constant 0 : i32
    %c0_i32_2 = arith.constant 0 : i32
    return %c0_i32, %c0_i32_0, %c0_i32_1 : i32, i32, i32
  }
  func.func @transform_21(%arg0: i32) -> (i32, i32, i32) {
    %c0_i32 = arith.constant 0 : i32
    %c0_i32_0 = arith.constant 0 : i32
    %c0_i32_1 = arith.constant 0 : i32
    %c0_i32_2 = arith.constant 0 : i32
    return %c0_i32, %c0_i32_0, %c0_i32_1 : i32, i32, i32
  }
  func.func @transform_22(%arg0: i32) -> (i32, i32, i32) {
    %c0_i32 = arith.constant 0 : i32
    %c0_i32_0 = arith.constant 0 : i32
    %c0_i32_1 = arith.constant 0 : i32
    %c0_i32_2 = arith.constant 0 : i32
    return %c0_i32, %c0_i32_0, %c0_i32_1 : i32, i32, i32
  }
  func.func @transform_23(%arg0: i32) -> (i32, i32, i32) {
    %c0_i32 = arith.constant 0 : i32
    %c0_i32_0 = arith.constant 0 : i32
    %c0_i32_1 = arith.constant 0 : i32
    %c0_i32_2 = arith.constant 0 : i32
    return %c0_i32, %c0_i32_0, %c0_i32_1 : i32, i32, i32
  }
  func.func @transform_24(%arg0: i32) -> (i32, i32, i32) {
    %c0_i32 = arith.constant 0 : i32
    %c0_i32_0 = arith.constant 0 : i32
    %c0_i32_1 = arith.constant 0 : i32
    %c0_i32_2 = arith.constant 0 : i32
    return %c0_i32, %c0_i32_0, %c0_i32_1 : i32, i32, i32
  }
  func.func @transform_25(%arg0: i32) -> (i32, i32, i32) {
    %c0_i32 = arith.constant 0 : i32
    %c0_i32_0 = arith.constant 0 : i32
    %c0_i32_1 = arith.constant 0 : i32
    %c0_i32_2 = arith.constant 0 : i32
    return %c0_i32, %c0_i32_0, %c0_i32_1 : i32, i32, i32
  }
  func.func @transform_26(%arg0: i32) -> (i32, i32, i32) {
    %c0_i32 = arith.constant 0 : i32
    %c0_i32_0 = arith.constant 0 : i32
    %c0_i32_1 = arith.constant 0 : i32
    %c0_i32_2 = arith.constant 0 : i32
    return %c0_i32, %c0_i32_0, %c0_i32_1 : i32, i32, i32
  }
  func.func @transform_27(%arg0: i32) -> (i32, i32, i32) {
    %c0_i32 = arith.constant 0 : i32
    %c0_i32_0 = arith.constant 0 : i32
    %c0_i32_1 = arith.constant 0 : i32
    %c0_i32_2 = arith.constant 0 : i32
    return %c0_i32, %c0_i32_0, %c0_i32_1 : i32, i32, i32
  }
  func.func @transform_28(%arg0: i32) -> (i32, i32, i32) {
    %c0_i32 = arith.constant 0 : i32
    %c0_i32_0 = arith.constant 0 : i32
    %c0_i32_1 = arith.constant 0 : i32
    %c0_i32_2 = arith.constant 0 : i32
    return %c0_i32, %c0_i32_0, %c0_i32_1 : i32, i32, i32
  }
  func.func @transform_29(%arg0: i32) -> (i32, i32, i32) {
    %c0_i32 = arith.constant 0 : i32
    %c0_i32_0 = arith.constant 0 : i32
    %c0_i32_1 = arith.constant 0 : i32
    %c0_i32_2 = arith.constant 0 : i32
    return %c0_i32, %c0_i32_0, %c0_i32_1 : i32, i32, i32
  }
  func.func @transform_30(%arg0: i32) -> (i32, i32, i32) {
    %c0_i32 = arith.constant 0 : i32
    %c0_i32_0 = arith.constant 0 : i32
    %c0_i32_1 = arith.constant 0 : i32
    %c0_i32_2 = arith.constant 0 : i32
    return %c0_i32, %c0_i32_0, %c0_i32_1 : i32, i32, i32
  }
  func.func @transform_31(%arg0: i32) -> (i32, i32, i32) {
    %c0_i32 = arith.constant 0 : i32
    %c0_i32_0 = arith.constant 0 : i32
    %c0_i32_1 = arith.constant 0 : i32
    %c0_i32_2 = arith.constant 0 : i32
    return %c0_i32, %c0_i32_0, %c0_i32_1 : i32, i32, i32
  }
  func.func @transform_32(%arg0: i32) -> (i32, i32, i32) {
    %c0_i32 = arith.constant 0 : i32
    %c0_i32_0 = arith.constant 0 : i32
    %c0_i32_1 = arith.constant 0 : i32
    %c0_i32_2 = arith.constant 0 : i32
    return %c0_i32, %c0_i32_0, %c0_i32_1 : i32, i32, i32
  }
  func.func @transform_33(%arg0: i32) -> (i32, i32, i32) {
    %c0_i32 = arith.constant 0 : i32
    %c0_i32_0 = arith.constant 0 : i32
    %c0_i32_1 = arith.constant 0 : i32
    %c0_i32_2 = arith.constant 0 : i32
    return %c0_i32, %c0_i32_0, %c0_i32_1 : i32, i32, i32
  }
  func.func @transform_34(%arg0: i32) -> (i32, i32, i32) {
    %c0_i32 = arith.constant 0 : i32
    %c0_i32_0 = arith.constant 0 : i32
    %c0_i32_1 = arith.constant 0 : i32
    %c0_i32_2 = arith.constant 0 : i32
    return %c0_i32, %c0_i32_0, %c0_i32_1 : i32, i32, i32
  }
  func.func @transform_35(%arg0: i32) -> (i32, i32) {
    %c0_i32 = arith.constant 0 : i32
    %c0_i32_0 = arith.constant 0 : i32
    %c0_i32_1 = arith.constant 0 : i32
    return %c0_i32, %c0_i32_0 : i32, i32
  }
  func.func @transform_36(%arg0: i32) -> (i32, i32) {
    %c0_i32 = arith.constant 0 : i32
    %c0_i32_0 = arith.constant 0 : i32
    %c0_i32_1 = arith.constant 0 : i32
    return %c0_i32, %c0_i32_0 : i32, i32
  }
  func.func @transform_37(%arg0: i32) -> (i32, i32) {
    %c0_i32 = arith.constant 0 : i32
    %c0_i32_0 = arith.constant 0 : i32
    %c0_i32_1 = arith.constant 0 : i32
    return %c0_i32, %c0_i32_0 : i32, i32
  }
  func.func @transform_38(%arg0: i32) -> (i32, i32) {
    %c0_i32 = arith.constant 0 : i32
    %c0_i32_0 = arith.constant 0 : i32
    %c0_i32_1 = arith.constant 0 : i32
    return %c0_i32, %c0_i32_0 : i32, i32
  }
  func.func @transform_39(%arg0: i32) -> (i32, i32) {
    %c0_i32 = arith.constant 0 : i32
    %c0_i32_0 = arith.constant 0 : i32
    %c0_i32_1 = arith.constant 0 : i32
    return %c0_i32, %c0_i32_0 : i32, i32
  }
  func.func @transform_40(%arg0: i32) -> (i32, i32, i32) {
    %c0_i32 = arith.constant 0 : i32
    %c0_i32_0 = arith.constant 0 : i32
    %c0_i32_1 = arith.constant 0 : i32
    return %arg0, %c0_i32, %c0_i32_0 : i32, i32, i32
  }
}

</mosaic_0001>

<llo_original>
// kernel: get_finetune_atac_forward.1
$region0: #{get_finetune_atac_forward.1}
  #allocation0 [shape = 'u32[]', space=smem, size = 0x4, offset = 0x4, fixed_abs, tag = 'smem constant byte address 0x4 - core index']
  #allocation1 [shape = 'u32[72,128]{1,0:T(1,128)}', space=vmem, size = 0x9000, scoped, tag = 'internal scratch']
  #allocation2 [shape = 'f32[1,1]{1,0:T(1,128)S(1)}', space=vmem, size = 0x200, scoped, tag = 'scoped memory for get_finetune_atac_forward.1']
  %s0 = inlined_call_operand.smem [shape: u32[41], index: -1, kind: input, shape index: {}]
  %s1 = sld [smem:[%s0]]
  %s2 = scalar_lea.smem %s0, 1
  %s3 = sld [smem:[%s2]]
  %s4 = scalar_lea.smem %s0, 2
  %s5 = sld [smem:[%s4]]
  %s6 = scalar_lea.smem %s0, 3
  %s7 = sld [smem:[%s6]]
  %s8 = scalar_lea.smem %s0, 4
  %s9 = sld [smem:[%s8]]
  %s10 = scalar_lea.smem %s0, 5
  %s11 = sld [smem:[%s10]]
  %s12 = scalar_lea.smem %s0, 6
  %s13 = sld [smem:[%s12]]
  %s14 = scalar_lea.smem %s0, 7
  %s15 = sld [smem:[%s14]]
  %s16 = scalar_lea.smem %s0, 8
  %s17 = sld [smem:[%s16]]
  %s18 = scalar_lea.smem %s0, 9
  %s19 = sld [smem:[%s18]]
  %s20 = scalar_lea.smem %s0, 10
  %s21 = sld [smem:[%s20]]
  %s22 = scalar_lea.smem %s0, 11
  %s23 = sld [smem:[%s22]]
  %s24 = scalar_lea.smem %s0, 12
  %s25 = sld [smem:[%s24]]
  %s26 = scalar_lea.smem %s0, 13
  %s27 = sld [smem:[%s26]]
  %s28 = scalar_lea.smem %s0, 14
  %s29 = sld [smem:[%s28]]
  %s30 = scalar_lea.smem %s0, 15
  %s31 = sld [smem:[%s30]]
  %s32 = scalar_lea.smem %s0, 16
  %s33 = sld [smem:[%s32]]
  %s34 = scalar_lea.smem %s0, 17
  %s35 = sld [smem:[%s34]]
  %s36 = scalar_lea.smem %s0, 18
  %s37 = sld [smem:[%s36]]
  %s38 = scalar_lea.smem %s0, 19
  %s39 = sld [smem:[%s38]]
  %s40 = scalar_lea.smem %s0, 20
  %s41 = sld [smem:[%s40]]
  %s42 = scalar_lea.smem %s0, 21
  %s43 = sld [smem:[%s42]]
  %s44 = scalar_lea.smem %s0, 22
  %s45 = sld [smem:[%s44]]
  %s46 = scalar_lea.smem %s0, 23
  %s47 = sld [smem:[%s46]]
  %s48 = scalar_lea.smem %s0, 24
  %s49 = sld [smem:[%s48]]
  %s50 = scalar_lea.smem %s0, 25
  %s51 = sld [smem:[%s50]]
  %s52 = scalar_lea.smem %s0, 26
  %s53 = sld [smem:[%s52]]
  %s54 = scalar_lea.smem %s0, 27
  %s55 = sld [smem:[%s54]]
  %s56 = scalar_lea.smem %s0, 28
  %s57 = sld [smem:[%s56]]
  %s58 = scalar_lea.smem %s0, 29
  %s59 = sld [smem:[%s58]]
  %s60 = scalar_lea.smem %s0, 30
  %s61 = sld [smem:[%s60]]
  %s62 = scalar_lea.smem %s0, 31
  %s63 = sld [smem:[%s62]]
  %s64 = scalar_lea.smem %s0, 32
  %s65 = sld [smem:[%s64]]
  %s66 = scalar_lea.smem %s0, 33
  %s67 = sld [smem:[%s66]]
  %s68 = scalar_lea.smem %s0, 34
  %s69 = sld [smem:[%s68]]
  %s70 = scalar_lea.smem %s0, 35
  %s71 = sld [smem:[%s70]]
  %s72 = scalar_lea.smem %s0, 36
  %s73 = sld [smem:[%s72]]
  %s74 = scalar_lea.smem %s0, 37
  %s75 = sld [smem:[%s74]]
  %s76 = scalar_lea.smem %s0, 38
  %s77 = sld [smem:[%s76]]
  %s78 = scalar_lea.smem %s0, 39
  %s79 = sld [smem:[%s78]]
  %s80 = scalar_lea.smem %s0, 40
  %s81 = sld [smem:[%s80]]
  %s82 = sld [smem:[#allocation0]]
  $region170: #{get_finetune_atac_forward.1} parent=0
    _
  %s84 = ssub.s32 1, %s82
  %s85 = scalar_select 0, %s84, %s82
  %v86 = vstv %s79
  %87 = vst [vmem:[#allocation2] sm:$0x1] %v86
  // Predicated region
  $region2: #{get_finetune_atac_forward.1} parent=0 // pred_check
    _
  $region3: #{get_finetune_atac_forward.1} parent=0 // pred_check_branch
    %89 = sbr.rel (0) target = $region5
  $region4: #{get_finetune_atac_forward.1} parent=0 // pred_region
    _
  $region5: #{get_finetune_atac_forward.1} parent=0 // pred_fallthru
    _
  // Predicated region
  $region6: #{get_finetune_atac_forward.1} parent=0 // pred_check
    _
  $region7: #{get_finetune_atac_forward.1} parent=0 // pred_check_branch
    %91 = sbr.rel (0) target = $region9
  $region8: #{get_finetune_atac_forward.1} parent=0 // pred_region
    _
  $region9: #{get_finetune_atac_forward.1} parent=0 // pred_fallthru
    _
  // Predicated region
  $region10: #{get_finetune_atac_forward.1} parent=0 // pred_check
    _
  $region11: #{get_finetune_atac_forward.1} parent=0 // pred_check_branch
    %93 = sbr.rel (0) target = $region13
  $region12: #{get_finetune_atac_forward.1} parent=0 // pred_region
    _
  $region13: #{get_finetune_atac_forward.1} parent=0 // pred_fallthru
    _
  // Predicated region
  $region14: #{get_finetune_atac_forward.1} parent=0 // pred_check
    _
  $region15: #{get_finetune_atac_forward.1} parent=0 // pred_check_branch
    %95 = sbr.rel (0) target = $region17
  $region16: #{get_finetune_atac_forward.1} parent=0 // pred_region
    _
  $region17: #{get_finetune_atac_forward.1} parent=0 // pred_fallthru
    _
  // Predicated region
  $region18: #{get_finetune_atac_forward.1} parent=0 // pred_check
    _
  $region19: #{get_finetune_atac_forward.1} parent=0 // pred_check_branch
    %97 = sbr.rel (0) target = $region21
  $region20: #{get_finetune_atac_forward.1} parent=0 // pred_region
    _
  $region21: #{get_finetune_atac_forward.1} parent=0 // pred_fallthru
    _
  // Predicated region
  $region22: #{get_finetune_atac_forward.1} parent=0 // pred_check
    _
  $region23: #{get_finetune_atac_forward.1} parent=0 // pred_check_branch
    %99 = sbr.rel (0) target = $region25
  $region24: #{get_finetune_atac_forward.1} parent=0 // pred_region
    _
  $region25: #{get_finetune_atac_forward.1} parent=0 // pred_fallthru
    _
  // Predicated region
  $region26: #{get_finetune_atac_forward.1} parent=0 // pred_check
    _
  $region27: #{get_finetune_atac_forward.1} parent=0 // pred_check_branch
    %101 = sbr.rel (0) target = $region29
  $region28: #{get_finetune_atac_forward.1} parent=0 // pred_region
    _
  $region29: #{get_finetune_atac_forward.1} parent=0 // pred_fallthru
    _
  // Predicated region
  $region30: #{get_finetune_atac_forward.1} parent=0 // pred_check
    _
  $region31: #{get_finetune_atac_forward.1} parent=0 // pred_check_branch
    %103 = sbr.rel (0) target = $region33
  $region32: #{get_finetune_atac_forward.1} parent=0 // pred_region
    _
  $region33: #{get_finetune_atac_forward.1} parent=0 // pred_fallthru
    _
  // Predicated region
  $region34: #{get_finetune_atac_forward.1} parent=0 // pred_check
    _
  $region35: #{get_finetune_atac_forward.1} parent=0 // pred_check_branch
    %105 = sbr.rel (0) target = $region37
  $region36: #{get_finetune_atac_forward.1} parent=0 // pred_region
    _
  $region37: #{get_finetune_atac_forward.1} parent=0 // pred_fallthru
    _
  // Predicated region
  $region38: #{get_finetune_atac_forward.1} parent=0 // pred_check
    _
  $region39: #{get_finetune_atac_forward.1} parent=0 // pred_check_branch
    %107 = sbr.rel (0) target = $region41
  $region40: #{get_finetune_atac_forward.1} parent=0 // pred_region
    _
  $region41: #{get_finetune_atac_forward.1} parent=0 // pred_fallthru
    _
  // Predicated region
  $region42: #{get_finetune_atac_forward.1} parent=0 // pred_check
    _
  $region43: #{get_finetune_atac_forward.1} parent=0 // pred_check_branch
    %109 = sbr.rel (0) target = $region45
  $region44: #{get_finetune_atac_forward.1} parent=0 // pred_region
    _
  $region45: #{get_finetune_atac_forward.1} parent=0 // pred_fallthru
    _
  // Predicated region
  $region46: #{get_finetune_atac_forward.1} parent=0 // pred_check
    _
  $region47: #{get_finetune_atac_forward.1} parent=0 // pred_check_branch
    %111 = sbr.rel (0) target = $region49
  $region48: #{get_finetune_atac_forward.1} parent=0 // pred_region
    _
  $region49: #{get_finetune_atac_forward.1} parent=0 // pred_fallthru
    _
  // Predicated region
  $region50: #{get_finetune_atac_forward.1} parent=0 // pred_check
    _
  $region51: #{get_finetune_atac_forward.1} parent=0 // pred_check_branch
    %113 = sbr.rel (0) target = $region53
  $region52: #{get_finetune_atac_forward.1} parent=0 // pred_region
    _
  $region53: #{get_finetune_atac_forward.1} parent=0 // pred_fallthru
    _
  // Predicated region
  $region54: #{get_finetune_atac_forward.1} parent=0 // pred_check
    _
  $region55: #{get_finetune_atac_forward.1} parent=0 // pred_check_branch
    %115 = sbr.rel (0) target = $region57
  $region56: #{get_finetune_atac_forward.1} parent=0 // pred_region
    _
  $region57: #{get_finetune_atac_forward.1} parent=0 // pred_fallthru
    _
  // Predicated region
  $region58: #{get_finetune_atac_forward.1} parent=0 // pred_check
    _
  $region59: #{get_finetune_atac_forward.1} parent=0 // pred_check_branch
    %117 = sbr.rel (0) target = $region61
  $region60: #{get_finetune_atac_forward.1} parent=0 // pred_region
    _
  $region61: #{get_finetune_atac_forward.1} parent=0 // pred_fallthru
    _
  // Predicated region
  $region62: #{get_finetune_atac_forward.1} parent=0 // pred_check
    _
  $region63: #{get_finetune_atac_forward.1} parent=0 // pred_check_branch
    %119 = sbr.rel (0) target = $region65
  $region64: #{get_finetune_atac_forward.1} parent=0 // pred_region
    _
  $region65: #{get_finetune_atac_forward.1} parent=0 // pred_fallthru
    _
  // Predicated region
  $region66: #{get_finetune_atac_forward.1} parent=0 // pred_check
    _
  $region67: #{get_finetune_atac_forward.1} parent=0 // pred_check_branch
    %121 = sbr.rel (0) target = $region69
  $region68: #{get_finetune_atac_forward.1} parent=0 // pred_region
    _
  $region69: #{get_finetune_atac_forward.1} parent=0 // pred_fallthru
    _
  // Predicated region
  $region70: #{get_finetune_atac_forward.1} parent=0 // pred_check
    _
  $region71: #{get_finetune_atac_forward.1} parent=0 // pred_check_branch
    %123 = sbr.rel (0) target = $region73
  $region72: #{get_finetune_atac_forward.1} parent=0 // pred_region
    _
  $region73: #{get_finetune_atac_forward.1} parent=0 // pred_fallthru
    _
  // Predicated region
  $region74: #{get_finetune_atac_forward.1} parent=0 // pred_check
    _
  $region75: #{get_finetune_atac_forward.1} parent=0 // pred_check_branch
    %125 = sbr.rel (0) target = $region77
  $region76: #{get_finetune_atac_forward.1} parent=0 // pred_region
    _
  $region77: #{get_finetune_atac_forward.1} parent=0 // pred_fallthru
    _
  // Predicated region
  $region78: #{get_finetune_atac_forward.1} parent=0 // pred_check
    _
  $region79: #{get_finetune_atac_forward.1} parent=0 // pred_check_branch
    %127 = sbr.rel (0) target = $region81
  $region80: #{get_finetune_atac_forward.1} parent=0 // pred_region
    _
  $region81: #{get_finetune_atac_forward.1} parent=0 // pred_fallthru
    _
  // Predicated region
  $region82: #{get_finetune_atac_forward.1} parent=0 // pred_check
    _
  $region83: #{get_finetune_atac_forward.1} parent=0 // pred_check_branch
    %129 = sbr.rel (0) target = $region85
  $region84: #{get_finetune_atac_forward.1} parent=0 // pred_region
    _
  $region85: #{get_finetune_atac_forward.1} parent=0 // pred_fallthru
    _
  // Predicated region
  $region86: #{get_finetune_atac_forward.1} parent=0 // pred_check
    _
  $region87: #{get_finetune_atac_forward.1} parent=0 // pred_check_branch
    %131 = sbr.rel (0) target = $region89
  $region88: #{get_finetune_atac_forward.1} parent=0 // pred_region
    _
  $region89: #{get_finetune_atac_forward.1} parent=0 // pred_fallthru
    _
  // Predicated region
  $region90: #{get_finetune_atac_forward.1} parent=0 // pred_check
    _
  $region91: #{get_finetune_atac_forward.1} parent=0 // pred_check_branch
    %133 = sbr.rel (0) target = $region93
  $region92: #{get_finetune_atac_forward.1} parent=0 // pred_region
    _
  $region93: #{get_finetune_atac_forward.1} parent=0 // pred_fallthru
    _
  // Predicated region
  $region94: #{get_finetune_atac_forward.1} parent=0 // pred_check
    _
  $region95: #{get_finetune_atac_forward.1} parent=0 // pred_check_branch
    %135 = sbr.rel (0) target = $region97
  $region96: #{get_finetune_atac_forward.1} parent=0 // pred_region
    _
  $region97: #{get_finetune_atac_forward.1} parent=0 // pred_fallthru
    _
  // Predicated region
  $region98: #{get_finetune_atac_forward.1} parent=0 // pred_check
    _
  $region99: #{get_finetune_atac_forward.1} parent=0 // pred_check_branch
    %137 = sbr.rel (0) target = $region101
  $region100: #{get_finetune_atac_forward.1} parent=0 // pred_region
    _
  $region101: #{get_finetune_atac_forward.1} parent=0 // pred_fallthru
    _
  // Predicated region
  $region102: #{get_finetune_atac_forward.1} parent=0 // pred_check
    _
  $region103: #{get_finetune_atac_forward.1} parent=0 // pred_check_branch
    %139 = sbr.rel (0) target = $region105
  $region104: #{get_finetune_atac_forward.1} parent=0 // pred_region
    _
  $region105: #{get_finetune_atac_forward.1} parent=0 // pred_fallthru
    _
  // Predicated region
  $region106: #{get_finetune_atac_forward.1} parent=0 // pred_check
    _
  $region107: #{get_finetune_atac_forward.1} parent=0 // pred_check_branch
    %141 = sbr.rel (0) target = $region109
  $region108: #{get_finetune_atac_forward.1} parent=0 // pred_region
    _
  $region109: #{get_finetune_atac_forward.1} parent=0 // pred_fallthru
    _
  // Predicated region
  $region110: #{get_finetune_atac_forward.1} parent=0 // pred_check
    _
  $region111: #{get_finetune_atac_forward.1} parent=0 // pred_check_branch
    %143 = sbr.rel (0) target = $region113
  $region112: #{get_finetune_atac_forward.1} parent=0 // pred_region
    _
  $region113: #{get_finetune_atac_forward.1} parent=0 // pred_fallthru
    _
  // Predicated region
  $region114: #{get_finetune_atac_forward.1} parent=0 // pred_check
    _
  $region115: #{get_finetune_atac_forward.1} parent=0 // pred_check_branch
    %145 = sbr.rel (0) target = $region117
  $region116: #{get_finetune_atac_forward.1} parent=0 // pred_region
    _
  $region117: #{get_finetune_atac_forward.1} parent=0 // pred_fallthru
    _
  // Predicated region
  $region118: #{get_finetune_atac_forward.1} parent=0 // pred_check
    _
  $region119: #{get_finetune_atac_forward.1} parent=0 // pred_check_branch
    %147 = sbr.rel (0) target = $region121
  $region120: #{get_finetune_atac_forward.1} parent=0 // pred_region
    _
  $region121: #{get_finetune_atac_forward.1} parent=0 // pred_fallthru
    _
  // Predicated region
  $region122: #{get_finetune_atac_forward.1} parent=0 // pred_check
    _
  $region123: #{get_finetune_atac_forward.1} parent=0 // pred_check_branch
    %149 = sbr.rel (0) target = $region125
  $region124: #{get_finetune_atac_forward.1} parent=0 // pred_region
    _
  $region125: #{get_finetune_atac_forward.1} parent=0 // pred_fallthru
    _
  // Predicated region
  $region126: #{get_finetune_atac_forward.1} parent=0 // pred_check
    _
  $region127: #{get_finetune_atac_forward.1} parent=0 // pred_check_branch
    %151 = sbr.rel (0) target = $region129
  $region128: #{get_finetune_atac_forward.1} parent=0 // pred_region
    _
  $region129: #{get_finetune_atac_forward.1} parent=0 // pred_fallthru
    _
  // Predicated region
  $region130: #{get_finetune_atac_forward.1} parent=0 // pred_check
    _
  $region131: #{get_finetune_atac_forward.1} parent=0 // pred_check_branch
    %153 = sbr.rel (0) target = $region133
  $region132: #{get_finetune_atac_forward.1} parent=0 // pred_region
    _
  $region133: #{get_finetune_atac_forward.1} parent=0 // pred_fallthru
    _
  // Predicated region
  $region134: #{get_finetune_atac_forward.1} parent=0 // pred_check
    _
  $region135: #{get_finetune_atac_forward.1} parent=0 // pred_check_branch
    %155 = sbr.rel (0) target = $region137
  $region136: #{get_finetune_atac_forward.1} parent=0 // pred_region
    _
  $region137: #{get_finetune_atac_forward.1} parent=0 // pred_fallthru
    _
  // Predicated region
  $region138: #{get_finetune_atac_forward.1} parent=0 // pred_check
    _
  $region139: #{get_finetune_atac_forward.1} parent=0 // pred_check_branch
    %157 = sbr.rel (0) target = $region141
  $region140: #{get_finetune_atac_forward.1} parent=0 // pred_region
    _
  $region141: #{get_finetune_atac_forward.1} parent=0 // pred_fallthru
    _
  // Predicated region
  $region142: #{get_finetune_atac_forward.1} parent=0 // pred_check
    _
  $region143: #{get_finetune_atac_forward.1} parent=0 // pred_check_branch
    %159 = sbr.rel (0) target = $region145
  $region144: #{get_finetune_atac_forward.1} parent=0 // pred_region
    _
  $region145: #{get_finetune_atac_forward.1} parent=0 // pred_fallthru
    _
  // Predicated region
  $region146: #{get_finetune_atac_forward.1} parent=0 // pred_check
    _
  $region147: #{get_finetune_atac_forward.1} parent=0 // pred_check_branch
    %161 = sbr.rel (0) target = $region149
  $region148: #{get_finetune_atac_forward.1} parent=0 // pred_region
    _
  $region149: #{get_finetune_atac_forward.1} parent=0 // pred_fallthru
    _
  // Predicated region
  $region150: #{get_finetune_atac_forward.1} parent=0 // pred_check
    _
  $region151: #{get_finetune_atac_forward.1} parent=0 // pred_check_branch
    %163 = sbr.rel (0) target = $region153
  $region152: #{get_finetune_atac_forward.1} parent=0 // pred_region
    _
  $region153: #{get_finetune_atac_forward.1} parent=0 // pred_fallthru
    _
  // Predicated region
  $region154: #{get_finetune_atac_forward.1} parent=0 // pred_check
    _
  $region155: #{get_finetune_atac_forward.1} parent=0 // pred_check_branch
    %165 = sbr.rel (0) target = $region157
  $region156: #{get_finetune_atac_forward.1} parent=0 // pred_region
    _
  $region157: #{get_finetune_atac_forward.1} parent=0 // pred_fallthru
    _
  // Predicated region
  $region158: #{get_finetune_atac_forward.1} parent=0 // pred_check
    _
  $region159: #{get_finetune_atac_forward.1} parent=0 // pred_check_branch
    %167 = sbr.rel (0) target = $region161
  $region160: #{get_finetune_atac_forward.1} parent=0 // pred_region
    _
  $region161: #{get_finetune_atac_forward.1} parent=0 // pred_fallthru
    _
  %v169 = vld [vmem:[%s1] sm:$0xff]
  %v170 = vld [vmem:[%s1 + $0x8] sm:$0xff]
  %v171 = vld [vmem:[%s1 + $0x10] sm:$0xff]
  %v172 = vld [vmem:[%s1 + $0x18] sm:$0xff]
  %v173 = vld [vmem:[%s1 + $0x20] sm:$0xff]
  %v174 = vld [vmem:[%s1 + $0x28] sm:$0xff]
  %v175 = vld [vmem:[%s1 + $0x30] sm:$0xff]
  %v176 = vld [vmem:[%s1 + $0x38] sm:$0xff]
  %v177 = vld [vmem:[%s1 + $0x40] sm:$0xff]
  %v178 = vld [vmem:[%s1 + $0x48] sm:$0xff]
  %v179 = vld [vmem:[%s1 + $0x50] sm:$0xff]
  %v180 = vld [vmem:[%s1 + $0x58] sm:$0xff]
  %v181 = vld [vmem:[%s1 + $0x60] sm:$0xff]
  %v182 = vld [vmem:[%s1 + $0x68] sm:$0xff]
  %v183 = vld [vmem:[%s1 + $0x70] sm:$0xff]
  %v184 = vld [vmem:[%s1 + $0x78] sm:$0xff]
  %v185 = vpack.c.bf16 %v170, %v169
  %v186 = vpack.c.bf16 %v172, %v171
  %v187 = vpack.c.bf16 %v174, %v173
  %v188 = vpack.c.bf16 %v176, %v175
  %v189 = vpack.c.bf16 %v178, %v177
  %v190 = vpack.c.bf16 %v180, %v179
  %v191 = vpack.c.bf16 %v182, %v181
  %v192 = vpack.c.bf16 %v184, %v183
  %v193 = vld [vmem:[%s21] sm:$0xf]
  %v194 = vld [vmem:[%s21 + $0x4] sm:$0xf]
  %v195 = vld [vmem:[%s21 + $0x8] sm:$0x3]
  %v196 = vld [vmem:[%s23] sm:$0x1]
  %v198 = vperm.slane %v196, 0
  %v203 = vunpack.c.l.b16 %v193
  %v204 = vunpack.c.l.b16 %v194
  %v205 = vunpack.c.l.b16 %v195
  %v206 = vpack.c.b16 %v204, %v203
  %v207 = vpack.c.b16 %v205, %v205
  %vm209 = vcmask 162816
  %v211 = vsel %vm209, %v185, 0
  %v214 = vsel %vm209, %v186, 0
  %v217 = vsel %vm209, %v187, 0
  %v220 = vsel %vm209, %v188, 0
  %v223 = vsel %vm209, %v189, 0
  %v226 = vsel %vm209, %v190, 0
  %v229 = vsel %vm209, %v191, 0
  %v232 = vsel %vm209, %v192, 0
  %vm234 = vcmask 1041408
  %v236 = vsel %vm234, %v207, 0
  %238 = vmatpush.bf16.msra.mxu0 0
  %239 = vmatpush.bf16.msra.mxu0 0
  %240 = vmatpush.bf16.msra.mxu0 0
  %241 = vmatpush.bf16.msra.mxu0 0
  %242 = vmatpush.bf16.msra.mxu0 0
  %243 = vmatpush.bf16.msra.mxu0 0
  %244 = vmatpush.bf16.msra.mxu0 %v236
  %245 = vmatpush.bf16.msra.mxu0 %v206
  %246 = vmatmul.bf16.gmra.mxu0 %v211
  %v247 = vpop.f32.mrf.mxu0
  %v248 = vadd.f32 %v198, %v247
  %v249 = vpop.f32.mrf.mxu0
  %v250 = vadd.f32 %v198, %v249
  %251 = vmatmul.bf16.gmra.mxu0 %v214
  %v252 = vpop.f32.mrf.mxu0
  %v253 = vadd.f32 %v198, %v252
  %v254 = vpop.f32.mrf.mxu0
  %v255 = vadd.f32 %v198, %v254
  %256 = vmatmul.bf16.gmra.mxu0 %v217
  %v257 = vpop.f32.mrf.mxu0
  %v258 = vadd.f32 %v198, %v257
  %v259 = vpop.f32.mrf.mxu0
  %v260 = vadd.f32 %v198, %v259
  %261 = vmatmul.bf16.gmra.mxu0 %v220
  %v262 = vpop.f32.mrf.mxu0
  %v263 = vadd.f32 %v198, %v262
  %v264 = vpop.f32.mrf.mxu0
  %v265 = vadd.f32 %v198, %v264
  %266 = vmatmul.bf16.gmra.mxu0 %v223
  %v267 = vpop.f32.mrf.mxu0
  %v268 = vadd.f32 %v198, %v267
  %v269 = vpop.f32.mrf.mxu0
  %v270 = vadd.f32 %v198, %v269
  %271 = vmatmul.bf16.gmra.mxu0 %v226
  %v272 = vpop.f32.mrf.mxu0
  %v273 = vadd.f32 %v198, %v272
  %v274 = vpop.f32.mrf.mxu0
  %v275 = vadd.f32 %v198, %v274
  %276 = vmatmul.bf16.gmra.mxu0 %v229
  %v277 = vpop.f32.mrf.mxu0
  %v278 = vadd.f32 %v198, %v277
  %v279 = vpop.f32.mrf.mxu0
  %v280 = vadd.f32 %v198, %v279
  %281 = vmatmul.bf16.gmra.mxu0 %v232
  %v282 = vpop.f32.mrf.mxu0
  %v283 = vadd.f32 %v198, %v282
  %v284 = vpop.f32.mrf.mxu0
  %v285 = vadd.f32 %v198, %v284
  %286 = vdwg.mxu0
  %v287 = vld [vmem:[%s5] sm:$0xff]
  %v288 = vld [vmem:[%s5 + $0x8] sm:$0xff]
  %v289 = vld [vmem:[%s5 + $0x10] sm:$0xff]
  %v290 = vld [vmem:[%s5 + $0x18] sm:$0xff]
  %v291 = vld [vmem:[%s5 + $0x20] sm:$0xff]
  %v292 = vld [vmem:[%s5 + $0x28] sm:$0xff]
  %v293 = vld [vmem:[%s5 + $0x30] sm:$0xff]
  %v294 = vld [vmem:[%s5 + $0x38] sm:$0xff]
  %v295 = vld [vmem:[%s5 + $0x40] sm:$0xff]
  %v296 = vld [vmem:[%s5 + $0x48] sm:$0xff]
  %v297 = vld [vmem:[%s5 + $0x50] sm:$0xff]
  %v298 = vld [vmem:[%s5 + $0x58] sm:$0xff]
  %v299 = vld [vmem:[%s5 + $0x60] sm:$0xff]
  %v300 = vld [vmem:[%s5 + $0x68] sm:$0xff]
  %v301 = vld [vmem:[%s5 + $0x70] sm:$0xff]
  %v302 = vld [vmem:[%s5 + $0x78] sm:$0xff]
  %v303 = vsub.f32 %v248, %v287
  %v304 = vsub.f32 %v250, %v288
  %v305 = vsub.f32 %v253, %v289
  %v306 = vsub.f32 %v255, %v290
  %v307 = vsub.f32 %v258, %v291
  %v308 = vsub.f32 %v260, %v292
  %v309 = vsub.f32 %v263, %v293
  %v310 = vsub.f32 %v265, %v294
  %v311 = vsub.f32 %v268, %v295
  %v312 = vsub.f32 %v270, %v296
  %v313 = vsub.f32 %v273, %v297
  %v314 = vsub.f32 %v275, %v298
  %v315 = vsub.f32 %v278, %v299
  %v316 = vsub.f32 %v280, %v300
  %v317 = vsub.f32 %v283, %v301
  %v318 = vsub.f32 %v285, %v302
  %v319 = vld [vmem:[%s7] sm:$0xff]
  %v320 = vld [vmem:[%s7 + $0x8] sm:$0xff]
  %v321 = vld [vmem:[%s7 + $0x10] sm:$0xff]
  %v322 = vld [vmem:[%s7 + $0x18] sm:$0xff]
  %v323 = vld [vmem:[%s7 + $0x20] sm:$0xff]
  %v324 = vld [vmem:[%s7 + $0x28] sm:$0xff]
  %v325 = vld [vmem:[%s7 + $0x30] sm:$0xff]
  %v326 = vld [vmem:[%s7 + $0x38] sm:$0xff]
  %v327 = vld [vmem:[%s7 + $0x40] sm:$0xff]
  %v328 = vld [vmem:[%s7 + $0x48] sm:$0xff]
  %v329 = vld [vmem:[%s7 + $0x50] sm:$0xff]
  %v330 = vld [vmem:[%s7 + $0x58] sm:$0xff]
  %v331 = vld [vmem:[%s7 + $0x60] sm:$0xff]
  %v332 = vld [vmem:[%s7 + $0x68] sm:$0xff]
  %v333 = vld [vmem:[%s7 + $0x70] sm:$0xff]
  %v334 = vld [vmem:[%s7 + $0x78] sm:$0xff]
  %v335 = vmul.f32 %v303, %v319
  %v336 = vmul.f32 %v304, %v320
  %v337 = vmul.f32 %v305, %v321
  %v338 = vmul.f32 %v306, %v322
  %v339 = vmul.f32 %v307, %v323
  %v340 = vmul.f32 %v308, %v324
  %v341 = vmul.f32 %v309, %v325
  %v342 = vmul.f32 %v310, %v326
  %v343 = vmul.f32 %v311, %v327
  %v344 = vmul.f32 %v312, %v328
  %v345 = vmul.f32 %v313, %v329
  %v346 = vmul.f32 %v314, %v330
  %v347 = vmul.f32 %v315, %v331
  %v348 = vmul.f32 %v316, %v332
  %v349 = vmul.f32 %v317, %v333
  %v350 = vmul.f32 %v318, %v334
  %v351 = vmax.f32 %v335, 0.0
  %v352 = vmax.f32 %v336, 0.0
  %v353 = vmax.f32 %v337, 0.0
  %v354 = vmax.f32 %v338, 0.0
  %v355 = vmax.f32 %v339, 0.0
  %v356 = vmax.f32 %v340, 0.0
  %v357 = vmax.f32 %v341, 0.0
  %v358 = vmax.f32 %v342, 0.0
  %v359 = vmax.f32 %v343, 0.0
  %v360 = vmax.f32 %v344, 0.0
  %v361 = vmax.f32 %v345, 0.0
  %v362 = vmax.f32 %v346, 0.0
  %v363 = vmax.f32 %v347, 0.0
  %v364 = vmax.f32 %v348, 0.0
  %v365 = vmax.f32 %v349, 0.0
  %v366 = vmax.f32 %v350, 0.0
  %v367 = vld [vmem:[%s3] sm:$0xff]
  %v368 = vld [vmem:[%s3 + $0x8] sm:$0xff]
  %v369 = vld [vmem:[%s3 + $0x10] sm:$0xff]
  %v370 = vld [vmem:[%s3 + $0x18] sm:$0xff]
  %v371 = vld [vmem:[%s3 + $0x20] sm:$0xff]
  %v372 = vld [vmem:[%s3 + $0x28] sm:$0xff]
  %v373 = vld [vmem:[%s3 + $0x30] sm:$0xff]
  %v374 = vld [vmem:[%s3 + $0x38] sm:$0xff]
  %v375 = vld [vmem:[%s3 + $0x40] sm:$0xff]
  %v376 = vld [vmem:[%s3 + $0x48] sm:$0xff]
  %v377 = vld [vmem:[%s3 + $0x50] sm:$0xff]
  %v378 = vld [vmem:[%s3 + $0x58] sm:$0xff]
  %v379 = vld [vmem:[%s3 + $0x60] sm:$0xff]
  %v380 = vld [vmem:[%s3 + $0x68] sm:$0xff]
  %v381 = vld [vmem:[%s3 + $0x70] sm:$0xff]
  %v382 = vld [vmem:[%s3 + $0x78] sm:$0xff]
  %v383 = vpack.c.bf16 %v368, %v367
  %v384 = vpack.c.bf16 %v370, %v369
  %v385 = vpack.c.bf16 %v372, %v371
  %v386 = vpack.c.bf16 %v374, %v373
  %v387 = vpack.c.bf16 %v376, %v375
  %v388 = vpack.c.bf16 %v378, %v377
  %v389 = vpack.c.bf16 %v380, %v379
  %v390 = vpack.c.bf16 %v382, %v381
  %v391 = vld [vmem:[%s25] sm:$0x3]
  %v392 = vld [vmem:[%s27] sm:$0x1]
  %v394 = vperm.slane %v392, 0
  %vm396 = vcmask 23552
  %v398 = vsel %vm396, %v383, 0
  %v401 = vsel %vm396, %v384, 0
  %v404 = vsel %vm396, %v385, 0
  %v407 = vsel %vm396, %v386, 0
  %v410 = vsel %vm396, %v387, 0
  %v413 = vsel %vm396, %v388, 0
  %v416 = vsel %vm396, %v389, 0
  %v419 = vsel %vm396, %v390, 0
  %vm421 = vcmask 1040384
  %v422 = vsel %vm421, 4294967295, 65535
  %v423 = vsel %vm234, %v422, 0
  %v425 = vand.u32 %v391, %v423
  %427 = vmatpush.bf16.msra.mxu0 0
  %428 = vmatpush.bf16.msra.mxu0 0
  %429 = vmatpush.bf16.msra.mxu0 0
  %430 = vmatpush.bf16.msra.mxu0 0
  %431 = vmatpush.bf16.msra.mxu0 0
  %432 = vmatpush.bf16.msra.mxu0 0
  %433 = vmatpush.bf16.msra.mxu0 0
  %434 = vmatpush.bf16.msra.mxu0 %v425
  %435 = vmatmul.bf16.gmra.mxu0 %v398
  %v436 = vpop.f32.mrf.mxu0
  %v437 = vadd.f32 %v394, %v436
  %v438 = vpop.f32.mrf.mxu0
  %v439 = vadd.f32 %v394, %v438
  %440 = vmatmul.bf16.gmra.mxu0 %v401
  %v441 = vpop.f32.mrf.mxu0
  %v442 = vadd.f32 %v394, %v441
  %v443 = vpop.f32.mrf.mxu0
  %v444 = vadd.f32 %v394, %v443
  %445 = vmatmul.bf16.gmra.mxu0 %v404
  %v446 = vpop.f32.mrf.mxu0
  %v447 = vadd.f32 %v394, %v446
  %v448 = vpop.f32.mrf.mxu0
  %v449 = vadd.f32 %v394, %v448
  %450 = vmatmul.bf16.gmra.mxu0 %v407
  %v451 = vpop.f32.mrf.mxu0
  %v452 = vadd.f32 %v394, %v451
  %v453 = vpop.f32.mrf.mxu0
  %v454 = vadd.f32 %v394, %v453
  %455 = vmatmul.bf16.gmra.mxu0 %v410
  %v456 = vpop.f32.mrf.mxu0
  %v457 = vadd.f32 %v394, %v456
  %v458 = vpop.f32.mrf.mxu0
  %v459 = vadd.f32 %v394, %v458
  %460 = vmatmul.bf16.gmra.mxu0 %v413
  %v461 = vpop.f32.mrf.mxu0
  %v462 = vadd.f32 %v394, %v461
  %v463 = vpop.f32.mrf.mxu0
  %v464 = vadd.f32 %v394, %v463
  %465 = vmatmul.bf16.gmra.mxu0 %v416
  %v466 = vpop.f32.mrf.mxu0
  %v467 = vadd.f32 %v394, %v466
  %v468 = vpop.f32.mrf.mxu0
  %v469 = vadd.f32 %v394, %v468
  %470 = vmatmul.bf16.gmra.mxu0 %v419
  %v471 = vpop.f32.mrf.mxu0
  %v472 = vadd.f32 %v394, %v471
  %v473 = vpop.f32.mrf.mxu0
  %v474 = vadd.f32 %v394, %v473
  %475 = vdwg.mxu0
  %492 = vrot.lane.b32.xlu0 %v437, 8
  %v493 = vpop.permute.xlu0 %492
  %494 = vrot.lane.b32.xlu0 %v439, 8
  %v495 = vpop.permute.xlu0 %494
  %496 = vrot.lane.b32.xlu0 %v442, 8
  %v497 = vpop.permute.xlu0 %496
  %498 = vrot.lane.b32.xlu0 %v444, 8
  %v499 = vpop.permute.xlu0 %498
  %500 = vrot.lane.b32.xlu0 %v447, 8
  %v501 = vpop.permute.xlu0 %500
  %502 = vrot.lane.b32.xlu0 %v449, 8
  %v503 = vpop.permute.xlu0 %502
  %504 = vrot.lane.b32.xlu0 %v452, 8
  %v505 = vpop.permute.xlu0 %504
  %506 = vrot.lane.b32.xlu0 %v454, 8
  %v507 = vpop.permute.xlu0 %506
  %508 = vrot.lane.b32.xlu0 %v457, 8
  %v509 = vpop.permute.xlu0 %508
  %510 = vrot.lane.b32.xlu0 %v459, 8
  %v511 = vpop.permute.xlu0 %510
  %512 = vrot.lane.b32.xlu0 %v462, 8
  %v513 = vpop.permute.xlu0 %512
  %514 = vrot.lane.b32.xlu0 %v464, 8
  %v515 = vpop.permute.xlu0 %514
  %516 = vrot.lane.b32.xlu0 %v467, 8
  %v517 = vpop.permute.xlu0 %516
  %518 = vrot.lane.b32.xlu0 %v469, 8
  %v519 = vpop.permute.xlu0 %518
  %520 = vrot.lane.b32.xlu0 %v472, 8
  %v521 = vpop.permute.xlu0 %520
  %522 = vrot.lane.b32.xlu0 %v474, 8
  %v523 = vpop.permute.xlu0 %522
  %vm540 = vcmask 64512
  %v541 = vsel %vm540, %v351, %v493
  %v542 = vsel %vm540, %v352, %v495
  %v543 = vsel %vm540, %v353, %v497
  %v544 = vsel %vm540, %v354, %v499
  %v545 = vsel %vm540, %v355, %v501
  %v546 = vsel %vm540, %v356, %v503
  %v547 = vsel %vm540, %v357, %v505
  %v548 = vsel %vm540, %v358, %v507
  %v549 = vsel %vm540, %v359, %v509
  %v550 = vsel %vm540, %v360, %v511
  %v551 = vsel %vm540, %v361, %v513
  %v552 = vsel %vm540, %v362, %v515
  %v553 = vsel %vm540, %v363, %v517
  %v554 = vsel %vm540, %v364, %v519
  %v555 = vsel %vm540, %v365, %v521
  %v556 = vsel %vm540, %v366, %v523
  %v573 = vrot.slane %v541, 7
  %v574 = vrot.slane %v542, 7
  %v575 = vsel %vm421, %v573, %v574
  %v576 = vrot.slane %v543, 7
  %v577 = vsel %vm421, %v574, %v576
  %v578 = vrot.slane %v544, 7
  %v579 = vsel %vm421, %v576, %v578
  %v580 = vrot.slane %v545, 7
  %v581 = vsel %vm421, %v578, %v580
  %v582 = vrot.slane %v546, 7
  %v583 = vsel %vm421, %v580, %v582
  %v584 = vrot.slane %v547, 7
  %v585 = vsel %vm421, %v582, %v584
  %v586 = vrot.slane %v548, 7
  %v587 = vsel %vm421, %v584, %v586
  %v588 = vrot.slane %v549, 7
  %v589 = vsel %vm421, %v586, %v588
  %v590 = vrot.slane %v550, 7
  %v591 = vsel %vm421, %v588, %v590
  %v592 = vrot.slane %v551, 7
  %v593 = vsel %vm421, %v590, %v592
  %v594 = vrot.slane %v552, 7
  %v595 = vsel %vm421, %v592, %v594
  %v596 = vrot.slane %v553, 7
  %v597 = vsel %vm421, %v594, %v596
  %v598 = vrot.slane %v554, 7
  %v599 = vsel %vm421, %v596, %v598
  %v600 = vrot.slane %v555, 7
  %v601 = vsel %vm421, %v598, %v600
  %v602 = vrot.slane %v556, 7
  %v603 = vsel %vm421, %v600, %v602
  %v620 = vsel %vm421, 0.0, %v573
  %v621 = vld [vmem:[%s17] sm:$0xff]
  %v622 = vld [vmem:[%s17 + $0x8] sm:$0xff]
  %v623 = vld [vmem:[%s17 + $0x10] sm:$0xff]
  %v624 = vld [vmem:[%s17 + $0x18] sm:$0xff]
  %v625 = vld [vmem:[%s17 + $0x20] sm:$0xff]
  %v626 = vld [vmem:[%s17 + $0x28] sm:$0xff]
  %v627 = vld [vmem:[%s17 + $0x30] sm:$0xff]
  %v628 = vld [vmem:[%s17 + $0x38] sm:$0xff]
  %v629 = vld [vmem:[%s17 + $0x40] sm:$0xff]
  %v630 = vld [vmem:[%s17 + $0x48] sm:$0xff]
  %v631 = vld [vmem:[%s17 + $0x50] sm:$0xff]
  %v632 = vld [vmem:[%s17 + $0x58] sm:$0xff]
  %v633 = vld [vmem:[%s17 + $0x60] sm:$0xff]
  %v634 = vld [vmem:[%s17 + $0x68] sm:$0xff]
  %v635 = vld [vmem:[%s17 + $0x70] sm:$0xff]
  %v636 = vld [vmem:[%s17 + $0x78] sm:$0xff]
  %638 = vset.pattern.permute.xlu0 0
  %639 = vperm.xlu0 %638, %v621
  %v640 = vpop.permute.xlu0 %639
  %643 = vset.pattern.permute.xlu0 0
  %644 = vperm.xlu0 %643, %v622
  %v645 = vpop.permute.xlu0 %644
  %648 = vset.pattern.permute.xlu0 0
  %649 = vperm.xlu0 %648, %v623
  %v650 = vpop.permute.xlu0 %649
  %653 = vset.pattern.permute.xlu0 0
  %654 = vperm.xlu0 %653, %v624
  %v655 = vpop.permute.xlu0 %654
  %658 = vset.pattern.permute.xlu0 0
  %659 = vperm.xlu0 %658, %v625
  %v660 = vpop.permute.xlu0 %659
  %663 = vset.pattern.permute.xlu0 0
  %664 = vperm.xlu0 %663, %v626
  %v665 = vpop.permute.xlu0 %664
  %668 = vset.pattern.permute.xlu0 0
  %669 = vperm.xlu0 %668, %v627
  %v670 = vpop.permute.xlu0 %669
  %673 = vset.pattern.permute.xlu0 0
  %674 = vperm.xlu0 %673, %v628
  %v675 = vpop.permute.xlu0 %674
  %678 = vset.pattern.permute.xlu0 0
  %679 = vperm.xlu0 %678, %v629
  %v680 = vpop.permute.xlu0 %679
  %683 = vset.pattern.permute.xlu0 0
  %684 = vperm.xlu0 %683, %v630
  %v685 = vpop.permute.xlu0 %684
  %688 = vset.pattern.permute.xlu0 0
  %689 = vperm.xlu0 %688, %v631
  %v690 = vpop.permute.xlu0 %689
  %693 = vset.pattern.permute.xlu0 0
  %694 = vperm.xlu0 %693, %v632
  %v695 = vpop.permute.xlu0 %694
  %698 = vset.pattern.permute.xlu0 0
  %699 = vperm.xlu0 %698, %v633
  %v700 = vpop.permute.xlu0 %699
  %703 = vset.pattern.permute.xlu0 0
  %704 = vperm.xlu0 %703, %v634
  %v705 = vpop.permute.xlu0 %704
  %708 = vset.pattern.permute.xlu0 0
  %709 = vperm.xlu0 %708, %v635
  %v710 = vpop.permute.xlu0 %709
  %713 = vset.pattern.permute.xlu0 0
  %714 = vperm.xlu0 %713, %v636
  %v715 = vpop.permute.xlu0 %714
  %v717 = vmul.f32 %v620, %v640
  %v718 = vmul.f32 %v575, %v645
  %v719 = vmul.f32 %v577, %v650
  %v720 = vmul.f32 %v579, %v655
  %v721 = vmul.f32 %v581, %v660
  %v722 = vmul.f32 %v583, %v665
  %v723 = vmul.f32 %v585, %v670
  %v724 = vmul.f32 %v587, %v675
  %v725 = vmul.f32 %v589, %v680
  %v726 = vmul.f32 %v591, %v685
  %v727 = vmul.f32 %v593, %v690
  %v728 = vmul.f32 %v595, %v695
  %v729 = vmul.f32 %v597, %v700
  %v730 = vmul.f32 %v599, %v705
  %v731 = vmul.f32 %v601, %v710
  %v732 = vmul.f32 %v603, %v715
  %vm733 = vcmask 1046528
  %v734 = vrot.slane %v541, 1
  %v735 = vrot.slane %v542, 1
  %v736 = vsel %vm733, %v734, %v735
  %v737 = vrot.slane %v543, 1
  %v738 = vsel %vm733, %v735, %v737
  %v739 = vrot.slane %v544, 1
  %v740 = vsel %vm733, %v737, %v739
  %v741 = vrot.slane %v545, 1
  %v742 = vsel %vm733, %v739, %v741
  %v743 = vrot.slane %v546, 1
  %v744 = vsel %vm733, %v741, %v743
  %v745 = vrot.slane %v547, 1
  %v746 = vsel %vm733, %v743, %v745
  %v747 = vrot.slane %v548, 1
  %v748 = vsel %vm733, %v745, %v747
  %v749 = vrot.slane %v549, 1
  %v750 = vsel %vm733, %v747, %v749
  %v751 = vrot.slane %v550, 1
  %v752 = vsel %vm733, %v749, %v751
  %v753 = vrot.slane %v551, 1
  %v754 = vsel %vm733, %v751, %v753
  %v755 = vrot.slane %v552, 1
  %v756 = vsel %vm733, %v753, %v755
  %v757 = vrot.slane %v553, 1
  %v758 = vsel %vm733, %v755, %v757
  %v759 = vrot.slane %v554, 1
  %v760 = vsel %vm733, %v757, %v759
  %v761 = vrot.slane %v555, 1
  %v762 = vsel %vm733, %v759, %v761
  %v763 = vrot.slane %v556, 1
  %v764 = vsel %vm733, %v761, %v763
  %v781 = vsel %vm733, %v763, 0.0
  %v782 = vld [vmem:[%s19] sm:$0xff]
  %v783 = vld [vmem:[%s19 + $0x8] sm:$0xff]
  %v784 = vld [vmem:[%s19 + $0x10] sm:$0xff]
  %v785 = vld [vmem:[%s19 + $0x18] sm:$0xff]
  %v786 = vld [vmem:[%s19 + $0x20] sm:$0xff]
  %v787 = vld [vmem:[%s19 + $0x28] sm:$0xff]
  %v788 = vld [vmem:[%s19 + $0x30] sm:$0xff]
  %v789 = vld [vmem:[%s19 + $0x38] sm:$0xff]
  %v790 = vld [vmem:[%s19 + $0x40] sm:$0xff]
  %v791 = vld [vmem:[%s19 + $0x48] sm:$0xff]
  %v792 = vld [vmem:[%s19 + $0x50] sm:$0xff]
  %v793 = vld [vmem:[%s19 + $0x58] sm:$0xff]
  %v794 = vld [vmem:[%s19 + $0x60] sm:$0xff]
  %v795 = vld [vmem:[%s19 + $0x68] sm:$0xff]
  %v796 = vld [vmem:[%s19 + $0x70] sm:$0xff]
  %v797 = vld [vmem:[%s19 + $0x78] sm:$0xff]
  %799 = vset.pattern.permute.xlu0 0
  %800 = vperm.xlu0 %799, %v782
  %v801 = vpop.permute.xlu0 %800
  %804 = vset.pattern.permute.xlu0 0
  %805 = vperm.xlu0 %804, %v783
  %v806 = vpop.permute.xlu0 %805
  %809 = vset.pattern.permute.xlu0 0
  %810 = vperm.xlu0 %809, %v784
  %v811 = vpop.permute.xlu0 %810
  %814 = vset.pattern.permute.xlu0 0
  %815 = vperm.xlu0 %814, %v785
  %v816 = vpop.permute.xlu0 %815
  %819 = vset.pattern.permute.xlu0 0
  %820 = vperm.xlu0 %819, %v786
  %v821 = vpop.permute.xlu0 %820
  %824 = vset.pattern.permute.xlu0 0
  %825 = vperm.xlu0 %824, %v787
  %v826 = vpop.permute.xlu0 %825
  %829 = vset.pattern.permute.xlu0 0
  %830 = vperm.xlu0 %829, %v788
  %v831 = vpop.permute.xlu0 %830
  %834 = vset.pattern.permute.xlu0 0
  %835 = vperm.xlu0 %834, %v789
  %v836 = vpop.permute.xlu0 %835
  %839 = vset.pattern.permute.xlu0 0
  %840 = vperm.xlu0 %839, %v790
  %v841 = vpop.permute.xlu0 %840
  %844 = vset.pattern.permute.xlu0 0
  %845 = vperm.xlu0 %844, %v791
  %v846 = vpop.permute.xlu0 %845
  %849 = vset.pattern.permute.xlu0 0
  %850 = vperm.xlu0 %849, %v792
  %v851 = vpop.permute.xlu0 %850
  %854 = vset.pattern.permute.xlu0 0
  %855 = vperm.xlu0 %854, %v793
  %v856 = vpop.permute.xlu0 %855
  %859 = vset.pattern.permute.xlu0 0
  %860 = vperm.xlu0 %859, %v794
  %v861 = vpop.permute.xlu0 %860
  %864 = vset.pattern.permute.xlu0 0
  %865 = vperm.xlu0 %864, %v795
  %v866 = vpop.permute.xlu0 %865
  %869 = vset.pattern.permute.xlu0 0
  %870 = vperm.xlu0 %869, %v796
  %v871 = vpop.permute.xlu0 %870
  %874 = vset.pattern.permute.xlu0 0
  %875 = vperm.xlu0 %874, %v797
  %v876 = vpop.permute.xlu0 %875
  %v878 = vmul.f32 %v736, %v801
  %v879 = vmul.f32 %v738, %v806
  %v880 = vmul.f32 %v740, %v811
  %v881 = vmul.f32 %v742, %v816
  %v882 = vmul.f32 %v744, %v821
  %v883 = vmul.f32 %v746, %v826
  %v884 = vmul.f32 %v748, %v831
  %v885 = vmul.f32 %v750, %v836
  %v886 = vmul.f32 %v752, %v841
  %v887 = vmul.f32 %v754, %v846
  %v888 = vmul.f32 %v756, %v851
  %v889 = vmul.f32 %v758, %v856
  %v890 = vmul.f32 %v760, %v861
  %v891 = vmul.f32 %v762, %v866
  %v892 = vmul.f32 %v764, %v871
  %v893 = vmul.f32 %v781, %v876
  %894 = vrot.lane.b32.xlu0 %v541, 12
  %v895 = vpop.permute.xlu0 %894
  %896 = vrot.lane.b32.xlu0 %v542, 12
  %v897 = vpop.permute.xlu0 %896
  %898 = vrot.lane.b32.xlu0 %v543, 12
  %v899 = vpop.permute.xlu0 %898
  %900 = vrot.lane.b32.xlu0 %v544, 12
  %v901 = vpop.permute.xlu0 %900
  %902 = vrot.lane.b32.xlu0 %v545, 12
  %v903 = vpop.permute.xlu0 %902
  %904 = vrot.lane.b32.xlu0 %v546, 12
  %v905 = vpop.permute.xlu0 %904
  %906 = vrot.lane.b32.xlu0 %v547, 12
  %v907 = vpop.permute.xlu0 %906
  %908 = vrot.lane.b32.xlu0 %v548, 12
  %v909 = vpop.permute.xlu0 %908
  %910 = vrot.lane.b32.xlu0 %v549, 12
  %v911 = vpop.permute.xlu0 %910
  %912 = vrot.lane.b32.xlu0 %v550, 12
  %v913 = vpop.permute.xlu0 %912
  %914 = vrot.lane.b32.xlu0 %v551, 12
  %v915 = vpop.permute.xlu0 %914
  %916 = vrot.lane.b32.xlu0 %v552, 12
  %v917 = vpop.permute.xlu0 %916
  %918 = vrot.lane.b32.xlu0 %v553, 12
  %v919 = vpop.permute.xlu0 %918
  %920 = vrot.lane.b32.xlu0 %v554, 12
  %v921 = vpop.permute.xlu0 %920
  %922 = vrot.lane.b32.xlu0 %v555, 12
  %v923 = vpop.permute.xlu0 %922
  %924 = vrot.lane.b32.xlu0 %v556, 12
  %v925 = vpop.permute.xlu0 %924
  %958 = vrot.lane.b32.xlu0 %v878, 24
  %v959 = vpop.permute.xlu0 %958
  %960 = vrot.lane.b32.xlu0 %v879, 24
  %v961 = vpop.permute.xlu0 %960
  %962 = vrot.lane.b32.xlu0 %v880, 24
  %v963 = vpop.permute.xlu0 %962
  %964 = vrot.lane.b32.xlu0 %v881, 24
  %v965 = vpop.permute.xlu0 %964
  %966 = vrot.lane.b32.xlu0 %v882, 24
  %v967 = vpop.permute.xlu0 %966
  %968 = vrot.lane.b32.xlu0 %v883, 24
  %v969 = vpop.permute.xlu0 %968
  %970 = vrot.lane.b32.xlu0 %v884, 24
  %v971 = vpop.permute.xlu0 %970
  %972 = vrot.lane.b32.xlu0 %v885, 24
  %v973 = vpop.permute.xlu0 %972
  %974 = vrot.lane.b32.xlu0 %v886, 24
  %v975 = vpop.permute.xlu0 %974
  %976 = vrot.lane.b32.xlu0 %v887, 24
  %v977 = vpop.permute.xlu0 %976
  %978 = vrot.lane.b32.xlu0 %v888, 24
  %v979 = vpop.permute.xlu0 %978
  %980 = vrot.lane.b32.xlu0 %v889, 24
  %v981 = vpop.permute.xlu0 %980
  %982 = vrot.lane.b32.xlu0 %v890, 24
  %v983 = vpop.permute.xlu0 %982
  %984 = vrot.lane.b32.xlu0 %v891, 24
  %v985 = vpop.permute.xlu0 %984
  %986 = vrot.lane.b32.xlu0 %v892, 24
  %v987 = vpop.permute.xlu0 %986
  %988 = vrot.lane.b32.xlu0 %v893, 24
  %v989 = vpop.permute.xlu0 %988
  %vm1006 = vcmask 97280
  %v1007 = vsel %vm1006, %v717, %v895
  %v1008 = vsel %vm1006, %v718, %v897
  %v1009 = vsel %vm1006, %v719, %v899
  %v1010 = vsel %vm1006, %v720, %v901
  %v1011 = vsel %vm1006, %v721, %v903
  %v1012 = vsel %vm1006, %v722, %v905
  %v1013 = vsel %vm1006, %v723, %v907
  %v1014 = vsel %vm1006, %v724, %v909
  %v1015 = vsel %vm1006, %v725, %v911
  %v1016 = vsel %vm1006, %v726, %v913
  %v1017 = vsel %vm1006, %v727, %v915
  %v1018 = vsel %vm1006, %v728, %v917
  %v1019 = vsel %vm1006, %v729, %v919
  %v1020 = vsel %vm1006, %v730, %v921
  %v1021 = vsel %vm1006, %v731, %v923
  %v1022 = vsel %vm1006, %v732, %v925
  %vm1023 = vcmask 195584
  %v1024 = vsel %vm1023, %v1007, %v959
  %v1025 = vsel %vm1023, %v1008, %v961
  %v1026 = vsel %vm1023, %v1009, %v963
  %v1027 = vsel %vm1023, %v1010, %v965
  %v1028 = vsel %vm1023, %v1011, %v967
  %v1029 = vsel %vm1023, %v1012, %v969
  %v1030 = vsel %vm1023, %v1013, %v971
  %v1031 = vsel %vm1023, %v1014, %v973
  %v1032 = vsel %vm1023, %v1015, %v975
  %v1033 = vsel %vm1023, %v1016, %v977
  %v1034 = vsel %vm1023, %v1017, %v979
  %v1035 = vsel %vm1023, %v1018, %v981
  %v1036 = vsel %vm1023, %v1019, %v983
  %v1037 = vsel %vm1023, %v1020, %v985
  %v1038 = vsel %vm1023, %v1021, %v987
  %v1039 = vsel %vm1023, %v1022, %v989
  %v1040 = vpack.c.bf16 %v1025, %v1024
  %v1041 = vpack.c.bf16 %v1027, %v1026
  %v1042 = vpack.c.bf16 %v1029, %v1028
  %v1043 = vpack.c.bf16 %v1031, %v1030
  %v1044 = vpack.c.bf16 %v1033, %v1032
  %v1045 = vpack.c.bf16 %v1035, %v1034
  %v1046 = vpack.c.bf16 %v1037, %v1036
  %v1047 = vpack.c.bf16 %v1039, %v1038
  %v1048 = vld [vmem:[%s29] sm:$0xf]
  %v1049 = vld [vmem:[%s29 + $0x4] sm:$0xf]
  %v1050 = vld [vmem:[%s29 + $0x8] sm:$0xf]
  %v1051 = vld [vmem:[%s29 + $0xc] sm:$0xf]
  %v1052 = vld [vmem:[%s29 + $0x10] sm:$0x3]
  %v1053 = vld [vmem:[%s31] sm:$0x1]
  %v1055 = vperm.slane %v1053, 0
  %v1062 = vunpack.c.l.b16 %v1048
  %v1063 = vunpack.c.l.b16 %v1049
  %v1064 = vunpack.c.l.b16 %v1050
  %v1065 = vunpack.c.l.b16 %v1051
  %v1066 = vunpack.c.l.b16 %v1052
  %v1067 = vpack.c.b16 %v1063, %v1062
  %v1068 = vpack.c.b16 %v1065, %v1064
  %v1069 = vpack.c.b16 %v1066, %v1066
  %vm1072 = vcmask 293888
  %v1074 = vsel %vm1072, %v1040, 0
  %v1077 = vsel %vm1072, %v1041, 0
  %v1080 = vsel %vm1072, %v1042, 0
  %v1083 = vsel %vm1072, %v1043, 0
  %v1086 = vsel %vm1072, %v1044, 0
  %v1089 = vsel %vm1072, %v1045, 0
  %v1092 = vsel %vm1072, %v1046, 0
  %v1095 = vsel %vm1072, %v1047, 0
  %v1098 = vsel %vm234, %v1069, 0
  %1100 = vmatpush.bf16.msra.mxu0 0
  %1101 = vmatpush.bf16.msra.mxu0 0
  %1102 = vmatpush.bf16.msra.mxu0 0
  %1103 = vmatpush.bf16.msra.mxu0 0
  %1104 = vmatpush.bf16.msra.mxu0 0
  %1105 = vmatpush.bf16.msra.mxu0 %v1098
  %1106 = vmatpush.bf16.msra.mxu0 %v1068
  %1107 = vmatpush.bf16.msra.mxu0 %v1067
  %1108 = vmatmul.bf16.gmra.mxu0 %v1074
  %v1109 = vpop.f32.mrf.mxu0
  %v1110 = vadd.f32 %v1055, %v1109
  %v1111 = vpop.f32.mrf.mxu0
  %v1112 = vadd.f32 %v1055, %v1111
  %1113 = vmatmul.bf16.gmra.mxu0 %v1077
  %v1114 = vpop.f32.mrf.mxu0
  %v1115 = vadd.f32 %v1055, %v1114
  %v1116 = vpop.f32.mrf.mxu0
  %v1117 = vadd.f32 %v1055, %v1116
  %1118 = vmatmul.bf16.gmra.mxu0 %v1080
  %v1119 = vpop.f32.mrf.mxu0
  %v1120 = vadd.f32 %v1055, %v1119
  %v1121 = vpop.f32.mrf.mxu0
  %v1122 = vadd.f32 %v1055, %v1121
  %1123 = vmatmul.bf16.gmra.mxu0 %v1083
  %v1124 = vpop.f32.mrf.mxu0
  %v1125 = vadd.f32 %v1055, %v1124
  %v1126 = vpop.f32.mrf.mxu0
  %v1127 = vadd.f32 %v1055, %v1126
  %1128 = vmatmul.bf16.gmra.mxu0 %v1086
  %v1129 = vpop.f32.mrf.mxu0
  %v1130 = vadd.f32 %v1055, %v1129
  %v1131 = vpop.f32.mrf.mxu0
  %v1132 = vadd.f32 %v1055, %v1131
  %1133 = vmatmul.bf16.gmra.mxu0 %v1089
  %v1134 = vpop.f32.mrf.mxu0
  %v1135 = vadd.f32 %v1055, %v1134
  %v1136 = vpop.f32.mrf.mxu0
  %v1137 = vadd.f32 %v1055, %v1136
  %1138 = vmatmul.bf16.gmra.mxu0 %v1092
  %v1139 = vpop.f32.mrf.mxu0
  %v1140 = vadd.f32 %v1055, %v1139
  %v1141 = vpop.f32.mrf.mxu0
  %v1142 = vadd.f32 %v1055, %v1141
  %1143 = vmatmul.bf16.gmra.mxu0 %v1095
  %v1144 = vpop.f32.mrf.mxu0
  %v1145 = vadd.f32 %v1055, %v1144
  %v1146 = vpop.f32.mrf.mxu0
  %v1147 = vadd.f32 %v1055, %v1146
  %1148 = vdwg.mxu0
  %v1149 = vlaneseq
  %v1150 = vand.u32 %v1149, 127
  %v1151 = vcvt.s32.f32 %v1150
  %v1152 = vld [vmem:[%s9] sm:$0xff]
  %v1153 = vld [vmem:[%s9 + $0x8] sm:$0xff]
  %1155 = vset.pattern.permute.xlu0 0
  %1156 = vperm.xlu0 %1155, %v1152
  %v1157 = vpop.permute.xlu0 %1156
  %1160 = vset.pattern.permute.xlu0 0
  %1161 = vperm.xlu0 %1160, %v1153
  %v1162 = vpop.permute.xlu0 %1161
  %vm1164 = vcmp.ge.f32.partialorder %v1151, %v1157
  %vm1165 = vcmp.ge.f32.partialorder %v1151, %v1162
  %v1166 = vld [vmem:[%s11] sm:$0xff]
  %v1167 = vld [vmem:[%s11 + $0x8] sm:$0xff]
  %1169 = vset.pattern.permute.xlu0 0
  %1170 = vperm.xlu0 %1169, %v1166
  %v1171 = vpop.permute.xlu0 %1170
  %1174 = vset.pattern.permute.xlu0 0
  %1175 = vperm.xlu0 %1174, %v1167
  %v1176 = vpop.permute.xlu0 %1175
  %vm1178 = vcmp.lt.f32.partialorder %v1151, %v1171
  %vm1179 = vcmp.lt.f32.partialorder %v1151, %v1176
  %vm1180 = vmand %vm1164, %vm1178
  %vm1181 = vmand %vm1165, %vm1179
  %v1182 = vsel %vm1180, 1, 0
  %v1183 = vsel %vm1181, 1, 0
  %v1184 = vcvt.s32.f32 %v1182
  %v1185 = vcvt.s32.f32 %v1183
  %v1186 = vld [vmem:[%s13] sm:$0xff]
  %v1187 = vld [vmem:[%s13 + $0x8] sm:$0xff]
  %1189 = vset.pattern.permute.xlu0 0
  %1190 = vperm.xlu0 %1189, %v1186
  %v1191 = vpop.permute.xlu0 %1190
  %1194 = vset.pattern.permute.xlu0 0
  %1195 = vperm.xlu0 %1194, %v1187
  %v1196 = vpop.permute.xlu0 %1195
  %v1198 = vmul.f32 %v1184, %v1191
  %v1199 = vmul.f32 %v1185, %v1196
  %v1200 = vpack.c.bf16 %v1199, %v1198
  %1217 = vrot.lane.b32.xlu0 %v1110, 8
  %v1218 = vpop.permute.xlu0 %1217
  %1219 = vrot.lane.b32.xlu0 %v1112, 8
  %v1220 = vpop.permute.xlu0 %1219
  %1221 = vrot.lane.b32.xlu0 %v1115, 8
  %v1222 = vpop.permute.xlu0 %1221
  %1223 = vrot.lane.b32.xlu0 %v1117, 8
  %v1224 = vpop.permute.xlu0 %1223
  %1225 = vrot.lane.b32.xlu0 %v1120, 8
  %v1226 = vpop.permute.xlu0 %1225
  %1227 = vrot.lane.b32.xlu0 %v1122, 8
  %v1228 = vpop.permute.xlu0 %1227
  %1229 = vrot.lane.b32.xlu0 %v1125, 8
  %v1230 = vpop.permute.xlu0 %1229
  %1231 = vrot.lane.b32.xlu0 %v1127, 8
  %v1232 = vpop.permute.xlu0 %1231
  %1233 = vrot.lane.b32.xlu0 %v1130, 8
  %v1234 = vpop.permute.xlu0 %1233
  %1235 = vrot.lane.b32.xlu0 %v1132, 8
  %v1236 = vpop.permute.xlu0 %1235
  %1237 = vrot.lane.b32.xlu0 %v1135, 8
  %v1238 = vpop.permute.xlu0 %1237
  %1239 = vrot.lane.b32.xlu0 %v1137, 8
  %v1240 = vpop.permute.xlu0 %1239
  %1241 = vrot.lane.b32.xlu0 %v1140, 8
  %v1242 = vpop.permute.xlu0 %1241
  %1243 = vrot.lane.b32.xlu0 %v1142, 8
  %v1244 = vpop.permute.xlu0 %1243
  %1245 = vrot.lane.b32.xlu0 %v1145, 8
  %v1246 = vpop.permute.xlu0 %1245
  %1247 = vrot.lane.b32.xlu0 %v1147, 8
  %v1248 = vpop.permute.xlu0 %1247
  %v1265 = vsel %vm540, %v351, %v1218
  %v1266 = vsel %vm540, %v352, %v1220
  %v1267 = vsel %vm540, %v353, %v1222
  %v1268 = vsel %vm540, %v354, %v1224
  %v1269 = vsel %vm540, %v355, %v1226
  %v1270 = vsel %vm540, %v356, %v1228
  %v1271 = vsel %vm540, %v357, %v1230
  %v1272 = vsel %vm540, %v358, %v1232
  %v1273 = vsel %vm540, %v359, %v1234
  %v1274 = vsel %vm540, %v360, %v1236
  %v1275 = vsel %vm540, %v361, %v1238
  %v1276 = vsel %vm540, %v362, %v1240
  %v1277 = vsel %vm540, %v363, %v1242
  %v1278 = vsel %vm540, %v364, %v1244
  %v1279 = vsel %vm540, %v365, %v1246
  %v1280 = vsel %vm540, %v366, %v1248
  %v1281 = vpack.c.bf16 %v1266, %v1265
  %v1282 = vpack.c.bf16 %v1268, %v1267
  %v1283 = vpack.c.bf16 %v1270, %v1269
  %v1284 = vpack.c.bf16 %v1272, %v1271
  %v1285 = vpack.c.bf16 %v1274, %v1273
  %v1286 = vpack.c.bf16 %v1276, %v1275
  %v1287 = vpack.c.bf16 %v1278, %v1277
  %v1288 = vpack.c.bf16 %v1280, %v1279
  %1289 = vmatpush.bf16.msra.mxu0 %v1288
  %1290 = vmatpush.bf16.msra.mxu0 %v1287
  %1291 = vmatpush.bf16.msra.mxu0 %v1286
  %1292 = vmatpush.bf16.msra.mxu0 %v1285
  %1293 = vmatpush.bf16.msra.mxu0 %v1284
  %1294 = vmatpush.bf16.msra.mxu0 %v1283
  %1295 = vmatpush.bf16.msra.mxu0 %v1282
  %1296 = vmatpush.bf16.msra.mxu0 %v1281
  %1297 = vmatmul.bf16.gmra.mxu0 %v1200
  %v1298 = vpop.f32.mrf.mxu0
  %v1299 = vadd.f32 0.0, %v1298
  %v1300 = vpop.f32.mrf.mxu0
  %v1301 = vadd.f32 0.0, %v1300
  %1302 = vdwg.mxu0
  %v1303 = vpack.c.bf16 %v1301, %v1299
  %v1304 = vld [vmem:[%s33] sm:$0xf]
  %v1305 = vld [vmem:[%s33 + $0x4] sm:$0x3]
  %v1306 = vld [vmem:[%s35] sm:$0x1]
  %v1308 = vperm.slane %v1306, 0
  %v1312 = vunpack.c.l.b16 %v1304
  %v1313 = vunpack.c.l.b16 %v1305
  %v1314 = vpack.c.b16 %v1313, %v1312
  %v1316 = vsel %vm1006, %v1303, 0
  %vm1318 = vcmask 1045504
  %v1320 = vsel %vm1318, %v1314, 0
  %1322 = vmatpush.bf16.msra.mxu0 0
  %1323 = vmatpush.bf16.msra.mxu0 0
  %1324 = vmatpush.bf16.msra.mxu0 0
  %1325 = vmatpush.bf16.msra.mxu0 0
  %1326 = vmatpush.bf16.msra.mxu0 0
  %1327 = vmatpush.bf16.msra.mxu0 0
  %1328 = vmatpush.bf16.msra.mxu0 0
  %1329 = vmatpush.bf16.msra.mxu0 %v1320
  %1330 = vmatmul.bf16.gmra.mxu0 %v1316
  %v1331 = vpop.f32.mrf.mxu0
  %v1332 = vadd.f32 %v1308, %v1331
  %v1333 = vpop.f32.mrf.mxu0
  %v1334 = vadd.f32 %v1308, %v1333
  %1335 = vdwg.mxu0
  %v1336 = vld [vmem:[%s37] sm:$0xff]
  %v1337 = vld [vmem:[%s37 + $0x8] sm:$0xff]
  %v1338 = vadd.f32 %v1332, %v1336
  %v1339 = vadd.f32 %v1334, %v1337
  %v1340 = vld [vmem:[%s15] sm:$0xff]
  %v1341 = vld [vmem:[%s15 + $0x8] sm:$0xff]
  %vm1342 = vcmp.ge.s32.totalorder %v1150, 0
  %vm1343 = vcmp.lt.s32.totalorder %v1150, 8
  %vm1344 = vmand %vm1342, %vm1343
  %v1345 = vsel %vm1344, 1, 0
  %v1346 = vcvt.s32.f32 %v1345
  %vm1347 = vcmp.ge.s32.totalorder %v1150, 8
  %vm1348 = vcmp.lt.s32.totalorder %v1150, 16
  %vm1349 = vmand %vm1347, %vm1348
  %v1350 = vsel %vm1349, 1, 0
  %v1351 = vcvt.s32.f32 %v1350
  %vm1352 = vcmp.ge.s32.totalorder %v1150, 16
  %vm1353 = vcmp.lt.s32.totalorder %v1150, 24
  %vm1354 = vmand %vm1352, %vm1353
  %v1355 = vsel %vm1354, 1, 0
  %v1356 = vcvt.s32.f32 %v1355
  %vm1357 = vcmp.ge.s32.totalorder %v1150, 24
  %vm1358 = vcmp.lt.s32.totalorder %v1150, 32
  %vm1359 = vmand %vm1357, %vm1358
  %v1360 = vsel %vm1359, 1, 0
  %v1361 = vcvt.s32.f32 %v1360
  %v1362 = vld [vmem:[%s39] sm:$0x1]
  %v1363 = vld [vmem:[%s41] sm:$0x1]
  %vm1364 = vcmask 261120
  %v1365 = vsel %vm1364, %v1338, 0.0
  %1366 = vadd.xlane.f32.xlu0 %v1365
  %v1367 = vpop.xlane.xlu0 %1366
  %v1368 = vsel %vm1364, %v1339, 0.0
  %1369 = vadd.xlane.f32.xlu0 %v1368
  %v1370 = vpop.xlane.xlu0 %1369
  %v1371 = vrcp.pop 32.0
  %v1372 = vmul.f32 32.0, %v1371
  %v1373 = vsub.f32 1.0, %v1372
  %v1374 = vmul.f32 %v1371, %v1373
  %v1375 = vadd.f32 %v1371, %v1374
  %vm1376 = vweird.f32 %v1371
  %v1377 = vsel %vm1376, %v1371, %v1375
  %v1378 = vmul.f32 %v1367, %v1377
  %v1379 = vmul.f32 %v1370, %v1377
  %v1380 = vsub.f32 %v1338, %v1378
  %v1381 = vsub.f32 %v1339, %v1379
  %v1382 = vmul.f32 %v1380, %v1380
  %v1383 = vmul.f32 %v1381, %v1381
  %v1384 = vsel %vm1364, %v1382, 0.0
  %1385 = vadd.xlane.f32.xlu0 %v1384
  %v1386 = vpop.xlane.xlu0 %1385
  %v1387 = vsel %vm1364, %v1383, 0.0
  %1388 = vadd.xlane.f32.xlu0 %v1387
  %v1389 = vpop.xlane.xlu0 %1388
  %v1390 = vmul.f32 %v1386, %v1377
  %v1391 = vmul.f32 %v1389, %v1377
  %v1392 = vadd.f32 %v1390, 1e-06
  %v1393 = vadd.f32 %v1391, 1e-06
  %v1394 = vrsqrt.pop %v1392
  %v1395 = vmul.f32 %v1394, %v1392
  %v1396 = vmul.f32 %v1395, %v1394
  %v1397 = vmul.f32 0.5, %v1396
  %v1398 = vsub.f32 1.5, %v1397
  %v1399 = vmul.f32 %v1394, %v1398
  %vm1400 = vweird.f32 %v1392
  %vm1401 = vweird.f32 %v1394
  %vm1402 = vmor %vm1400, %vm1401
  %v1403 = vsel %vm1402, %v1394, %v1399
  %v1404 = vrsqrt.pop %v1393
  %v1405 = vmul.f32 %v1404, %v1393
  %v1406 = vmul.f32 %v1405, %v1404
  %v1407 = vmul.f32 0.5, %v1406
  %v1408 = vsub.f32 1.5, %v1407
  %v1409 = vmul.f32 %v1404, %v1408
  %vm1410 = vweird.f32 %v1393
  %vm1411 = vweird.f32 %v1404
  %vm1412 = vmor %vm1410, %vm1411
  %v1413 = vsel %vm1412, %v1404, %v1409
  %v1414 = vmul.f32 %v1380, %v1403
  %v1415 = vmul.f32 %v1381, %v1413
  %v1417 = vperm.slane %v1362, 0
  %v1419 = vmul.f32 %v1414, %v1417
  %v1420 = vmul.f32 %v1415, %v1417
  %v1422 = vperm.slane %v1363, 0
  %v1424 = vadd.f32 %v1419, %v1422
  %v1425 = vadd.f32 %v1420, %v1422
  %v1426 = vpack.c.bf16 %v1425, %v1424
  %v1427 = vld [vmem:[%s43] sm:$0xf]
  %v1428 = vld [vmem:[%s43 + $0x4] sm:$0xf]
  %v1429 = vld [vmem:[%s43 + $0x8] sm:$0xf]
  %v1430 = vld [vmem:[%s43 + $0xc] sm:$0xf]
  %v1431 = vld [vmem:[%s45] sm:$0x1]
  %v1433 = vperm.slane %v1431, 0
  %v1439 = vunpack.c.l.b16 %v1427
  %v1440 = vunpack.c.l.b16 %v1428
  %v1441 = vunpack.c.l.b16 %v1429
  %v1442 = vunpack.c.l.b16 %v1430
  %v1443 = vpack.c.b16 %v1440, %v1439
  %v1444 = vpack.c.b16 %v1442, %v1441
  %v1448 = vsel %vm1364, %v1426, 0
  %1450 = vmatpush.bf16.msra.mxu0 0
  %1451 = vmatpush.bf16.msra.mxu0 0
  %1452 = vmatpush.bf16.msra.mxu0 0
  %1453 = vmatpush.bf16.msra.mxu0 0
  %1454 = vmatpush.bf16.msra.mxu0 0
  %1455 = vmatpush.bf16.msra.mxu0 0
  %1456 = vmatpush.bf16.msra.mxu0 %v1444
  %1457 = vmatpush.bf16.msra.mxu0 %v1443
  %1458 = vmatmul.bf16.gmra.mxu0 %v1448
  %v1459 = vpop.f32.mrf.mxu0
  %v1460 = vadd.f32 %v1433, %v1459
  %v1461 = vpop.f32.mrf.mxu0
  %v1462 = vadd.f32 %v1433, %v1461
  %1463 = vdwg.mxu0
  %v1464 = vld [vmem:[%s47] sm:$0xf]
  %v1465 = vld [vmem:[%s47 + $0x4] sm:$0xf]
  %v1466 = vld [vmem:[%s47 + $0x8] sm:$0xf]
  %v1467 = vld [vmem:[%s47 + $0xc] sm:$0xf]
  %v1468 = vld [vmem:[%s49] sm:$0x1]
  %v1470 = vperm.slane %v1468, 0
  %v1476 = vunpack.c.l.b16 %v1464
  %v1477 = vunpack.c.l.b16 %v1465
  %v1478 = vunpack.c.l.b16 %v1466
  %v1479 = vunpack.c.l.b16 %v1467
  %v1480 = vpack.c.b16 %v1477, %v1476
  %v1481 = vpack.c.b16 %v1479, %v1478
  %1484 = vmatpush.bf16.msra.mxu0 0
  %1485 = vmatpush.bf16.msra.mxu0 0
  %1486 = vmatpush.bf16.msra.mxu0 0
  %1487 = vmatpush.bf16.msra.mxu0 0
  %1488 = vmatpush.bf16.msra.mxu0 0
  %1489 = vmatpush.bf16.msra.mxu0 0
  %1490 = vmatpush.bf16.msra.mxu0 %v1481
  %1491 = vmatpush.bf16.msra.mxu0 %v1480
  %1492 = vmatmul.bf16.gmra.mxu0 %v1448
  %v1493 = vpop.f32.mrf.mxu0
  %v1494 = vadd.f32 %v1470, %v1493
  %v1495 = vpop.f32.mrf.mxu0
  %v1496 = vadd.f32 %v1470, %v1495
  %1497 = vdwg.mxu0
  %v1498 = vld [vmem:[%s51] sm:$0xf]
  %v1499 = vld [vmem:[%s51 + $0x4] sm:$0xf]
  %v1500 = vld [vmem:[%s51 + $0x8] sm:$0xf]
  %v1501 = vld [vmem:[%s51 + $0xc] sm:$0xf]
  %v1502 = vld [vmem:[%s53] sm:$0x1]
  %v1504 = vperm.slane %v1502, 0
  %v1510 = vunpack.c.l.b16 %v1498
  %v1511 = vunpack.c.l.b16 %v1499
  %v1512 = vunpack.c.l.b16 %v1500
  %v1513 = vunpack.c.l.b16 %v1501
  %v1514 = vpack.c.b16 %v1511, %v1510
  %v1515 = vpack.c.b16 %v1513, %v1512
  %1518 = vmatpush.bf16.msra.mxu0 0
  %1519 = vmatpush.bf16.msra.mxu0 0
  %1520 = vmatpush.bf16.msra.mxu0 0
  %1521 = vmatpush.bf16.msra.mxu0 0
  %1522 = vmatpush.bf16.msra.mxu0 0
  %1523 = vmatpush.bf16.msra.mxu0 0
  %1524 = vmatpush.bf16.msra.mxu0 %v1515
  %1525 = vmatpush.bf16.msra.mxu0 %v1514
  %1526 = vmatmul.bf16.gmra.mxu0 %v1448
  %v1527 = vpop.f32.mrf.mxu0
  %v1528 = vadd.f32 %v1504, %v1527
  %v1529 = vpop.f32.mrf.mxu0
  %v1530 = vadd.f32 %v1504, %v1529
  %1531 = vdwg.mxu0
  %v1532 = vpack.c.bf16 %v1496, %v1494
  %v1533 = vmul.f32 %v1460, %v1346
  %v1534 = vmul.f32 %v1462, %v1346
  %v1535 = vpack.c.bf16 %v1534, %v1533
  %v1537 = vsel %vm1364, %v1535, 0
  %v1540 = vsel %vm1364, %v1532, 0
  %1542 = vmatpush.bf16.xpose.msra.mxu0 0
  %1543 = vmatpush.bf16.xpose.msra.mxu0 0
  %1544 = vmatpush.bf16.xpose.msra.mxu0 0
  %1545 = vmatpush.bf16.xpose.msra.mxu0 0
  %1546 = vmatpush.bf16.xpose.msra.mxu0 0
  %1547 = vmatpush.bf16.xpose.msra.mxu0 0
  %1548 = vmatpush.bf16.xpose.msra.mxu0 0
  %1549 = vmatpush.bf16.xpose.msra.mxu0 %v1540
  %1550 = vmatmul.bf16.gmra.mxu0 %v1537
  %v1551 = vpop.f32.mrf.mxu0
  %v1552 = vadd.f32 %v1340, %v1551
  %v1553 = vpop.f32.mrf.mxu0
  %v1554 = vadd.f32 %v1341, %v1553
  %1555 = vdwg.mxu0
  %vm1556 = vcmask 130048
  %v1557 = vsel %vm1556, %v1552, -inf
  %1558 = vmax.xlane.f32.xlu0 %v1557
  %v1559 = vpop.xlane.xlu0 %1558
  %v1560 = vsel %vm1556, %v1554, -inf
  %1561 = vmax.xlane.f32.xlu0 %v1560
  %v1562 = vpop.xlane.xlu0 %1561
  %v1563 = vsub.f32 %v1552, %v1559
  %v1564 = vsub.f32 %v1554, %v1562
  %v1565 = vmul.f32 %v1563, 1.442695
  %v1566 = vpow.pop %v1565
  %v1567 = vmul.f32 %v1564, 1.442695
  %v1568 = vpow.pop %v1567
  %v1569 = vsel %vm1556, %v1566, 0.0
  %1570 = vadd.xlane.f32.xlu0 %v1569
  %v1571 = vpop.xlane.xlu0 %1570
  %v1572 = vsel %vm1556, %v1568, 0.0
  %1573 = vadd.xlane.f32.xlu0 %v1572
  %v1574 = vpop.xlane.xlu0 %1573
  %v1575 = vrcp.pop %v1571
  %v1576 = vrcp.pop %v1574
  %v1577 = vmul.f32 %v1566, %v1575
  %v1578 = vmul.f32 %v1568, %v1576
  %v1579 = vpack.c.bf16 %v1578, %v1577
  %v1580 = vmul.f32 %v1528, %v1346
  %v1581 = vmul.f32 %v1530, %v1346
  %v1582 = vpack.c.bf16 %v1581, %v1580
  %v1583 = vmul.f32 %v1460, %v1351
  %v1584 = vmul.f32 %v1462, %v1351
  %v1585 = vpack.c.bf16 %v1584, %v1583
  %v1587 = vsel %vm1364, %v1585, 0
  %1589 = vmatpush.bf16.xpose.msra.mxu0 0
  %1590 = vmatpush.bf16.xpose.msra.mxu0 0
  %1591 = vmatpush.bf16.xpose.msra.mxu0 0
  %1592 = vmatpush.bf16.xpose.msra.mxu0 0
  %1593 = vmatpush.bf16.xpose.msra.mxu0 0
  %1594 = vmatpush.bf16.xpose.msra.mxu0 0
  %1595 = vmatpush.bf16.xpose.msra.mxu0 0
  %1596 = vmatpush.bf16.xpose.msra.mxu0 %v1540
  %1597 = vmatmul.bf16.gmra.mxu0 %v1587
  %v1598 = vpop.f32.mrf.mxu0
  %v1599 = vadd.f32 %v1340, %v1598
  %v1600 = vpop.f32.mrf.mxu0
  %v1601 = vadd.f32 %v1341, %v1600
  %1602 = vdwg.mxu0
  %v1603 = vsel %vm1556, %v1599, -inf
  %1604 = vmax.xlane.f32.xlu0 %v1603
  %v1605 = vpop.xlane.xlu0 %1604
  %v1606 = vsel %vm1556, %v1601, -inf
  %1607 = vmax.xlane.f32.xlu0 %v1606
  %v1608 = vpop.xlane.xlu0 %1607
  %v1609 = vsub.f32 %v1599, %v1605
  %v1610 = vsub.f32 %v1601, %v1608
  %v1611 = vmul.f32 %v1609, 1.442695
  %v1612 = vpow.pop %v1611
  %v1613 = vmul.f32 %v1610, 1.442695
  %v1614 = vpow.pop %v1613
  %v1615 = vsel %vm1556, %v1612, 0.0
  %1616 = vadd.xlane.f32.xlu0 %v1615
  %v1617 = vpop.xlane.xlu0 %1616
  %v1618 = vsel %vm1556, %v1614, 0.0
  %1619 = vadd.xlane.f32.xlu0 %v1618
  %v1620 = vpop.xlane.xlu0 %1619
  %v1621 = vrcp.pop %v1617
  %v1622 = vrcp.pop %v1620
  %v1623 = vmul.f32 %v1612, %v1621
  %v1624 = vmul.f32 %v1614, %v1622
  %v1625 = vpack.c.bf16 %v1624, %v1623
  %v1626 = vmul.f32 %v1528, %v1351
  %v1627 = vmul.f32 %v1530, %v1351
  %v1628 = vpack.c.bf16 %v1627, %v1626
  %v1630 = vsel %vm1556, %v1625, 0
  %1632 = vmatpush.bf16.msra.mxu0 0
  %1633 = vmatpush.bf16.msra.mxu0 0
  %1634 = vmatpush.bf16.msra.mxu0 0
  %1635 = vmatpush.bf16.msra.mxu0 0
  %1636 = vmatpush.bf16.msra.mxu0 0
  %1637 = vmatpush.bf16.msra.mxu0 0
  %1638 = vmatpush.bf16.msra.mxu0 0
  %1639 = vmatpush.bf16.msra.mxu0 %v1628
  %1640 = vmatmul.bf16.gmra.mxu0 %v1630
  %v1641 = vpop.f32.mrf.mxu0
  %v1642 = vadd.f32 0.0, %v1641
  %v1643 = vpop.f32.mrf.mxu0
  %v1644 = vadd.f32 0.0, %v1643
  %1645 = vdwg.mxu0
  %v1647 = vsel %vm1556, %v1579, 0
  %1649 = vmatpush.bf16.msra.mxu0 0
  %1650 = vmatpush.bf16.msra.mxu0 0
  %1651 = vmatpush.bf16.msra.mxu0 0
  %1652 = vmatpush.bf16.msra.mxu0 0
  %1653 = vmatpush.bf16.msra.mxu0 0
  %1654 = vmatpush.bf16.msra.mxu0 0
  %1655 = vmatpush.bf16.msra.mxu0 0
  %1656 = vmatpush.bf16.msra.mxu0 %v1582
  %1657 = vmatmul.bf16.gmra.mxu0 %v1647
  %v1658 = vpop.f32.mrf.mxu0
  %v1659 = vadd.f32 %v1642, %v1658
  %v1660 = vpop.f32.mrf.mxu0
  %v1661 = vadd.f32 %v1644, %v1660
  %1662 = vdwg.mxu0
  %v1663 = vmul.f32 %v1460, %v1356
  %v1664 = vmul.f32 %v1462, %v1356
  %v1665 = vpack.c.bf16 %v1664, %v1663
  %v1667 = vsel %vm1364, %v1665, 0
  %1669 = vmatpush.bf16.xpose.msra.mxu0 0
  %1670 = vmatpush.bf16.xpose.msra.mxu0 0
  %1671 = vmatpush.bf16.xpose.msra.mxu0 0
  %1672 = vmatpush.bf16.xpose.msra.mxu0 0
  %1673 = vmatpush.bf16.xpose.msra.mxu0 0
  %1674 = vmatpush.bf16.xpose.msra.mxu0 0
  %1675 = vmatpush.bf16.xpose.msra.mxu0 0
  %1676 = vmatpush.bf16.xpose.msra.mxu0 %v1540
  %1677 = vmatmul.bf16.gmra.mxu0 %v1667
  %v1678 = vpop.f32.mrf.mxu0
  %v1679 = vadd.f32 %v1340, %v1678
  %v1680 = vpop.f32.mrf.mxu0
  %v1681 = vadd.f32 %v1341, %v1680
  %1682 = vdwg.mxu0
  %v1683 = vsel %vm1556, %v1679, -inf
  %1684 = vmax.xlane.f32.xlu0 %v1683
  %v1685 = vpop.xlane.xlu0 %1684
  %v1686 = vsel %vm1556, %v1681, -inf
  %1687 = vmax.xlane.f32.xlu0 %v1686
  %v1688 = vpop.xlane.xlu0 %1687
  %v1689 = vsub.f32 %v1679, %v1685
  %v1690 = vsub.f32 %v1681, %v1688
  %v1691 = vmul.f32 %v1689, 1.442695
  %v1692 = vpow.pop %v1691
  %v1693 = vmul.f32 %v1690, 1.442695
  %v1694 = vpow.pop %v1693
  %v1695 = vsel %vm1556, %v1692, 0.0
  %1696 = vadd.xlane.f32.xlu0 %v1695
  %v1697 = vpop.xlane.xlu0 %1696
  %v1698 = vsel %vm1556, %v1694, 0.0
  %1699 = vadd.xlane.f32.xlu0 %v1698
  %v1700 = vpop.xlane.xlu0 %1699
  %v1701 = vrcp.pop %v1697
  %v1702 = vrcp.pop %v1700
  %v1703 = vmul.f32 %v1692, %v1701
  %v1704 = vmul.f32 %v1694, %v1702
  %v1705 = vpack.c.bf16 %v1704, %v1703
  %v1706 = vmul.f32 %v1528, %v1356
  %v1707 = vmul.f32 %v1530, %v1356
  %v1708 = vpack.c.bf16 %v1707, %v1706
  %v1710 = vsel %vm1556, %v1705, 0
  %1712 = vmatpush.bf16.msra.mxu0 0
  %1713 = vmatpush.bf16.msra.mxu0 0
  %1714 = vmatpush.bf16.msra.mxu0 0
  %1715 = vmatpush.bf16.msra.mxu0 0
  %1716 = vmatpush.bf16.msra.mxu0 0
  %1717 = vmatpush.bf16.msra.mxu0 0
  %1718 = vmatpush.bf16.msra.mxu0 0
  %1719 = vmatpush.bf16.msra.mxu0 %v1708
  %1720 = vmatmul.bf16.gmra.mxu0 %v1710
  %v1721 = vpop.f32.mrf.mxu0
  %v1722 = vadd.f32 0.0, %v1721
  %v1723 = vpop.f32.mrf.mxu0
  %v1724 = vadd.f32 0.0, %v1723
  %1725 = vdwg.mxu0
  %v1726 = vadd.f32 %v1659, %v1722
  %v1727 = vadd.f32 %v1661, %v1724
  %v1728 = vmul.f32 %v1460, %v1361
  %v1729 = vmul.f32 %v1462, %v1361
  %v1730 = vpack.c.bf16 %v1729, %v1728
  %v1732 = vsel %vm1364, %v1730, 0
  %1734 = vmatpush.bf16.xpose.msra.mxu0 0
  %1735 = vmatpush.bf16.xpose.msra.mxu0 0
  %1736 = vmatpush.bf16.xpose.msra.mxu0 0
  %1737 = vmatpush.bf16.xpose.msra.mxu0 0
  %1738 = vmatpush.bf16.xpose.msra.mxu0 0
  %1739 = vmatpush.bf16.xpose.msra.mxu0 0
  %1740 = vmatpush.bf16.xpose.msra.mxu0 0
  %1741 = vmatpush.bf16.xpose.msra.mxu0 %v1540
  %1742 = vmatmul.bf16.gmra.mxu0 %v1732
  %v1743 = vpop.f32.mrf.mxu0
  %v1744 = vadd.f32 %v1340, %v1743
  %v1745 = vpop.f32.mrf.mxu0
  %v1746 = vadd.f32 %v1341, %v1745
  %1747 = vdwg.mxu0
  %v1748 = vsel %vm1556, %v1744, -inf
  %1749 = vmax.xlane.f32.xlu0 %v1748
  %v1750 = vpop.xlane.xlu0 %1749
  %v1751 = vsel %vm1556, %v1746, -inf
  %1752 = vmax.xlane.f32.xlu0 %v1751
  %v1753 = vpop.xlane.xlu0 %1752
  %v1754 = vsub.f32 %v1744, %v1750
  %v1755 = vsub.f32 %v1746, %v1753
  %v1756 = vmul.f32 %v1754, 1.442695
  %v1757 = vpow.pop %v1756
  %v1758 = vmul.f32 %v1755, 1.442695
  %v1759 = vpow.pop %v1758
  %v1760 = vsel %vm1556, %v1757, 0.0
  %1761 = vadd.xlane.f32.xlu0 %v1760
  %v1762 = vpop.xlane.xlu0 %1761
  %v1763 = vsel %vm1556, %v1759, 0.0
  %1764 = vadd.xlane.f32.xlu0 %v1763
  %v1765 = vpop.xlane.xlu0 %1764
  %v1766 = vrcp.pop %v1762
  %v1767 = vrcp.pop %v1765
  %v1768 = vmul.f32 %v1757, %v1766
  %v1769 = vmul.f32 %v1759, %v1767
  %v1770 = vpack.c.bf16 %v1769, %v1768
  %v1771 = vmul.f32 %v1528, %v1361
  %v1772 = vmul.f32 %v1530, %v1361
  %v1773 = vpack.c.bf16 %v1772, %v1771
  %v1775 = vsel %vm1556, %v1770, 0
  %1777 = vmatpush.bf16.msra.mxu0 0
  %1778 = vmatpush.bf16.msra.mxu0 0
  %1779 = vmatpush.bf16.msra.mxu0 0
  %1780 = vmatpush.bf16.msra.mxu0 0
  %1781 = vmatpush.bf16.msra.mxu0 0
  %1782 = vmatpush.bf16.msra.mxu0 0
  %1783 = vmatpush.bf16.msra.mxu0 0
  %1784 = vmatpush.bf16.msra.mxu0 %v1773
  %1785 = vmatmul.bf16.gmra.mxu0 %v1775
  %v1786 = vpop.f32.mrf.mxu0
  %v1787 = vadd.f32 0.0, %v1786
  %v1788 = vpop.f32.mrf.mxu0
  %v1789 = vadd.f32 0.0, %v1788
  %1790 = vdwg.mxu0
  %v1791 = vadd.f32 %v1726, %v1787
  %v1792 = vadd.f32 %v1727, %v1789
  %v1793 = vpack.c.bf16 %v1792, %v1791
  %v1794 = vld [vmem:[%s55] sm:$0xf]
  %v1795 = vld [vmem:[%s55 + $0x4] sm:$0xf]
  %v1796 = vld [vmem:[%s55 + $0x8] sm:$0xf]
  %v1797 = vld [vmem:[%s55 + $0xc] sm:$0xf]
  %v1802 = vunpack.c.l.b16 %v1794
  %v1803 = vunpack.c.l.b16 %v1795
  %v1804 = vunpack.c.l.b16 %v1796
  %v1805 = vunpack.c.l.b16 %v1797
  %v1806 = vpack.c.b16 %v1803, %v1802
  %v1807 = vpack.c.b16 %v1805, %v1804
  %v1811 = vsel %vm1364, %v1793, 0
  %1813 = vmatpush.bf16.msra.mxu0 0
  %1814 = vmatpush.bf16.msra.mxu0 0
  %1815 = vmatpush.bf16.msra.mxu0 0
  %1816 = vmatpush.bf16.msra.mxu0 0
  %1817 = vmatpush.bf16.msra.mxu0 0
  %1818 = vmatpush.bf16.msra.mxu0 0
  %1819 = vmatpush.bf16.msra.mxu0 %v1807
  %1820 = vmatpush.bf16.msra.mxu0 %v1806
  %1821 = vmatmul.bf16.gmra.mxu0 %v1811
  %v1822 = vpop.f32.mrf.mxu0
  %v1823 = vadd.f32 0.0, %v1822
  %v1824 = vpop.f32.mrf.mxu0
  %v1825 = vadd.f32 0.0, %v1824
  %1826 = vdwg.mxu0
  %v1827 = vadd.f32 %v1338, %v1823
  %v1828 = vadd.f32 %v1339, %v1825
  %v1829 = vld [vmem:[%s57] sm:$0x1]
  %v1831 = vperm.slane %v1829, 0
  %v1833 = vadd.f32 %v1827, %v1831
  %v1834 = vadd.f32 %v1828, %v1831
  %v1835 = vld [vmem:[%s59] sm:$0x1]
  %v1836 = vld [vmem:[%s61] sm:$0x1]
  %v1837 = vsel %vm1364, %v1833, 0.0
  %1838 = vadd.xlane.f32.xlu0 %v1837
  %v1839 = vpop.xlane.xlu0 %1838
  %v1840 = vsel %vm1364, %v1834, 0.0
  %1841 = vadd.xlane.f32.xlu0 %v1840
  %v1842 = vpop.xlane.xlu0 %1841
  %v1843 = vmul.f32 %v1839, %v1377
  %v1844 = vmul.f32 %v1842, %v1377
  %v1845 = vsub.f32 %v1833, %v1843
  %v1846 = vsub.f32 %v1834, %v1844
  %v1847 = vmul.f32 %v1845, %v1845
  %v1848 = vmul.f32 %v1846, %v1846
  %v1849 = vsel %vm1364, %v1847, 0.0
  %1850 = vadd.xlane.f32.xlu0 %v1849
  %v1851 = vpop.xlane.xlu0 %1850
  %v1852 = vsel %vm1364, %v1848, 0.0
  %1853 = vadd.xlane.f32.xlu0 %v1852
  %v1854 = vpop.xlane.xlu0 %1853
  %v1855 = vmul.f32 %v1851, %v1377
  %v1856 = vmul.f32 %v1854, %v1377
  %v1857 = vadd.f32 %v1855, 1e-06
  %v1858 = vadd.f32 %v1856, 1e-06
  %v1859 = vrsqrt.pop %v1857
  %v1860 = vmul.f32 %v1859, %v1857
  %v1861 = vmul.f32 %v1860, %v1859
  %v1862 = vmul.f32 0.5, %v1861
  %v1863 = vsub.f32 1.5, %v1862
  %v1864 = vmul.f32 %v1859, %v1863
  %vm1865 = vweird.f32 %v1857
  %vm1866 = vweird.f32 %v1859
  %vm1867 = vmor %vm1865, %vm1866
  %v1868 = vsel %vm1867, %v1859, %v1864
  %v1869 = vrsqrt.pop %v1858
  %v1870 = vmul.f32 %v1869, %v1858
  %v1871 = vmul.f32 %v1870, %v1869
  %v1872 = vmul.f32 0.5, %v1871
  %v1873 = vsub.f32 1.5, %v1872
  %v1874 = vmul.f32 %v1869, %v1873
  %vm1875 = vweird.f32 %v1858
  %vm1876 = vweird.f32 %v1869
  %vm1877 = vmor %vm1875, %vm1876
  %v1878 = vsel %vm1877, %v1869, %v1874
  %v1879 = vmul.f32 %v1845, %v1868
  %v1880 = vmul.f32 %v1846, %v1878
  %v1882 = vperm.slane %v1835, 0
  %v1884 = vmul.f32 %v1879, %v1882
  %v1885 = vmul.f32 %v1880, %v1882
  %v1887 = vperm.slane %v1836, 0
  %v1889 = vadd.f32 %v1884, %v1887
  %v1890 = vadd.f32 %v1885, %v1887
  %v1891 = vpack.c.bf16 %v1890, %v1889
  %v1892 = vld [vmem:[%s63] sm:$0xf]
  %v1893 = vld [vmem:[%s63 + $0x4] sm:$0xf]
  %v1894 = vld [vmem:[%s63 + $0x8] sm:$0xf]
  %v1895 = vld [vmem:[%s63 + $0xc] sm:$0xf]
  %v1896 = vld [vmem:[%s65] sm:$0x1]
  %v1898 = vperm.slane %v1896, 0
  %v1904 = vunpack.c.l.b16 %v1892
  %v1905 = vunpack.c.l.b16 %v1893
  %v1906 = vunpack.c.l.b16 %v1894
  %v1907 = vunpack.c.l.b16 %v1895
  %v1908 = vpack.c.b16 %v1905, %v1904
  %v1909 = vpack.c.b16 %v1907, %v1906
  %v1913 = vsel %vm1364, %v1891, 0
  %1915 = vmatpush.bf16.msra.mxu0 0
  %1916 = vmatpush.bf16.msra.mxu0 0
  %1917 = vmatpush.bf16.msra.mxu0 0
  %1918 = vmatpush.bf16.msra.mxu0 0
  %1919 = vmatpush.bf16.msra.mxu0 0
  %1920 = vmatpush.bf16.msra.mxu0 0
  %1921 = vmatpush.bf16.msra.mxu0 %v1909
  %1922 = vmatpush.bf16.msra.mxu0 %v1908
  %1923 = vmatmul.bf16.gmra.mxu0 %v1913
  %v1924 = vpop.f32.mrf.mxu0
  %v1925 = vadd.f32 %v1898, %v1924
  %v1926 = vpop.f32.mrf.mxu0
  %v1927 = vadd.f32 %v1898, %v1926
  %1928 = vdwg.mxu0
  %v1929 = vmul.f32 %v1925, %v1925
  %v1930 = vmul.f32 %v1927, %v1927
  %v1931 = vmul.f32 %v1925, %v1929
  %v1932 = vmul.f32 %v1927, %v1930
  %v1933 = vmul.f32 %v1931, 0.044715
  %v1934 = vmul.f32 %v1932, 0.044715
  %v1935 = vadd.f32 %v1925, %v1933
  %v1936 = vadd.f32 %v1927, %v1934
  %v1937 = vmul.f32 %v1935, 0.7978846
  %v1938 = vmul.f32 %v1936, 0.7978846
  %v1939 = vtanh.pop %v1937
  %v1940 = vtanh.pop %v1938
  %v1941 = vadd.f32 %v1939, 1.0
  %v1942 = vadd.f32 %v1940, 1.0
  %v1943 = vmul.f32 %v1941, 0.5
  %v1944 = vmul.f32 %v1942, 0.5
  %v1945 = vmul.f32 %v1925, %v1943
  %v1946 = vmul.f32 %v1927, %v1944
  %v1947 = vpack.c.bf16 %v1946, %v1945
  %v1948 = vld [vmem:[%s67] sm:$0xf]
  %v1949 = vld [vmem:[%s67 + $0x4] sm:$0xf]
  %v1950 = vld [vmem:[%s67 + $0x8] sm:$0xf]
  %v1951 = vld [vmem:[%s67 + $0xc] sm:$0xf]
  %v1952 = vld [vmem:[%s67 + $0x10] sm:$0xf]
  %v1953 = vld [vmem:[%s67 + $0x14] sm:$0xf]
  %v1954 = vld [vmem:[%s67 + $0x18] sm:$0xf]
  %v1955 = vld [vmem:[%s67 + $0x1c] sm:$0xf]
  %v1956 = vld [vmem:[%s67 + $0x20] sm:$0xf]
  %v1957 = vld [vmem:[%s67 + $0x24] sm:$0xf]
  %v1958 = vld [vmem:[%s67 + $0x28] sm:$0xf]
  %v1959 = vld [vmem:[%s67 + $0x2c] sm:$0xf]
  %v1960 = vld [vmem:[%s67 + $0x30] sm:$0xf]
  %v1961 = vld [vmem:[%s67 + $0x34] sm:$0xf]
  %v1962 = vld [vmem:[%s67 + $0x38] sm:$0xf]
  %v1963 = vld [vmem:[%s67 + $0x3c] sm:$0xf]
  %v1964 = vld [vmem:[%s69] sm:$0x1]
  %v1966 = vperm.slane %v1964, 0
  %v1984 = vunpack.c.l.b16 %v1948
  %v1985 = vunpack.c.l.b16 %v1949
  %v1986 = vunpack.c.l.b16 %v1950
  %v1987 = vunpack.c.l.b16 %v1951
  %v1988 = vunpack.c.l.b16 %v1952
  %v1989 = vunpack.c.l.b16 %v1953
  %v1990 = vunpack.c.l.b16 %v1954
  %v1991 = vunpack.c.l.b16 %v1955
  %v1992 = vunpack.c.l.b16 %v1956
  %v1993 = vunpack.c.l.b16 %v1957
  %v1994 = vunpack.c.l.b16 %v1958
  %v1995 = vunpack.c.l.b16 %v1959
  %v1996 = vunpack.c.l.b16 %v1960
  %v1997 = vunpack.c.l.b16 %v1961
  %v1998 = vunpack.c.l.b16 %v1962
  %v1999 = vunpack.c.l.b16 %v1963
  %v2000 = vpack.c.b16 %v1985, %v1984
  %v2001 = vpack.c.b16 %v1987, %v1986
  %v2002 = vpack.c.b16 %v1989, %v1988
  %v2003 = vpack.c.b16 %v1991, %v1990
  %v2004 = vpack.c.b16 %v1993, %v1992
  %v2005 = vpack.c.b16 %v1995, %v1994
  %v2006 = vpack.c.b16 %v1997, %v1996
  %v2007 = vpack.c.b16 %v1999, %v1998
  %2016 = vmatpush.bf16.msra.mxu0 %v2007
  %2017 = vmatpush.bf16.msra.mxu0 %v2006
  %2018 = vmatpush.bf16.msra.mxu0 %v2005
  %2019 = vmatpush.bf16.msra.mxu0 %v2004
  %2020 = vmatpush.bf16.msra.mxu0 %v2003
  %2021 = vmatpush.bf16.msra.mxu0 %v2002
  %2022 = vmatpush.bf16.msra.mxu0 %v2001
  %2023 = vmatpush.bf16.msra.mxu0 %v2000
  %2024 = vmatmul.bf16.gmra.mxu0 %v1947
  %v2025 = vpop.f32.mrf.mxu0
  %v2026 = vadd.f32 %v1966, %v2025
  %v2027 = vpop.f32.mrf.mxu0
  %v2028 = vadd.f32 %v1966, %v2027
  %2029 = vdwg.mxu0
  %v2030 = vadd.f32 %v1833, %v2026
  %v2031 = vadd.f32 %v1834, %v2028
  %s2032 = scalar_lea.vmem %s39, 1
  %v2033 = vld [vmem:[%s2032] sm:$0x1]
  %s2034 = scalar_lea.vmem %s41, 1
  %v2035 = vld [vmem:[%s2034] sm:$0x1]
  %v2036 = vsel %vm1364, %v2030, 0.0
  %2037 = vadd.xlane.f32.xlu0 %v2036
  %v2038 = vpop.xlane.xlu0 %2037
  %v2039 = vsel %vm1364, %v2031, 0.0
  %2040 = vadd.xlane.f32.xlu0 %v2039
  %v2041 = vpop.xlane.xlu0 %2040
  %v2042 = vmul.f32 %v2038, %v1377
  %v2043 = vmul.f32 %v2041, %v1377
  %v2044 = vsub.f32 %v2030, %v2042
  %v2045 = vsub.f32 %v2031, %v2043
  %v2046 = vmul.f32 %v2044, %v2044
  %v2047 = vmul.f32 %v2045, %v2045
  %v2048 = vsel %vm1364, %v2046, 0.0
  %2049 = vadd.xlane.f32.xlu0 %v2048
  %v2050 = vpop.xlane.xlu0 %2049
  %v2051 = vsel %vm1364, %v2047, 0.0
  %2052 = vadd.xlane.f32.xlu0 %v2051
  %v2053 = vpop.xlane.xlu0 %2052
  %v2054 = vmul.f32 %v2050, %v1377
  %v2055 = vmul.f32 %v2053, %v1377
  %v2056 = vadd.f32 %v2054, 1e-06
  %v2057 = vadd.f32 %v2055, 1e-06
  %v2058 = vrsqrt.pop %v2056
  %v2059 = vmul.f32 %v2058, %v2056
  %v2060 = vmul.f32 %v2059, %v2058
  %v2061 = vmul.f32 0.5, %v2060
  %v2062 = vsub.f32 1.5, %v2061
  %v2063 = vmul.f32 %v2058, %v2062
  %vm2064 = vweird.f32 %v2056
  %vm2065 = vweird.f32 %v2058
  %vm2066 = vmor %vm2064, %vm2065
  %v2067 = vsel %vm2066, %v2058, %v2063
  %v2068 = vrsqrt.pop %v2057
  %v2069 = vmul.f32 %v2068, %v2057
  %v2070 = vmul.f32 %v2069, %v2068
  %v2071 = vmul.f32 0.5, %v2070
  %v2072 = vsub.f32 1.5, %v2071
  %v2073 = vmul.f32 %v2068, %v2072
  %vm2074 = vweird.f32 %v2057
  %vm2075 = vweird.f32 %v2068
  %vm2076 = vmor %vm2074, %vm2075
  %v2077 = vsel %vm2076, %v2068, %v2073
  %v2078 = vmul.f32 %v2044, %v2067
  %v2079 = vmul.f32 %v2045, %v2077
  %v2081 = vperm.slane %v2033, 0
  %v2083 = vmul.f32 %v2078, %v2081
  %v2084 = vmul.f32 %v2079, %v2081
  %v2086 = vperm.slane %v2035, 0
  %v2088 = vadd.f32 %v2083, %v2086
  %v2089 = vadd.f32 %v2084, %v2086
  %v2090 = vpack.c.bf16 %v2089, %v2088
  %s2091 = scalar_lea.vmem %s43, 16
  %v2092 = vld [vmem:[%s2091] sm:$0xf]
  %v2093 = vld [vmem:[%s2091 + $0x4] sm:$0xf]
  %v2094 = vld [vmem:[%s2091 + $0x8] sm:$0xf]
  %v2095 = vld [vmem:[%s2091 + $0xc] sm:$0xf]
  %s2096 = scalar_lea.vmem %s45, 1
  %v2097 = vld [vmem:[%s2096] sm:$0x1]
  %v2099 = vperm.slane %v2097, 0
  %v2105 = vunpack.c.l.b16 %v2092
  %v2106 = vunpack.c.l.b16 %v2093
  %v2107 = vunpack.c.l.b16 %v2094
  %v2108 = vunpack.c.l.b16 %v2095
  %v2109 = vpack.c.b16 %v2106, %v2105
  %v2110 = vpack.c.b16 %v2108, %v2107
  %v2114 = vsel %vm1364, %v2090, 0
  %2116 = vmatpush.bf16.msra.mxu0 0
  %2117 = vmatpush.bf16.msra.mxu0 0
  %2118 = vmatpush.bf16.msra.mxu0 0
  %2119 = vmatpush.bf16.msra.mxu0 0
  %2120 = vmatpush.bf16.msra.mxu0 0
  %2121 = vmatpush.bf16.msra.mxu0 0
  %2122 = vmatpush.bf16.msra.mxu0 %v2110
  %2123 = vmatpush.bf16.msra.mxu0 %v2109
  %2124 = vmatmul.bf16.gmra.mxu0 %v2114
  %v2125 = vpop.f32.mrf.mxu0
  %v2126 = vadd.f32 %v2099, %v2125
  %v2127 = vpop.f32.mrf.mxu0
  %v2128 = vadd.f32 %v2099, %v2127
  %2129 = vdwg.mxu0
  %s2130 = scalar_lea.vmem %s47, 16
  %v2131 = vld [vmem:[%s2130] sm:$0xf]
  %v2132 = vld [vmem:[%s2130 + $0x4] sm:$0xf]
  %v2133 = vld [vmem:[%s2130 + $0x8] sm:$0xf]
  %v2134 = vld [vmem:[%s2130 + $0xc] sm:$0xf]
  %s2135 = scalar_lea.vmem %s49, 1
  %v2136 = vld [vmem:[%s2135] sm:$0x1]
  %v2138 = vperm.slane %v2136, 0
  %v2144 = vunpack.c.l.b16 %v2131
  %v2145 = vunpack.c.l.b16 %v2132
  %v2146 = vunpack.c.l.b16 %v2133
  %v2147 = vunpack.c.l.b16 %v2134
  %v2148 = vpack.c.b16 %v2145, %v2144
  %v2149 = vpack.c.b16 %v2147, %v2146
  %2152 = vmatpush.bf16.msra.mxu0 0
  %2153 = vmatpush.bf16.msra.mxu0 0
  %2154 = vmatpush.bf16.msra.mxu0 0
  %2155 = vmatpush.bf16.msra.mxu0 0
  %2156 = vmatpush.bf16.msra.mxu0 0
  %2157 = vmatpush.bf16.msra.mxu0 0
  %2158 = vmatpush.bf16.msra.mxu0 %v2149
  %2159 = vmatpush.bf16.msra.mxu0 %v2148
  %2160 = vmatmul.bf16.gmra.mxu0 %v2114
  %v2161 = vpop.f32.mrf.mxu0
  %v2162 = vadd.f32 %v2138, %v2161
  %v2163 = vpop.f32.mrf.mxu0
  %v2164 = vadd.f32 %v2138, %v2163
  %2165 = vdwg.mxu0
  %s2166 = scalar_lea.vmem %s51, 16
  %v2167 = vld [vmem:[%s2166] sm:$0xf]
  %v2168 = vld [vmem:[%s2166 + $0x4] sm:$0xf]
  %v2169 = vld [vmem:[%s2166 + $0x8] sm:$0xf]
  %v2170 = vld [vmem:[%s2166 + $0xc] sm:$0xf]
  %s2171 = scalar_lea.vmem %s53, 1
  %v2172 = vld [vmem:[%s2171] sm:$0x1]
  %v2174 = vperm.slane %v2172, 0
  %v2180 = vunpack.c.l.b16 %v2167
  %v2181 = vunpack.c.l.b16 %v2168
  %v2182 = vunpack.c.l.b16 %v2169
  %v2183 = vunpack.c.l.b16 %v2170
  %v2184 = vpack.c.b16 %v2181, %v2180
  %v2185 = vpack.c.b16 %v2183, %v2182
  %2188 = vmatpush.bf16.msra.mxu0 0
  %2189 = vmatpush.bf16.msra.mxu0 0
  %2190 = vmatpush.bf16.msra.mxu0 0
  %2191 = vmatpush.bf16.msra.mxu0 0
  %2192 = vmatpush.bf16.msra.mxu0 0
  %2193 = vmatpush.bf16.msra.mxu0 0
  %2194 = vmatpush.bf16.msra.mxu0 %v2185
  %2195 = vmatpush.bf16.msra.mxu0 %v2184
  %2196 = vmatmul.bf16.gmra.mxu0 %v2114
  %v2197 = vpop.f32.mrf.mxu0
  %v2198 = vadd.f32 %v2174, %v2197
  %v2199 = vpop.f32.mrf.mxu0
  %v2200 = vadd.f32 %v2174, %v2199
  %2201 = vdwg.mxu0
  %v2202 = vpack.c.bf16 %v2164, %v2162
  %v2203 = vmul.f32 %v2126, %v1346
  %v2204 = vmul.f32 %v2128, %v1346
  %v2205 = vpack.c.bf16 %v2204, %v2203
  %v2207 = vsel %vm1364, %v2205, 0
  %v2210 = vsel %vm1364, %v2202, 0
  %2212 = vmatpush.bf16.xpose.msra.mxu0 0
  %2213 = vmatpush.bf16.xpose.msra.mxu0 0
  %2214 = vmatpush.bf16.xpose.msra.mxu0 0
  %2215 = vmatpush.bf16.xpose.msra.mxu0 0
  %2216 = vmatpush.bf16.xpose.msra.mxu0 0
  %2217 = vmatpush.bf16.xpose.msra.mxu0 0
  %2218 = vmatpush.bf16.xpose.msra.mxu0 0
  %2219 = vmatpush.bf16.xpose.msra.mxu0 %v2210
  %2220 = vmatmul.bf16.gmra.mxu0 %v2207
  %v2221 = vpop.f32.mrf.mxu0
  %v2222 = vadd.f32 %v1340, %v2221
  %v2223 = vpop.f32.mrf.mxu0
  %v2224 = vadd.f32 %v1341, %v2223
  %2225 = vdwg.mxu0
  %v2226 = vsel %vm1556, %v2222, -inf
  %2227 = vmax.xlane.f32.xlu0 %v2226
  %v2228 = vpop.xlane.xlu0 %2227
  %v2229 = vsel %vm1556, %v2224, -inf
  %2230 = vmax.xlane.f32.xlu0 %v2229
  %v2231 = vpop.xlane.xlu0 %2230
  %v2232 = vsub.f32 %v2222, %v2228
  %v2233 = vsub.f32 %v2224, %v2231
  %v2234 = vmul.f32 %v2232, 1.442695
  %v2235 = vpow.pop %v2234
  %v2236 = vmul.f32 %v2233, 1.442695
  %v2237 = vpow.pop %v2236
  %v2238 = vsel %vm1556, %v2235, 0.0
  %2239 = vadd.xlane.f32.xlu0 %v2238
  %v2240 = vpop.xlane.xlu0 %2239
  %v2241 = vsel %vm1556, %v2237, 0.0
  %2242 = vadd.xlane.f32.xlu0 %v2241
  %v2243 = vpop.xlane.xlu0 %2242
  %v2244 = vrcp.pop %v2240
  %v2245 = vrcp.pop %v2243
  %v2246 = vmul.f32 %v2235, %v2244
  %v2247 = vmul.f32 %v2237, %v2245
  %v2248 = vpack.c.bf16 %v2247, %v2246
  %v2249 = vmul.f32 %v2198, %v1346
  %v2250 = vmul.f32 %v2200, %v1346
  %v2251 = vpack.c.bf16 %v2250, %v2249
  %v2252 = vmul.f32 %v2126, %v1351
  %v2253 = vmul.f32 %v2128, %v1351
  %v2254 = vpack.c.bf16 %v2253, %v2252
  %v2256 = vsel %vm1364, %v2254, 0
  %2258 = vmatpush.bf16.xpose.msra.mxu0 0
  %2259 = vmatpush.bf16.xpose.msra.mxu0 0
  %2260 = vmatpush.bf16.xpose.msra.mxu0 0
  %2261 = vmatpush.bf16.xpose.msra.mxu0 0
  %2262 = vmatpush.bf16.xpose.msra.mxu0 0
  %2263 = vmatpush.bf16.xpose.msra.mxu0 0
  %2264 = vmatpush.bf16.xpose.msra.mxu0 0
  %2265 = vmatpush.bf16.xpose.msra.mxu0 %v2210
  %2266 = vmatmul.bf16.gmra.mxu0 %v2256
  %v2267 = vpop.f32.mrf.mxu0
  %v2268 = vadd.f32 %v1340, %v2267
  %v2269 = vpop.f32.mrf.mxu0
  %v2270 = vadd.f32 %v1341, %v2269
  %2271 = vdwg.mxu0
  %v2272 = vsel %vm1556, %v2268, -inf
  %2273 = vmax.xlane.f32.xlu0 %v2272
  %v2274 = vpop.xlane.xlu0 %2273
  %v2275 = vsel %vm1556, %v2270, -inf
  %2276 = vmax.xlane.f32.xlu0 %v2275
  %v2277 = vpop.xlane.xlu0 %2276
  %v2278 = vsub.f32 %v2268, %v2274
  %v2279 = vsub.f32 %v2270, %v2277
  %v2280 = vmul.f32 %v2278, 1.442695
  %v2281 = vpow.pop %v2280
  %v2282 = vmul.f32 %v2279, 1.442695
  %v2283 = vpow.pop %v2282
  %v2284 = vsel %vm1556, %v2281, 0.0
  %2285 = vadd.xlane.f32.xlu0 %v2284
  %v2286 = vpop.xlane.xlu0 %2285
  %v2287 = vsel %vm1556, %v2283, 0.0
  %2288 = vadd.xlane.f32.xlu0 %v2287
  %v2289 = vpop.xlane.xlu0 %2288
  %v2290 = vrcp.pop %v2286
  %v2291 = vrcp.pop %v2289
  %v2292 = vmul.f32 %v2281, %v2290
  %v2293 = vmul.f32 %v2283, %v2291
  %v2294 = vpack.c.bf16 %v2293, %v2292
  %v2295 = vmul.f32 %v2198, %v1351
  %v2296 = vmul.f32 %v2200, %v1351
  %v2297 = vpack.c.bf16 %v2296, %v2295
  %v2299 = vsel %vm1556, %v2294, 0
  %2301 = vmatpush.bf16.msra.mxu0 0
  %2302 = vmatpush.bf16.msra.mxu0 0
  %2303 = vmatpush.bf16.msra.mxu0 0
  %2304 = vmatpush.bf16.msra.mxu0 0
  %2305 = vmatpush.bf16.msra.mxu0 0
  %2306 = vmatpush.bf16.msra.mxu0 0
  %2307 = vmatpush.bf16.msra.mxu0 0
  %2308 = vmatpush.bf16.msra.mxu0 %v2297
  %2309 = vmatmul.bf16.gmra.mxu0 %v2299
  %v2310 = vpop.f32.mrf.mxu0
  %v2311 = vadd.f32 0.0, %v2310
  %v2312 = vpop.f32.mrf.mxu0
  %v2313 = vadd.f32 0.0, %v2312
  %2314 = vdwg.mxu0
  %v2316 = vsel %vm1556, %v2248, 0
  %2318 = vmatpush.bf16.msra.mxu0 0
  %2319 = vmatpush.bf16.msra.mxu0 0
  %2320 = vmatpush.bf16.msra.mxu0 0
  %2321 = vmatpush.bf16.msra.mxu0 0
  %2322 = vmatpush.bf16.msra.mxu0 0
  %2323 = vmatpush.bf16.msra.mxu0 0
  %2324 = vmatpush.bf16.msra.mxu0 0
  %2325 = vmatpush.bf16.msra.mxu0 %v2251
  %2326 = vmatmul.bf16.gmra.mxu0 %v2316
  %v2327 = vpop.f32.mrf.mxu0
  %v2328 = vadd.f32 %v2311, %v2327
  %v2329 = vpop.f32.mrf.mxu0
  %v2330 = vadd.f32 %v2313, %v2329
  %2331 = vdwg.mxu0
  %v2332 = vmul.f32 %v2126, %v1356
  %v2333 = vmul.f32 %v2128, %v1356
  %v2334 = vpack.c.bf16 %v2333, %v2332
  %v2336 = vsel %vm1364, %v2334, 0
  %2338 = vmatpush.bf16.xpose.msra.mxu0 0
  %2339 = vmatpush.bf16.xpose.msra.mxu0 0
  %2340 = vmatpush.bf16.xpose.msra.mxu0 0
  %2341 = vmatpush.bf16.xpose.msra.mxu0 0
  %2342 = vmatpush.bf16.xpose.msra.mxu0 0
  %2343 = vmatpush.bf16.xpose.msra.mxu0 0
  %2344 = vmatpush.bf16.xpose.msra.mxu0 0
  %2345 = vmatpush.bf16.xpose.msra.mxu0 %v2210
  %2346 = vmatmul.bf16.gmra.mxu0 %v2336
  %v2347 = vpop.f32.mrf.mxu0
  %v2348 = vadd.f32 %v1340, %v2347
  %v2349 = vpop.f32.mrf.mxu0
  %v2350 = vadd.f32 %v1341, %v2349
  %2351 = vdwg.mxu0
  %v2352 = vsel %vm1556, %v2348, -inf
  %2353 = vmax.xlane.f32.xlu0 %v2352
  %v2354 = vpop.xlane.xlu0 %2353
  %v2355 = vsel %vm1556, %v2350, -inf
  %2356 = vmax.xlane.f32.xlu0 %v2355
  %v2357 = vpop.xlane.xlu0 %2356
  %v2358 = vsub.f32 %v2348, %v2354
  %v2359 = vsub.f32 %v2350, %v2357
  %v2360 = vmul.f32 %v2358, 1.442695
  %v2361 = vpow.pop %v2360
  %v2362 = vmul.f32 %v2359, 1.442695
  %v2363 = vpow.pop %v2362
  %v2364 = vsel %vm1556, %v2361, 0.0
  %2365 = vadd.xlane.f32.xlu0 %v2364
  %v2366 = vpop.xlane.xlu0 %2365
  %v2367 = vsel %vm1556, %v2363, 0.0
  %2368 = vadd.xlane.f32.xlu0 %v2367
  %v2369 = vpop.xlane.xlu0 %2368
  %v2370 = vrcp.pop %v2366
  %v2371 = vrcp.pop %v2369
  %v2372 = vmul.f32 %v2361, %v2370
  %v2373 = vmul.f32 %v2363, %v2371
  %v2374 = vpack.c.bf16 %v2373, %v2372
  %v2375 = vmul.f32 %v2198, %v1356
  %v2376 = vmul.f32 %v2200, %v1356
  %v2377 = vpack.c.bf16 %v2376, %v2375
  %v2379 = vsel %vm1556, %v2374, 0
  %2381 = vmatpush.bf16.msra.mxu0 0
  %2382 = vmatpush.bf16.msra.mxu0 0
  %2383 = vmatpush.bf16.msra.mxu0 0
  %2384 = vmatpush.bf16.msra.mxu0 0
  %2385 = vmatpush.bf16.msra.mxu0 0
  %2386 = vmatpush.bf16.msra.mxu0 0
  %2387 = vmatpush.bf16.msra.mxu0 0
  %2388 = vmatpush.bf16.msra.mxu0 %v2377
  %2389 = vmatmul.bf16.gmra.mxu0 %v2379
  %v2390 = vpop.f32.mrf.mxu0
  %v2391 = vadd.f32 0.0, %v2390
  %v2392 = vpop.f32.mrf.mxu0
  %v2393 = vadd.f32 0.0, %v2392
  %2394 = vdwg.mxu0
  %v2395 = vadd.f32 %v2328, %v2391
  %v2396 = vadd.f32 %v2330, %v2393
  %v2397 = vmul.f32 %v2126, %v1361
  %v2398 = vmul.f32 %v2128, %v1361
  %v2399 = vpack.c.bf16 %v2398, %v2397
  %v2401 = vsel %vm1364, %v2399, 0
  %2403 = vmatpush.bf16.xpose.msra.mxu0 0
  %2404 = vmatpush.bf16.xpose.msra.mxu0 0
  %2405 = vmatpush.bf16.xpose.msra.mxu0 0
  %2406 = vmatpush.bf16.xpose.msra.mxu0 0
  %2407 = vmatpush.bf16.xpose.msra.mxu0 0
  %2408 = vmatpush.bf16.xpose.msra.mxu0 0
  %2409 = vmatpush.bf16.xpose.msra.mxu0 0
  %2410 = vmatpush.bf16.xpose.msra.mxu0 %v2210
  %2411 = vmatmul.bf16.gmra.mxu0 %v2401
  %v2412 = vpop.f32.mrf.mxu0
  %v2413 = vadd.f32 %v1340, %v2412
  %v2414 = vpop.f32.mrf.mxu0
  %v2415 = vadd.f32 %v1341, %v2414
  %2416 = vdwg.mxu0
  %v2417 = vsel %vm1556, %v2413, -inf
  %2418 = vmax.xlane.f32.xlu0 %v2417
  %v2419 = vpop.xlane.xlu0 %2418
  %v2420 = vsel %vm1556, %v2415, -inf
  %2421 = vmax.xlane.f32.xlu0 %v2420
  %v2422 = vpop.xlane.xlu0 %2421
  %v2423 = vsub.f32 %v2413, %v2419
  %v2424 = vsub.f32 %v2415, %v2422
  %v2425 = vmul.f32 %v2423, 1.442695
  %v2426 = vpow.pop %v2425
  %v2427 = vmul.f32 %v2424, 1.442695
  %v2428 = vpow.pop %v2427
  %v2429 = vsel %vm1556, %v2426, 0.0
  %2430 = vadd.xlane.f32.xlu0 %v2429
  %v2431 = vpop.xlane.xlu0 %2430
  %v2432 = vsel %vm1556, %v2428, 0.0
  %2433 = vadd.xlane.f32.xlu0 %v2432
  %v2434 = vpop.xlane.xlu0 %2433
  %v2435 = vrcp.pop %v2431
  %v2436 = vrcp.pop %v2434
  %v2437 = vmul.f32 %v2426, %v2435
  %v2438 = vmul.f32 %v2428, %v2436
  %v2439 = vpack.c.bf16 %v2438, %v2437
  %v2440 = vmul.f32 %v2198, %v1361
  %v2441 = vmul.f32 %v2200, %v1361
  %v2442 = vpack.c.bf16 %v2441, %v2440
  %v2444 = vsel %vm1556, %v2439, 0
  %2446 = vmatpush.bf16.msra.mxu0 0
  %2447 = vmatpush.bf16.msra.mxu0 0
  %2448 = vmatpush.bf16.msra.mxu0 0
  %2449 = vmatpush.bf16.msra.mxu0 0
  %2450 = vmatpush.bf16.msra.mxu0 0
  %2451 = vmatpush.bf16.msra.mxu0 0
  %2452 = vmatpush.bf16.msra.mxu0 0
  %2453 = vmatpush.bf16.msra.mxu0 %v2442
  %2454 = vmatmul.bf16.gmra.mxu0 %v2444
  %v2455 = vpop.f32.mrf.mxu0
  %v2456 = vadd.f32 0.0, %v2455
  %v2457 = vpop.f32.mrf.mxu0
  %v2458 = vadd.f32 0.0, %v2457
  %2459 = vdwg.mxu0
  %v2460 = vadd.f32 %v2395, %v2456
  %v2461 = vadd.f32 %v2396, %v2458
  %v2462 = vpack.c.bf16 %v2461, %v2460
  %s2463 = scalar_lea.vmem %s55, 16
  %v2464 = vld [vmem:[%s2463] sm:$0xf]
  %v2465 = vld [vmem:[%s2463 + $0x4] sm:$0xf]
  %v2466 = vld [vmem:[%s2463 + $0x8] sm:$0xf]
  %v2467 = vld [vmem:[%s2463 + $0xc] sm:$0xf]
  %v2472 = vunpack.c.l.b16 %v2464
  %v2473 = vunpack.c.l.b16 %v2465
  %v2474 = vunpack.c.l.b16 %v2466
  %v2475 = vunpack.c.l.b16 %v2467
  %v2476 = vpack.c.b16 %v2473, %v2472
  %v2477 = vpack.c.b16 %v2475, %v2474
  %v2481 = vsel %vm1364, %v2462, 0
  %2483 = vmatpush.bf16.msra.mxu0 0
  %2484 = vmatpush.bf16.msra.mxu0 0
  %2485 = vmatpush.bf16.msra.mxu0 0
  %2486 = vmatpush.bf16.msra.mxu0 0
  %2487 = vmatpush.bf16.msra.mxu0 0
  %2488 = vmatpush.bf16.msra.mxu0 0
  %2489 = vmatpush.bf16.msra.mxu0 %v2477
  %2490 = vmatpush.bf16.msra.mxu0 %v2476
  %2491 = vmatmul.bf16.gmra.mxu0 %v2481
  %v2492 = vpop.f32.mrf.mxu0
  %v2493 = vadd.f32 0.0, %v2492
  %v2494 = vpop.f32.mrf.mxu0
  %v2495 = vadd.f32 0.0, %v2494
  %2496 = vdwg.mxu0
  %v2497 = vadd.f32 %v2030, %v2493
  %v2498 = vadd.f32 %v2031, %v2495
  %s2499 = scalar_lea.vmem %s57, 1
  %v2500 = vld [vmem:[%s2499] sm:$0x1]
  %v2502 = vperm.slane %v2500, 0
  %v2504 = vadd.f32 %v2497, %v2502
  %v2505 = vadd.f32 %v2498, %v2502
  %s2506 = scalar_lea.vmem %s59, 1
  %v2507 = vld [vmem:[%s2506] sm:$0x1]
  %s2508 = scalar_lea.vmem %s61, 1
  %v2509 = vld [vmem:[%s2508] sm:$0x1]
  %v2510 = vsel %vm1364, %v2504, 0.0
  %2511 = vadd.xlane.f32.xlu0 %v2510
  %v2512 = vpop.xlane.xlu0 %2511
  %v2513 = vsel %vm1364, %v2505, 0.0
  %2514 = vadd.xlane.f32.xlu0 %v2513
  %v2515 = vpop.xlane.xlu0 %2514
  %v2516 = vmul.f32 %v2512, %v1377
  %v2517 = vmul.f32 %v2515, %v1377
  %v2518 = vsub.f32 %v2504, %v2516
  %v2519 = vsub.f32 %v2505, %v2517
  %v2520 = vmul.f32 %v2518, %v2518
  %v2521 = vmul.f32 %v2519, %v2519
  %v2522 = vsel %vm1364, %v2520, 0.0
  %2523 = vadd.xlane.f32.xlu0 %v2522
  %v2524 = vpop.xlane.xlu0 %2523
  %v2525 = vsel %vm1364, %v2521, 0.0
  %2526 = vadd.xlane.f32.xlu0 %v2525
  %v2527 = vpop.xlane.xlu0 %2526
  %v2528 = vmul.f32 %v2524, %v1377
  %v2529 = vmul.f32 %v2527, %v1377
  %v2530 = vadd.f32 %v2528, 1e-06
  %v2531 = vadd.f32 %v2529, 1e-06
  %v2532 = vrsqrt.pop %v2530
  %v2533 = vmul.f32 %v2532, %v2530
  %v2534 = vmul.f32 %v2533, %v2532
  %v2535 = vmul.f32 0.5, %v2534
  %v2536 = vsub.f32 1.5, %v2535
  %v2537 = vmul.f32 %v2532, %v2536
  %vm2538 = vweird.f32 %v2530
  %vm2539 = vweird.f32 %v2532
  %vm2540 = vmor %vm2538, %vm2539
  %v2541 = vsel %vm2540, %v2532, %v2537
  %v2542 = vrsqrt.pop %v2531
  %v2543 = vmul.f32 %v2542, %v2531
  %v2544 = vmul.f32 %v2543, %v2542
  %v2545 = vmul.f32 0.5, %v2544
  %v2546 = vsub.f32 1.5, %v2545
  %v2547 = vmul.f32 %v2542, %v2546
  %vm2548 = vweird.f32 %v2531
  %vm2549 = vweird.f32 %v2542
  %vm2550 = vmor %vm2548, %vm2549
  %v2551 = vsel %vm2550, %v2542, %v2547
  %v2552 = vmul.f32 %v2518, %v2541
  %v2553 = vmul.f32 %v2519, %v2551
  %v2555 = vperm.slane %v2507, 0
  %v2557 = vmul.f32 %v2552, %v2555
  %v2558 = vmul.f32 %v2553, %v2555
  %v2560 = vperm.slane %v2509, 0
  %v2562 = vadd.f32 %v2557, %v2560
  %v2563 = vadd.f32 %v2558, %v2560
  %v2564 = vpack.c.bf16 %v2563, %v2562
  %s2565 = scalar_lea.vmem %s63, 16
  %v2566 = vld [vmem:[%s2565] sm:$0xf]
  %v2567 = vld [vmem:[%s2565 + $0x4] sm:$0xf]
  %v2568 = vld [vmem:[%s2565 + $0x8] sm:$0xf]
  %v2569 = vld [vmem:[%s2565 + $0xc] sm:$0xf]
  %s2570 = scalar_lea.vmem %s65, 1
  %v2571 = vld [vmem:[%s2570] sm:$0x1]
  %v2573 = vperm.slane %v2571, 0
  %v2579 = vunpack.c.l.b16 %v2566
  %v2580 = vunpack.c.l.b16 %v2567
  %v2581 = vunpack.c.l.b16 %v2568
  %v2582 = vunpack.c.l.b16 %v2569
  %v2583 = vpack.c.b16 %v2580, %v2579
  %v2584 = vpack.c.b16 %v2582, %v2581
  %v2588 = vsel %vm1364, %v2564, 0
  %2590 = vmatpush.bf16.msra.mxu0 0
  %2591 = vmatpush.bf16.msra.mxu0 0
  %2592 = vmatpush.bf16.msra.mxu0 0
  %2593 = vmatpush.bf16.msra.mxu0 0
  %2594 = vmatpush.bf16.msra.mxu0 0
  %2595 = vmatpush.bf16.msra.mxu0 0
  %2596 = vmatpush.bf16.msra.mxu0 %v2584
  %2597 = vmatpush.bf16.msra.mxu0 %v2583
  %2598 = vmatmul.bf16.gmra.mxu0 %v2588
  %v2599 = vpop.f32.mrf.mxu0
  %v2600 = vadd.f32 %v2573, %v2599
  %v2601 = vpop.f32.mrf.mxu0
  %v2602 = vadd.f32 %v2573, %v2601
  %2603 = vdwg.mxu0
  %v2604 = vmul.f32 %v2600, %v2600
  %v2605 = vmul.f32 %v2602, %v2602
  %v2606 = vmul.f32 %v2600, %v2604
  %v2607 = vmul.f32 %v2602, %v2605
  %v2608 = vmul.f32 %v2606, 0.044715
  %v2609 = vmul.f32 %v2607, 0.044715
  %v2610 = vadd.f32 %v2600, %v2608
  %v2611 = vadd.f32 %v2602, %v2609
  %v2612 = vmul.f32 %v2610, 0.7978846
  %v2613 = vmul.f32 %v2611, 0.7978846
  %v2614 = vtanh.pop %v2612
  %v2615 = vtanh.pop %v2613
  %v2616 = vadd.f32 %v2614, 1.0
  %v2617 = vadd.f32 %v2615, 1.0
  %v2618 = vmul.f32 %v2616, 0.5
  %v2619 = vmul.f32 %v2617, 0.5
  %v2620 = vmul.f32 %v2600, %v2618
  %v2621 = vmul.f32 %v2602, %v2619
  %v2622 = vpack.c.bf16 %v2621, %v2620
  %s2623 = scalar_lea.vmem %s67, 64
  %v2624 = vld [vmem:[%s2623] sm:$0xf]
  %v2625 = vld [vmem:[%s2623 + $0x4] sm:$0xf]
  %v2626 = vld [vmem:[%s2623 + $0x8] sm:$0xf]
  %v2627 = vld [vmem:[%s2623 + $0xc] sm:$0xf]
  %v2628 = vld [vmem:[%s2623 + $0x10] sm:$0xf]
  %v2629 = vld [vmem:[%s2623 + $0x14] sm:$0xf]
  %v2630 = vld [vmem:[%s2623 + $0x18] sm:$0xf]
  %v2631 = vld [vmem:[%s2623 + $0x1c] sm:$0xf]
  %v2632 = vld [vmem:[%s2623 + $0x20] sm:$0xf]
  %v2633 = vld [vmem:[%s2623 + $0x24] sm:$0xf]
  %v2634 = vld [vmem:[%s2623 + $0x28] sm:$0xf]
  %v2635 = vld [vmem:[%s2623 + $0x2c] sm:$0xf]
  %v2636 = vld [vmem:[%s2623 + $0x30] sm:$0xf]
  %v2637 = vld [vmem:[%s2623 + $0x34] sm:$0xf]
  %v2638 = vld [vmem:[%s2623 + $0x38] sm:$0xf]
  %v2639 = vld [vmem:[%s2623 + $0x3c] sm:$0xf]
  %s2640 = scalar_lea.vmem %s69, 1
  %v2641 = vld [vmem:[%s2640] sm:$0x1]
  %v2643 = vperm.slane %v2641, 0
  %v2661 = vunpack.c.l.b16 %v2624
  %v2662 = vunpack.c.l.b16 %v2625
  %v2663 = vunpack.c.l.b16 %v2626
  %v2664 = vunpack.c.l.b16 %v2627
  %v2665 = vunpack.c.l.b16 %v2628
  %v2666 = vunpack.c.l.b16 %v2629
  %v2667 = vunpack.c.l.b16 %v2630
  %v2668 = vunpack.c.l.b16 %v2631
  %v2669 = vunpack.c.l.b16 %v2632
  %v2670 = vunpack.c.l.b16 %v2633
  %v2671 = vunpack.c.l.b16 %v2634
  %v2672 = vunpack.c.l.b16 %v2635
  %v2673 = vunpack.c.l.b16 %v2636
  %v2674 = vunpack.c.l.b16 %v2637
  %v2675 = vunpack.c.l.b16 %v2638
  %v2676 = vunpack.c.l.b16 %v2639
  %v2677 = vpack.c.b16 %v2662, %v2661
  %v2678 = vpack.c.b16 %v2664, %v2663
  %v2679 = vpack.c.b16 %v2666, %v2665
  %v2680 = vpack.c.b16 %v2668, %v2667
  %v2681 = vpack.c.b16 %v2670, %v2669
  %v2682 = vpack.c.b16 %v2672, %v2671
  %v2683 = vpack.c.b16 %v2674, %v2673
  %v2684 = vpack.c.b16 %v2676, %v2675
  %2693 = vmatpush.bf16.msra.mxu0 %v2684
  %2694 = vmatpush.bf16.msra.mxu0 %v2683
  %2695 = vmatpush.bf16.msra.mxu0 %v2682
  %2696 = vmatpush.bf16.msra.mxu0 %v2681
  %2697 = vmatpush.bf16.msra.mxu0 %v2680
  %2698 = vmatpush.bf16.msra.mxu0 %v2679
  %2699 = vmatpush.bf16.msra.mxu0 %v2678
  %2700 = vmatpush.bf16.msra.mxu0 %v2677
  %2701 = vmatmul.bf16.gmra.mxu0 %v2622
  %v2702 = vpop.f32.mrf.mxu0
  %v2703 = vadd.f32 %v2643, %v2702
  %v2704 = vpop.f32.mrf.mxu0
  %v2705 = vadd.f32 %v2643, %v2704
  %2706 = vdwg.mxu0
  %v2707 = vadd.f32 %v2504, %v2703
  %v2708 = vadd.f32 %v2505, %v2705
  %v2709 = vld [vmem:[%s71] sm:$0x1]
  %v2710 = vld [vmem:[%s73] sm:$0x1]
  %v2711 = vsel %vm1364, %v2707, 0.0
  %2712 = vadd.xlane.f32.xlu0 %v2711
  %v2713 = vpop.xlane.xlu0 %2712
  %v2714 = vsel %vm1364, %v2708, 0.0
  %2715 = vadd.xlane.f32.xlu0 %v2714
  %v2716 = vpop.xlane.xlu0 %2715
  %v2717 = vmul.f32 %v2713, %v1377
  %v2718 = vmul.f32 %v2716, %v1377
  %v2719 = vsub.f32 %v2707, %v2717
  %v2720 = vsub.f32 %v2708, %v2718
  %v2721 = vmul.f32 %v2719, %v2719
  %v2722 = vmul.f32 %v2720, %v2720
  %v2723 = vsel %vm1364, %v2721, 0.0
  %2724 = vadd.xlane.f32.xlu0 %v2723
  %v2725 = vpop.xlane.xlu0 %2724
  %v2726 = vsel %vm1364, %v2722, 0.0
  %2727 = vadd.xlane.f32.xlu0 %v2726
  %v2728 = vpop.xlane.xlu0 %2727
  %v2729 = vmul.f32 %v2725, %v1377
  %v2730 = vmul.f32 %v2728, %v1377
  %v2731 = vadd.f32 %v2729, 1e-06
  %v2732 = vadd.f32 %v2730, 1e-06
  %v2733 = vrsqrt.pop %v2731
  %v2734 = vmul.f32 %v2733, %v2731
  %v2735 = vmul.f32 %v2734, %v2733
  %v2736 = vmul.f32 0.5, %v2735
  %v2737 = vsub.f32 1.5, %v2736
  %v2738 = vmul.f32 %v2733, %v2737
  %vm2739 = vweird.f32 %v2731
  %vm2740 = vweird.f32 %v2733
  %vm2741 = vmor %vm2739, %vm2740
  %v2742 = vsel %vm2741, %v2733, %v2738
  %v2743 = vrsqrt.pop %v2732
  %v2744 = vmul.f32 %v2743, %v2732
  %v2745 = vmul.f32 %v2744, %v2743
  %v2746 = vmul.f32 0.5, %v2745
  %v2747 = vsub.f32 1.5, %v2746
  %v2748 = vmul.f32 %v2743, %v2747
  %vm2749 = vweird.f32 %v2732
  %vm2750 = vweird.f32 %v2743
  %vm2751 = vmor %vm2749, %vm2750
  %v2752 = vsel %vm2751, %v2743, %v2748
  %v2753 = vmul.f32 %v2719, %v2742
  %v2754 = vmul.f32 %v2720, %v2752
  %v2756 = vperm.slane %v2709, 0
  %v2758 = vmul.f32 %v2753, %v2756
  %v2759 = vmul.f32 %v2754, %v2756
  %v2761 = vperm.slane %v2710, 0
  %v2763 = vadd.f32 %v2758, %v2761
  %v2764 = vadd.f32 %v2759, %v2761
  %v2765 = vpack.c.bf16 %v2764, %v2763
  %v2766 = vld [vmem:[%s75] sm:$0xf]
  %v2767 = vld [vmem:[%s75 + $0x4] sm:$0xf]
  %v2768 = vld [vmem:[%s75 + $0x8] sm:$0xf]
  %v2769 = vld [vmem:[%s75 + $0xc] sm:$0xf]
  %v2770 = vld [vmem:[%s77] sm:$0x1]
  %v2772 = vperm.slane %v2770, 0
  %v2778 = vunpack.c.l.b16 %v2766
  %v2779 = vunpack.c.l.b16 %v2767
  %v2780 = vunpack.c.l.b16 %v2768
  %v2781 = vunpack.c.l.b16 %v2769
  %v2782 = vpack.c.b16 %v2779, %v2778
  %v2783 = vpack.c.b16 %v2781, %v2780
  %v2787 = vsel %vm1364, %v2765, 0
  %2789 = vmatpush.bf16.msra.mxu0 0
  %2790 = vmatpush.bf16.msra.mxu0 0
  %2791 = vmatpush.bf16.msra.mxu0 0
  %2792 = vmatpush.bf16.msra.mxu0 0
  %2793 = vmatpush.bf16.msra.mxu0 0
  %2794 = vmatpush.bf16.msra.mxu0 0
  %2795 = vmatpush.bf16.msra.mxu0 %v2783
  %2796 = vmatpush.bf16.msra.mxu0 %v2782
  %2797 = vmatmul.bf16.gmra.mxu0 %v2787
  %v2798 = vpop.f32.mrf.mxu0
  %v2799 = vadd.f32 %v2772, %v2798
  %v2800 = vpop.f32.mrf.mxu0
  %v2801 = vadd.f32 %v2772, %v2800
  %2802 = vdwg.mxu0
  %v2803 = vmax.f32 %v2799, 0.0
  %v2804 = vmax.f32 %v2801, 0.0
  %v2805 = vand.u32 2147483647, %v2799
  %v2806 = vand.u32 2147483647, %v2801
  %v2807 = vsub.f32 0.0, %v2805
  %v2808 = vsub.f32 0.0, %v2806
  %v2809 = vmul.f32 %v2807, 1.442695
  %v2810 = vpow.pop %v2809
  %v2811 = vmul.f32 %v2808, 1.442695
  %v2812 = vpow.pop %v2811
  %v2813 = vadd.f32 %v2810, 1.0
  %v2814 = vlog2.pop %v2813
  %v2815 = vmul.f32 %v2814, 0.6931472
  %v2816 = vmul.f32 -0.5, %v2810
  %v2817 = vadd.f32 %v2816, 1.0
  %v2818 = vmul.f32 %v2817, %v2810
  %v2819 = vand.u32 2147483647, %v2810
  %vm2820 = vcmp.lt.f32.partialorder %v2819, 0.0004427343
  %v2821 = vsel %vm2820, %v2818, %v2815
  %v2822 = vadd.f32 %v2812, 1.0
  %v2823 = vlog2.pop %v2822
  %v2824 = vmul.f32 %v2823, 0.6931472
  %v2825 = vmul.f32 -0.5, %v2812
  %v2826 = vadd.f32 %v2825, 1.0
  %v2827 = vmul.f32 %v2826, %v2812
  %v2828 = vand.u32 2147483647, %v2812
  %vm2829 = vcmp.lt.f32.partialorder %v2828, 0.0004427343
  %v2830 = vsel %vm2829, %v2827, %v2824
  %v2831 = vadd.f32 %v2803, %v2821
  %v2832 = vadd.f32 %v2804, %v2830
  %v2833 = vld [vmem:[#allocation2] sm:$0x1]
  %v2835 = vperm.slane %v2833, 0
  %v2837 = vmul.f32 %v2831, %v2835
  %v2838 = vmul.f32 %v2832, %v2835
  %2841 = vrot.lane.b32.xlu0 %v2837, 1
  %v2842 = vpop.permute.xlu0 %2841
  %2843 = vrot.lane.b32.xlu0 %v2838, 1
  %v2844 = vpop.permute.xlu0 %2843
  %v2847 = vadd.f32 %v2799, %v2842
  %v2848 = vadd.f32 %v2801, %v2844
  %v2849 = vmax.f32 %v2847, 0.0
  %v2850 = vmax.f32 %v2848, 0.0
  %v2851 = vand.u32 2147483647, %v2847
  %v2852 = vand.u32 2147483647, %v2848
  %v2853 = vsub.f32 0.0, %v2851
  %v2854 = vsub.f32 0.0, %v2852
  %v2855 = vmul.f32 %v2853, 1.442695
  %v2856 = vpow.pop %v2855
  %v2857 = vmul.f32 %v2854, 1.442695
  %v2858 = vpow.pop %v2857
  %v2859 = vadd.f32 %v2856, 1.0
  %v2860 = vlog2.pop %v2859
  %v2861 = vmul.f32 %v2860, 0.6931472
  %v2862 = vmul.f32 -0.5, %v2856
  %v2863 = vadd.f32 %v2862, 1.0
  %v2864 = vmul.f32 %v2863, %v2856
  %v2865 = vand.u32 2147483647, %v2856
  %vm2866 = vcmp.lt.f32.partialorder %v2865, 0.0004427343
  %v2867 = vsel %vm2866, %v2864, %v2861
  %v2868 = vadd.f32 %v2858, 1.0
  %v2869 = vlog2.pop %v2868
  %v2870 = vmul.f32 %v2869, 0.6931472
  %v2871 = vmul.f32 -0.5, %v2858
  %v2872 = vadd.f32 %v2871, 1.0
  %v2873 = vmul.f32 %v2872, %v2858
  %v2874 = vand.u32 2147483647, %v2858
  %vm2875 = vcmp.lt.f32.partialorder %v2874, 0.0004427343
  %v2876 = vsel %vm2875, %v2873, %v2870
  %v2877 = vadd.f32 %v2849, %v2867
  %v2878 = vadd.f32 %v2850, %v2876
  %vm2879 = vcmask 7168
  %v2880 = vsel %vm2879, %v2831, %v2877
  %v2881 = vsel %vm2879, %v2832, %v2878
  %vm2882 = vcmask 15360
  %2883 = vst.msk [vmem:[%s81] sm:$0xff] %vm2882, %v2880
  %2884 = vst.msk [vmem:[%s81 + $0x8] sm:$0xff] %vm2882, %v2881
  // Predicated region
  $region162: #{get_finetune_atac_forward.1} parent=0 // pred_check
    _
  $region163: #{get_finetune_atac_forward.1} parent=0 // pred_check_branch
    %2886 = sbr.rel (0) target = $region165
  $region164: #{get_finetune_atac_forward.1} parent=0 // pred_region
    _
  $region165: #{get_finetune_atac_forward.1} parent=0 // pred_fallthru
    _
  // Predicated region
  $region166: #{get_finetune_atac_forward.1} parent=0 // pred_check
    _
  $region167: #{get_finetune_atac_forward.1} parent=0 // pred_check_branch
    %2888 = sbr.rel (0) target = $region169
  $region168: #{get_finetune_atac_forward.1} parent=0 // pred_region
    _
  $region169: #{get_finetune_atac_forward.1} parent=0 // pred_fallthru
    _

</llo_original>
